<compile_context>
chip_gen: v5e
topology: v5e:2x2
jax: 0.10.0
libtpu: 0.0.40
codegen_flags: <defaults>
</compile_context>

<pallas_src>
import functools

import numpy as np
import jax
import jax.numpy as jnp
from jax.experimental import pallas as pl
from jax.experimental.pallas import tpu as pltpu


_FULL_KRON_MAX = 1024     # fold (C,H,W) into one kron(F_C,F_H,F_W) up to this volume
_OUT_TILE = (8, 128)      # each grid step emits its partial sum over one lane-dense vreg
_OUT_TILE_ELEMS = 8 * 128


# ----------------------------------------------------------------------------
# trace-time helpers (numpy)
# ----------------------------------------------------------------------------
def _dft_matrix_np(k: int):
    """Dense DFT matrix F[n, j] = exp(-2*pi*i*n*j/k) as (cos, sin), float64."""
    n = np.arange(k, dtype=np.float64)
    ang = -2.0 * np.pi * np.outer(n, n) / float(k)
    return np.cos(ang), np.sin(ang)


def _kron_dft_np(dims):
    """Complex kron(F_d0, F_d1, ...) as (real, imag).  Row-major flattening of
    the listed dims matches this kron ordering; every factor is symmetric, so
    the matrix can be applied from either side."""
    kr = np.ones((1, 1), dtype=np.float64)
    ki = np.zeros((1, 1), dtype=np.float64)
    for d in dims:
        fr, fi = _dft_matrix_np(d)
        kr, ki = (np.kron(kr, fr) - np.kron(ki, fi),
                  np.kron(kr, fi) + np.kron(ki, fr))
    return kr, ki


def _vmem_cap_bytes() -> int:
    """Per-generation VMEM ceiling (v5e/v6e: 128 MiB physical, v7x: 64 MiB)."""
    cap = 64 * 1024 * 1024
    try:
        cap = int(getattr(pltpu.get_tpu_info(), "vmem_capacity_bytes", cap))
    except Exception:
        pass
    return min(int(cap * 0.75), 100 * 1024 * 1024)


def _pick_batch_block(n: int, chw: int, mm_item: int, cap: int):
    """Largest divisor bn of n whose per-step working set fits the VMEM cap.
    Stacked rows (pred+target) = 2*bn; capped at 1024 since the MXU is already
    saturated well before that (128 rows on v5e, 256 on v6e/v7x)."""
    const = 2 * 2 * chw * chw * mm_item            # kron re/im, double-buffered

    def need(bn):
        rows = 2 * bn
        return (2 * 2 * bn * chw * 4               # pred/target blocks, double-buffered
                + rows * chw * mm_item             # stacked scratch operand
                + 10 * rows * chw * 4              # zr/zi/p/d temporaries + headroom
                + const)

    best = 1
    for bn in range(2, n + 1):
        if n % bn or 2 * bn > 1024:
            continue
        if need(bn) <= cap:
            best = bn
    # NOTE: if even bn=1 exceeds the cap we still return 1 (compile-time VMEM
    # error for truly extreme shapes rather than a silent wrong answer).
    return best, need(best)


# ----------------------------------------------------------------------------
# fused kernel, small volumes: one kron(F_C,F_H,F_W) right-multiply + loss
# ----------------------------------------------------------------------------
def _make_full_kron_kernel(bn, chw, log_matrix):
    def kernel(xp_ref, xt_ref, kr_ref, ki_ref, out_ref, xs_ref):
        # Stack pred rows on top of target rows in VMEM scratch so both share
        # one pair of DFT matmuls (doubles M, halves weight-streaming passes).
        xs_ref[:bn, :] = xp_ref[...].astype(xs_ref.dtype)
        xs_ref[bn:, :] = xt_ref[...].astype(xs_ref.dtype)
        x = xs_ref[...]                                            # (2*bn, chw), real
        # full 3-D DFT: real input -> only 2 matmuls, lane dim = C*H*W (dense)
        zr = jnp.dot(x, kr_ref[...], preferred_element_type=jnp.float32)
        zi = jnp.dot(x, ki_ref[...], preferred_element_type=jnp.float32)
        p = zr * zr + zi * zi                                      # power spectrum (f32)
        if log_matrix:
            p = jnp.log(p + 1.0)                                   # EUP; kept in f32
        d = p[:bn, :] - p[bn:, :]                                  # pred half - target half
        psum = jnp.sum(d * d, axis=(0, 1), keepdims=True)          # (1, 1) partial sum
        out_ref[...] = jnp.broadcast_to(psum, _OUT_TILE)            # lane-dense store

    return kernel


# ----------------------------------------------------------------------------
# fused kernel, larger volumes: Kleft @ X @ Kright (no transposes), then loss
# ----------------------------------------------------------------------------
def _make_separable_kernel(rows, lanes, log_matrix, mm_dtype):
    def kernel(xp_ref, xt_ref, lr_ref, li_ref, rr_ref, ri_ref, out_ref):
        lr = lr_ref[...]
        li = li_ref[...]
        rr = rr_ref[...]
        ri = ri_ref[...]

        def log_power(x_ref):
            x = x_ref[...].astype(mm_dtype)                        # (rows, lanes), real
            # prefix-dims DFT: left-multiply; lane dim stays dense, no swapaxes
            zr = jnp.dot(lr, x, preferred_element_type=jnp.float32)
            zi = jnp.dot(li, x, preferred_element_type=jnp.float32)
            # suffix-dims DFT: right-multiply (complex x complex)
            zr_c = zr.astype(mm_dtype)
            zi_c = zi.astype(mm_dtype)
            vr = (jnp.dot(zr_c, rr, preferred_element_type=jnp.float32)
                  - jnp.dot(zi_c, ri, preferred_element_type=jnp.float32))
            vi = (jnp.dot(zr_c, ri, preferred_element_type=jnp.float32)
                  + jnp.dot(zi_c, rr, preferred_element_type=jnp.float32))
            p = vr * vr + vi * vi
            if log_matrix:
                p = jnp.log(p + 1.0)
            return p

        d = log_power(xp_ref) - log_power(xt_ref)
        psum = jnp.sum(d * d, axis=(0, 1), keepdims=True)
        out_ref[...] = jnp.broadcast_to(psum, _OUT_TILE)

    return kernel


# ----------------------------------------------------------------------------
# ThreeDFL forward
# ----------------------------------------------------------------------------
@functools.partial(jax.jit, static_argnames=("log_matrix", "matmul_dtype"))
def three_dfl(pred, target, log_matrix=True, matmul_dtype=jnp.float32):
    """Equivalent of ThreeDFL(train=False, log_matrix=True).forward(pred, target).

    matmul_dtype=jnp.bfloat16 enables MXU-native matmul operands (v6e/v7x);
    default float32 preserves reference accuracy of the torch.fft module.
    """
    n, c, h, w = pred.shape
    chw = c * h * w
    pred = pred.astype(jnp.float32)
    target = target.astype(jnp.float32)

    cap = _vmem_cap_bytes()
    mm_dtype = jnp.dtype(matmul_dtype)
    mm_item = mm_dtype.itemsize

    if chw <= _FULL_KRON_MAX:
        # ---- full-kron path (small volumes; exercised by the exemplar) -----
        bn, need = _pick_batch_block(n, chw, mm_item, cap)
        grid = n // bn
        kr, ki = _kron_dft_np((c, h, w))

        # free reshape views: the (bn, chw) kernel blocks arrive matmul-ready
        xp = pred.reshape(grid, bn, chw)
        xt = target.reshape(grid, bn, chw)

        data_spec = pl.BlockSpec((None, bn, chw), lambda i: (i, 0, 0))
        # NOTE: constant index_map -> fetched once; single-buffering them
        # (pl.Buffered(1)) would reclaim a further chw^2-sized buffer.
        const_spec = pl.BlockSpec((chw, chw), lambda i: (0, 0))

        partials = pl.pallas_call(
            _make_full_kron_kernel(bn, chw, log_matrix),
            out_shape=jax.ShapeDtypeStruct((grid * 8, 128), jnp.float32),
            grid=(grid,),
            in_specs=[data_spec, data_spec, const_spec, const_spec],
            out_specs=pl.BlockSpec(_OUT_TILE, lambda i: (i, 0)),
            scratch_shapes=[pltpu.VMEM((2 * bn, chw), mm_dtype)],
            compiler_params=pltpu.CompilerParams(
                dimension_semantics=("parallel",),
                vmem_limit_bytes=int(min(cap, max(2 * need, 32 * 1024 * 1024)))),
        )(xp, xt, jnp.asarray(kr, mm_dtype), jnp.asarray(ki, mm_dtype))
    else:
        # ---- separable fallback: Kleft @ X @ Kright, one batch elem / step --
        # TODO(synk): no intra-volume tiling; volumes whose kron factors exceed
        # VMEM (both c*h and h*w huge) would need a dot_general/middle-axis
        # contraction variant.
        hw = h * w
        ch = c * h
        options = [(c, hw, (c,), (h, w)),      # rows=C,   lanes=H*W
                   (ch, w, (c, h), (w,))]      # rows=C*H, lanes=W

        def mat_bytes(r, l):
            return 2 * 2 * (r * r + l * l) * mm_item   # re/im, double-buffered

        def score(opt):
            r, l, _, _ = opt
            return (mat_bytes(r, l) <= cap // 2, l >= 128, -mat_bytes(r, l))

        rows, lanes, dims_l, dims_r = max(options, key=score)
        lr, li = _kron_dft_np(dims_l)
        rr, ri = _kron_dft_np(dims_r)

        xp = pred.reshape(n, rows, lanes)      # free views, matmul-ready blocks
        xt = target.reshape(n, rows, lanes)
        need = (2 * 2 * rows * lanes * 4
                + mat_bytes(rows, lanes)
                + 12 * rows * lanes * 4)

        data_spec = pl.BlockSpec((None, rows, lanes), lambda i: (i, 0, 0))

        def mat_spec(k):
            return pl.BlockSpec((k, k), lambda i: (0, 0))

        partials = pl.pallas_call(
            _make_separable_kernel(rows, lanes, log_matrix, mm_dtype),
            out_shape=jax.ShapeDtypeStruct((n * 8, 128), jnp.float32),
            grid=(n,),
            in_specs=[data_spec, data_spec,
                      mat_spec(rows), mat_spec(rows),
                      mat_spec(lanes), mat_spec(lanes)],
            out_specs=pl.BlockSpec(_OUT_TILE, lambda i: (i, 0)),
            compiler_params=pltpu.CompilerParams(
                dimension_semantics=("parallel",),
                vmem_limit_bytes=int(min(cap, max(2 * need, 32 * 1024 * 1024)))),
        )(xp, xt,
          jnp.asarray(lr, mm_dtype), jnp.asarray(li, mm_dtype),
          jnp.asarray(rr, mm_dtype), jnp.asarray(ri, mm_dtype))

    # every element of a step's (8,128) block holds that step's partial sum
    total = float(n * chw)
    return jnp.sum(partials) / (float(_OUT_TILE_ELEMS) * total)


# ----------------------------------------------------------------------------
# reference (numpy) for verification
# ----------------------------------------------------------------------------
def _ref_loss(pred, target, log_matrix=True):
    pf = np.fft.fftn(np.asarray(pred, dtype=np.float64), axes=(-3, -2, -1))
    tf = np.fft.fftn(np.asarray(target, dtype=np.float64), axes=(-3, -2, -1))
    pp = pf.real ** 2 + pf.imag ** 2
    tp = tf.real ** 2 + tf.imag ** 2
    if log_matrix:
        pp = np.log(pp + 1.0)
        tp = np.log(tp + 1.0)
    return np.mean((pp - tp) ** 2)


if __name__ == "__main__":
    key = jax.random.PRNGKey(0)
    k1, k2, k3, k4 = jax.random.split(key, 4)

    # primary shape from the module spec: (N, C, H, W) = (2, 4, 16, 16)
    pred = jax.random.normal(k1, (2, 4, 16, 16), dtype=jnp.float32)
    target = jax.random.normal(k2, (2, 4, 16, 16), dtype=jnp.float32)
    loss = jax.block_until_ready(three_dfl(pred, target))
    ref = _ref_loss(np.asarray(pred), np.asarray(target))
    np.testing.assert_allclose(np.asarray(loss), ref, rtol=1e-3, atol=1e-4)

    # a slightly larger shape exercising the separable fallback path
    pred2 = jax.random.normal(k3, (2, 4, 16, 32), dtype=jnp.float32)
    target2 = jax.random.normal(k4, (2, 4, 16, 32), dtype=jnp.float32)
    loss2 = jax.block_until_ready(three_dfl(pred2, target2))
    ref2 = _ref_loss(np.asarray(pred2), np.asarray(target2))
    np.testing.assert_allclose(np.asarray(loss2), ref2, rtol=1e-3, atol=1e-4)

    print("KERNEL_OK")
</pallas_src>

<mosaic_0001>
module attributes {stable_mosaic.version = 11 : i64} {
  func.func @kernel(%arg0: i32, %arg1: memref<1x2x1024xf32, #tpu.memory_space<vmem>>, %arg2: memref<1x2x1024xf32, #tpu.memory_space<vmem>>, %arg3: memref<1024x1024xf32, #tpu.memory_space<vmem>>, %arg4: memref<1024x1024xf32, #tpu.memory_space<vmem>>, %arg5: memref<8x128xf32, #tpu.memory_space<vmem>>, %arg6: memref<4x1024xf32, #tpu.memory_space<vmem>>) attributes {dimension_semantics = [#tpu.dimension_semantics<parallel>], iteration_bounds = array<i64: 1>, scalar_prefetch = 0 : i64, scratch_operands = 1 : i64, tpu.core_type = #tpu.core_type<tc>, window_params = [{transform_indices = @transform_0, window_bounds = array<i64: 1, 2, 1024>}, {transform_indices = @transform_1, window_bounds = array<i64: 1, 2, 1024>}, {pipeline_mode = #tpu.pipeline_mode<synchronous>, transform_indices = @transform_2, window_bounds = array<i64: 1024, 1024>}, {pipeline_mode = #tpu.pipeline_mode<synchronous>, transform_indices = @transform_3, window_bounds = array<i64: 1024, 1024>}, {transform_indices = @transform_4, window_bounds = array<i64: 8, 128>}]} {
    %c0 = arith.constant 0 : index
    %c0_0 = arith.constant 0 : index
    %c0_1 = arith.constant 0 : index
    %0 = vector.load %arg1[%c0, %c0_0, %c0_1] : memref<1x2x1024xf32, #tpu.memory_space<vmem>>, vector<1x2x1024xf32>
    %1 = vector.shape_cast %0 : vector<1x2x1024xf32> to vector<2x1024xf32>
    %c0_2 = arith.constant 0 : index
    %c0_3 = arith.constant 0 : index
    %2 = vector.load %arg6[%c0_2, %c0_3] : memref<4x1024xf32, #tpu.memory_space<vmem>>, vector<2x1024xf32>
    tpu.vector_store %arg6[%c0_2, %c0_3], %1 {strides = array<i32>} : memref<4x1024xf32, #tpu.memory_space<vmem>>, vector<2x1024xf32>,
    %c0_4 = arith.constant 0 : index
    %c0_5 = arith.constant 0 : index
    %c0_6 = arith.constant 0 : index
    %3 = vector.load %arg2[%c0_4, %c0_5, %c0_6] : memref<1x2x1024xf32, #tpu.memory_space<vmem>>, vector<1x2x1024xf32>
    %4 = vector.shape_cast %3 : vector<1x2x1024xf32> to vector<2x1024xf32>
    %c2 = arith.constant 2 : index
    %c0_7 = arith.constant 0 : index
    %5 = vector.load %arg6[%c2, %c0_7] : memref<4x1024xf32, #tpu.memory_space<vmem>>, vector<2x1024xf32>
    tpu.vector_store %arg6[%c2, %c0_7], %4 {strides = array<i32>} : memref<4x1024xf32, #tpu.memory_space<vmem>>, vector<2x1024xf32>,
    %c0_8 = arith.constant 0 : index
    %c0_9 = arith.constant 0 : index
    %6 = vector.load %arg6[%c0_8, %c0_9] : memref<4x1024xf32, #tpu.memory_space<vmem>>, vector<4x1024xf32>
    %c0_10 = arith.constant 0 : index
    %c0_11 = arith.constant 0 : index
    %7 = vector.load %arg3[%c0_10, %c0_11] : memref<1024x1024xf32, #tpu.memory_space<vmem>>, vector<1024x1024xf32>
    %cst = arith.constant dense<0.000000e+00> : vector<4x1024xf32>
    %8 = tpu.matmul %6, %7, %cst {dimension_numbers = #tpu.dot_dimension_numbers<[1], [0], [0], [1], [0, 0, 1, 1], [], []>} : vector<4x1024xf32>, vector<1024x1024xf32>, vector<4x1024xf32> -> vector<4x1024xf32>
    %c0_12 = arith.constant 0 : index
    %c0_13 = arith.constant 0 : index
    %9 = vector.load %arg4[%c0_12, %c0_13] : memref<1024x1024xf32, #tpu.memory_space<vmem>>, vector<1024x1024xf32>
    %cst_14 = arith.constant dense<0.000000e+00> : vector<4x1024xf32>
    %10 = tpu.matmul %6, %9, %cst_14 {dimension_numbers = #tpu.dot_dimension_numbers<[1], [0], [0], [1], [0, 0, 1, 1], [], []>} : vector<4x1024xf32>, vector<1024x1024xf32>, vector<4x1024xf32> -> vector<4x1024xf32>
    %11 = arith.mulf %8, %8 : vector<4x1024xf32>
    %12 = arith.mulf %10, %10 : vector<4x1024xf32>
    %13 = arith.addf %11, %12 : vector<4x1024xf32>
    %cst_15 = arith.constant 1.000000e+00 : f32
    %14 = vector.broadcast %cst_15 : f32 to vector<4x1024xf32>
    %15 = arith.addf %13, %14 : vector<4x1024xf32>
    %16 = math.log %15 : vector<4x1024xf32>
    %17 = vector.extract_strided_slice %16 {offsets = [0, 0], sizes = [2, 1024], strides = [1, 1]} : vector<4x1024xf32> to vector<2x1024xf32>
    %18 = vector.extract_strided_slice %16 {offsets = [2, 0], sizes = [2, 1024], strides = [1, 1]} : vector<4x1024xf32> to vector<2x1024xf32>
    %19 = arith.subf %17, %18 : vector<2x1024xf32>
    %20 = arith.mulf %19, %19 : vector<2x1024xf32>
    %21 = vector.shape_cast %20 : vector<2x1024xf32> to vector<1x2x1024xf32>
    %cst_16 = arith.constant dense<0.000000e+00> : vector<1xf32>
    %22 = vector.multi_reduction <add>, %21, %cst_16 [1, 2] : vector<1x2x1024xf32> to vector<1xf32>
    %23 = vector.shape_cast %22 : vector<1xf32> to vector<1x1x1xf32>
    %24 = vector.extract %23[0, 0, 0] : f32 from vector<1x1x1xf32>
    %25 = vector.broadcast %24 : f32 to vector<1x1xf32>
    %26 = vector.shape_cast %25 : vector<1x1xf32> to vector<1x1xf32>
    %27 = vector.broadcast %26 : vector<1x1xf32> to vector<8x128xf32>
    %c0_17 = arith.constant 0 : index
    %c0_18 = arith.constant 0 : index
    %28 = vector.load %arg5[%c0_17, %c0_18] : memref<8x128xf32, #tpu.memory_space<vmem>>, vector<8x128xf32>
    tpu.vector_store %arg5[%c0_17, %c0_18], %27 {strides = array<i32>} : memref<8x128xf32, #tpu.memory_space<vmem>>, vector<8x128xf32>,
    return
  }
  func.func @transform_0(%arg0: i32) -> (i32, i32, i32) {
    %c0_i32 = arith.constant 0 : i32
    %c0_i32_0 = arith.constant 0 : i32
    %c0_i32_1 = arith.constant 0 : i32
    return %arg0, %c0_i32, %c0_i32_0 : i32, i32, i32
  }
  func.func @transform_1(%arg0: i32) -> (i32, i32, i32) {
    %c0_i32 = arith.constant 0 : i32
    %c0_i32_0 = arith.constant 0 : i32
    %c0_i32_1 = arith.constant 0 : i32
    return %arg0, %c0_i32, %c0_i32_0 : i32, i32, i32
  }
  func.func @transform_2(%arg0: i32) -> (i32, i32) {
    %c0_i32 = arith.constant 0 : i32
    %c0_i32_0 = arith.constant 0 : i32
    %c0_i32_1 = arith.constant 0 : i32
    return %c0_i32, %c0_i32_0 : i32, i32
  }
  func.func @transform_3(%arg0: i32) -> (i32, i32) {
    %c0_i32 = arith.constant 0 : i32
    %c0_i32_0 = arith.constant 0 : i32
    %c0_i32_1 = arith.constant 0 : i32
    return %c0_i32, %c0_i32_0 : i32, i32
  }
  func.func @transform_4(%arg0: i32) -> (i32, i32) {
    %c0_i32 = arith.constant 0 : i32
    %c0_i32_0 = arith.constant 0 : i32
    return %arg0, %c0_i32 : i32, i32
  }
}

</mosaic_0001>

<llo_original>
// kernel: three_dfl.1
$region0: #{three_dfl.1}
  #allocation0 [shape = 'u32[]', space=smem, size = 0x4, offset = 0x4, fixed_abs, tag = 'smem constant byte address 0x4 - core index']
  #allocation1 [shape = 'u32[72,128]{1,0:T(1,128)}', space=vmem, size = 0x9000, scoped, tag = 'internal scratch']
  #allocation2 [shape = 'f32[4,1024]{1,0:T(4,128)}', space=vmem, size = 0x4000, scoped, tag = 'scratch operand']
  %s0 = inlined_call_operand.vmem [shape: f32[1,2,1024], index: 0, kind: input, shape index: {}]
  %s1 = inlined_call_operand.vmem [shape: f32[1,2,1024], index: 1, kind: input, shape index: {}]
  %s2 = inlined_call_operand.hbm [shape: f32[1024,1024], index: 2, kind: input, shape index: {}]
  %s3 = inlined_call_operand.hbm [shape: f32[1024,1024], index: 3, kind: input, shape index: {}]
  %s4 = inlined_call_operand.vmem [shape: f32[8,128], index: 4, kind: output, shape index: {}]
  %s5 = sld [smem:[#allocation0]]
  $region34: #{three_dfl.1} parent=0
    _
  %s7 = ssub.s32 1, %s5
  %s8 = scalar_select 0, %s7, %s5
  $region1: #{three_dfl.1} parent=0
    #allocation3 [shape = 'u8[4194304]{0}', space=vmem, size = 0x400000, scoped, tag = 'input window, operand 2, single buffered']
    #allocation4 [shape = 's32[1]{0}', space=sflag, size = 0x4, scoped, tag = 'scoped memory for three_dfl.1']
    #allocation5 [shape = 'u8[4194304]{0}', space=vmem, size = 0x400000, scoped, tag = 'input window, operand 3, single buffered']
    #allocation6 [shape = 's32[1]{0}', space=sflag, size = 0x4, scoped, tag = 'scoped memory for three_dfl.1']
    %9 = vsyncpa [#allocation4], 0
    %10 = vsyncpa [#allocation6], 0
    // Predicated region
    $region2: #{three_dfl.1} parent=1 // pred_check
      _
    $region3: #{three_dfl.1} parent=1 // pred_check_branch
      %12 = sbr.rel (0) target = $region5
    $region4: #{three_dfl.1} parent=1 // pred_region
      _
    $region5: #{three_dfl.1} parent=1 // pred_fallthru
      _
    // Predicated region
    $region6: #{three_dfl.1} parent=1 // pred_check
      _
    $region7: #{three_dfl.1} parent=1 // pred_check_branch
      %14 = sbr.rel (0) target = $region9
    $region8: #{three_dfl.1} parent=1 // pred_region
      _
    $region9: #{three_dfl.1} parent=1 // pred_fallthru
      _
    // Predicated region
    $region10: #{three_dfl.1} parent=1 // pred_check
      _
    $region11: #{three_dfl.1} parent=1 // pred_check_branch
      %16 = sbr.rel (0) target = $region13
    $region12: #{three_dfl.1} parent=1 // pred_region
      %18 = vsyncadd [#allocation4], 0
      %s19 = sshll.u32 %s2, 4
      %s20 = int_to_ptr.hbm [resolvable:$true] %s19
      %s21 = sshll.u32 [#allocation3], 4
      %s22 = int_to_ptr.vmem [resolvable:$true] %s21
      %27 = dma.hbm_to_vmem [thread:$0]  %s20, 131072, %s22, [#allocation4], 1024, 1024, 64
    $region13: #{three_dfl.1} parent=1 // pred_fallthru
      _
    // Predicated region
    $region14: #{three_dfl.1} parent=1 // pred_check
      _
    $region15: #{three_dfl.1} parent=1 // pred_check_branch
      %29 = sbr.rel (0) target = $region17
    $region16: #{three_dfl.1} parent=1 // pred_region
      %31 = vsyncadd [#allocation6], 0
      %s32 = sshll.u32 %s3, 4
      %s33 = int_to_ptr.hbm [resolvable:$true] %s32
      %s34 = sshll.u32 [#allocation5], 4
      %s35 = int_to_ptr.vmem [resolvable:$true] %s34
      %40 = dma.hbm_to_vmem [thread:$0]  %s33, 131072, %s35, [#allocation6], 1024, 1024, 64
    $region17: #{three_dfl.1} parent=1 // pred_fallthru
      _
    // Predicated region
    $region18: #{three_dfl.1} parent=1 // pred_check
      _
    $region19: #{three_dfl.1} parent=1 // pred_check_branch
      %42 = sbr.rel (0) target = $region21
    $region20: #{three_dfl.1} parent=1 // pred_region
      %44 = dma.done [#allocation4], 131072
    $region21: #{three_dfl.1} parent=1 // pred_fallthru
      _
    // Predicated region
    $region22: #{three_dfl.1} parent=1 // pred_check
      _
    $region23: #{three_dfl.1} parent=1 // pred_check_branch
      %46 = sbr.rel (0) target = $region25
    $region24: #{three_dfl.1} parent=1 // pred_region
      %48 = dma.done [#allocation6], 131072
    $region25: #{three_dfl.1} parent=1 // pred_fallthru
      _
    %v49 = vld [vmem:[%s0] sm:$0xff]
    %v50 = vld [vmem:[%s0 + $0x8] sm:$0xff]
    %53 = vst [vmem:[#allocation1] ss:$2 sm:$0xff] %v49
    %s54 = scalar_lea.vmem [#allocation1], 16
    %55 = vst [vmem:[%s54] ss:$2 sm:$0xff] %v50
    %v56 = vld.sshfl [vmem:[#allocation1] sm:$0xff pattern:$0x75643120]
    %v57 = vld.sshfl [vmem:[#allocation1 + $0x8] sm:$0xff pattern:$0x75643120]
    %v58 = vld.sshfl [vmem:[#allocation1 + $0x10] sm:$0xff pattern:$0x75643120]
    %v59 = vld.sshfl [vmem:[#allocation1 + $0x18] sm:$0xff pattern:$0x75643120]
    %64 = vst [vmem:[#allocation2] sm:$0x33] %v56
    %65 = vst [vmem:[#allocation2 + $0x8] sm:$0x33] %v57
    %66 = vst [vmem:[#allocation2 + $0x10] sm:$0x33] %v58
    %67 = vst [vmem:[#allocation2 + $0x18] sm:$0x33] %v59
    %v68 = vld [vmem:[%s1] sm:$0xff]
    %v69 = vld [vmem:[%s1 + $0x8] sm:$0xff]
    %s72 = scalar_lea.vmem [#allocation1], 1
    %73 = vst [vmem:[%s72] ss:$2 sm:$0xff] %v68
    %s74 = scalar_lea.vmem [#allocation1], 17
    %75 = vst [vmem:[%s74] ss:$2 sm:$0xff] %v69
    %v76 = vld.sshfl [vmem:[#allocation1] sm:$0xff pattern:$0x75643120]
    %v77 = vld.sshfl [vmem:[#allocation1 + $0x8] sm:$0xff pattern:$0x75643120]
    %v78 = vld.sshfl [vmem:[#allocation1 + $0x10] sm:$0xff pattern:$0x75643120]
    %v79 = vld.sshfl [vmem:[#allocation1 + $0x18] sm:$0xff pattern:$0x75643120]
    %84 = vst [vmem:[#allocation2] sm:$0xcc] %v76
    %85 = vst [vmem:[#allocation2 + $0x8] sm:$0xcc] %v77
    %86 = vst [vmem:[#allocation2 + $0x10] sm:$0xcc] %v78
    %87 = vst [vmem:[#allocation2 + $0x18] sm:$0xcc] %v79
    %v88 = vld [vmem:[#allocation2] sm:$0xff]
    %v89 = vld [vmem:[#allocation2 + $0x8] sm:$0xff]
    %v90 = vld [vmem:[#allocation2 + $0x10] sm:$0xff]
    %v91 = vld [vmem:[#allocation2 + $0x18] sm:$0xff]
    %v92 = vld [vmem:[#allocation3] sm:$0xff]
    %v93 = vld [vmem:[#allocation3 + $0x8] sm:$0xff]
    %v94 = vld [vmem:[#allocation3 + $0x10] sm:$0xff]
    %v95 = vld [vmem:[#allocation3 + $0x18] sm:$0xff]
    %v96 = vld [vmem:[#allocation3 + $0x20] sm:$0xff]
    %v97 = vld [vmem:[#allocation3 + $0x28] sm:$0xff]
    %v98 = vld [vmem:[#allocation3 + $0x30] sm:$0xff]
    %v99 = vld [vmem:[#allocation3 + $0x38] sm:$0xff]
    %v100 = vld [vmem:[#allocation3 + $0x40] sm:$0xff]
    %v101 = vld [vmem:[#allocation3 + $0x48] sm:$0xff]
    %v102 = vld [vmem:[#allocation3 + $0x50] sm:$0xff]
    %v103 = vld [vmem:[#allocation3 + $0x58] sm:$0xff]
    %v104 = vld [vmem:[#allocation3 + $0x60] sm:$0xff]
    %v105 = vld [vmem:[#allocation3 + $0x68] sm:$0xff]
    %v106 = vld [vmem:[#allocation3 + $0x70] sm:$0xff]
    %v107 = vld [vmem:[#allocation3 + $0x78] sm:$0xff]
    %v108 = vld [vmem:[#allocation3 + $0x80] sm:$0xff]
    %v109 = vld [vmem:[#allocation3 + $0x88] sm:$0xff]
    %v110 = vld [vmem:[#allocation3 + $0x90] sm:$0xff]
    %v111 = vld [vmem:[#allocation3 + $0x98] sm:$0xff]
    %v112 = vld [vmem:[#allocation3 + $0xa0] sm:$0xff]
    %v113 = vld [vmem:[#allocation3 + $0xa8] sm:$0xff]
    %v114 = vld [vmem:[#allocation3 + $0xb0] sm:$0xff]
    %v115 = vld [vmem:[#allocation3 + $0xb8] sm:$0xff]
    %v116 = vld [vmem:[#allocation3 + $0xc0] sm:$0xff]
    %v117 = vld [vmem:[#allocation3 + $0xc8] sm:$0xff]
    %v118 = vld [vmem:[#allocation3 + $0xd0] sm:$0xff]
    %v119 = vld [vmem:[#allocation3 + $0xd8] sm:$0xff]
    %v120 = vld [vmem:[#allocation3 + $0xe0] sm:$0xff]
    %v121 = vld [vmem:[#allocation3 + $0xe8] sm:$0xff]
    %v122 = vld [vmem:[#allocation3 + $0xf0] sm:$0xff]
    %v123 = vld [vmem:[#allocation3 + $0xf8] sm:$0xff]
    %v124 = vld [vmem:[#allocation3 + $0x100] sm:$0xff]
    %v125 = vld [vmem:[#allocation3 + $0x108] sm:$0xff]
    %v126 = vld [vmem:[#allocation3 + $0x110] sm:$0xff]
    %v127 = vld [vmem:[#allocation3 + $0x118] sm:$0xff]
    %v128 = vld [vmem:[#allocation3 + $0x120] sm:$0xff]
    %v129 = vld [vmem:[#allocation3 + $0x128] sm:$0xff]
    %v130 = vld [vmem:[#allocation3 + $0x130] sm:$0xff]
    %v131 = vld [vmem:[#allocation3 + $0x138] sm:$0xff]
    %v132 = vld [vmem:[#allocation3 + $0x140] sm:$0xff]
    %v133 = vld [vmem:[#allocation3 + $0x148] sm:$0xff]
    %v134 = vld [vmem:[#allocation3 + $0x150] sm:$0xff]
    %v135 = vld [vmem:[#allocation3 + $0x158] sm:$0xff]
    %v136 = vld [vmem:[#allocation3 + $0x160] sm:$0xff]
    %v137 = vld [vmem:[#allocation3 + $0x168] sm:$0xff]
    %v138 = vld [vmem:[#allocation3 + $0x170] sm:$0xff]
    %v139 = vld [vmem:[#allocation3 + $0x178] sm:$0xff]
    %v140 = vld [vmem:[#allocation3 + $0x180] sm:$0xff]
    %v141 = vld [vmem:[#allocation3 + $0x188] sm:$0xff]
    %v142 = vld [vmem:[#allocation3 + $0x190] sm:$0xff]
    %v143 = vld [vmem:[#allocation3 + $0x198] sm:$0xff]
    %v144 = vld [vmem:[#allocation3 + $0x1a0] sm:$0xff]
    %v145 = vld [vmem:[#allocation3 + $0x1a8] sm:$0xff]
    %v146 = vld [vmem:[#allocation3 + $0x1b0] sm:$0xff]
    %v147 = vld [vmem:[#allocation3 + $0x1b8] sm:$0xff]
    %v148 = vld [vmem:[#allocation3 + $0x1c0] sm:$0xff]
    %v149 = vld [vmem:[#allocation3 + $0x1c8] sm:$0xff]
    %v150 = vld [vmem:[#allocation3 + $0x1d0] sm:$0xff]
    %v151 = vld [vmem:[#allocation3 + $0x1d8] sm:$0xff]
    %v152 = vld [vmem:[#allocation3 + $0x1e0] sm:$0xff]
    %v153 = vld [vmem:[#allocation3 + $0x1e8] sm:$0xff]
    %v154 = vld [vmem:[#allocation3 + $0x1f0] sm:$0xff]
    %v155 = vld [vmem:[#allocation3 + $0x1f8] sm:$0xff]
    %v156 = vld [vmem:[#allocation3 + $0x200] sm:$0xff]
    %v157 = vld [vmem:[#allocation3 + $0x208] sm:$0xff]
    %v158 = vld [vmem:[#allocation3 + $0x210] sm:$0xff]
    %v159 = vld [vmem:[#allocation3 + $0x218] sm:$0xff]
    %v160 = vld [vmem:[#allocation3 + $0x220] sm:$0xff]
    %v161 = vld [vmem:[#allocation3 + $0x228] sm:$0xff]
    %v162 = vld [vmem:[#allocation3 + $0x230] sm:$0xff]
    %v163 = vld [vmem:[#allocation3 + $0x238] sm:$0xff]
    %v164 = vld [vmem:[#allocation3 + $0x240] sm:$0xff]
    %v165 = vld [vmem:[#allocation3 + $0x248] sm:$0xff]
    %v166 = vld [vmem:[#allocation3 + $0x250] sm:$0xff]
    %v167 = vld [vmem:[#allocation3 + $0x258] sm:$0xff]
    %v168 = vld [vmem:[#allocation3 + $0x260] sm:$0xff]
    %v169 = vld [vmem:[#allocation3 + $0x268] sm:$0xff]
    %v170 = vld [vmem:[#allocation3 + $0x270] sm:$0xff]
    %v171 = vld [vmem:[#allocation3 + $0x278] sm:$0xff]
    %v172 = vld [vmem:[#allocation3 + $0x280] sm:$0xff]
    %v173 = vld [vmem:[#allocation3 + $0x288] sm:$0xff]
    %v174 = vld [vmem:[#allocation3 + $0x290] sm:$0xff]
    %v175 = vld [vmem:[#allocation3 + $0x298] sm:$0xff]
    %v176 = vld [vmem:[#allocation3 + $0x2a0] sm:$0xff]
    %v177 = vld [vmem:[#allocation3 + $0x2a8] sm:$0xff]
    %v178 = vld [vmem:[#allocation3 + $0x2b0] sm:$0xff]
    %v179 = vld [vmem:[#allocation3 + $0x2b8] sm:$0xff]
    %v180 = vld [vmem:[#allocation3 + $0x2c0] sm:$0xff]
    %v181 = vld [vmem:[#allocation3 + $0x2c8] sm:$0xff]
    %v182 = vld [vmem:[#allocation3 + $0x2d0] sm:$0xff]
    %v183 = vld [vmem:[#allocation3 + $0x2d8] sm:$0xff]
    %v184 = vld [vmem:[#allocation3 + $0x2e0] sm:$0xff]
    %v185 = vld [vmem:[#allocation3 + $0x2e8] sm:$0xff]
    %v186 = vld [vmem:[#allocation3 + $0x2f0] sm:$0xff]
    %v187 = vld [vmem:[#allocation3 + $0x2f8] sm:$0xff]
    %v188 = vld [vmem:[#allocation3 + $0x300] sm:$0xff]
    %v189 = vld [vmem:[#allocation3 + $0x308] sm:$0xff]
    %v190 = vld [vmem:[#allocation3 + $0x310] sm:$0xff]
    %v191 = vld [vmem:[#allocation3 + $0x318] sm:$0xff]
    %v192 = vld [vmem:[#allocation3 + $0x320] sm:$0xff]
    %v193 = vld [vmem:[#allocation3 + $0x328] sm:$0xff]
    %v194 = vld [vmem:[#allocation3 + $0x330] sm:$0xff]
    %v195 = vld [vmem:[#allocation3 + $0x338] sm:$0xff]
    %v196 = vld [vmem:[#allocation3 + $0x340] sm:$0xff]
    %v197 = vld [vmem:[#allocation3 + $0x348] sm:$0xff]
    %v198 = vld [vmem:[#allocation3 + $0x350] sm:$0xff]
    %v199 = vld [vmem:[#allocation3 + $0x358] sm:$0xff]
    %v200 = vld [vmem:[#allocation3 + $0x360] sm:$0xff]
    %v201 = vld [vmem:[#allocation3 + $0x368] sm:$0xff]
    %v202 = vld [vmem:[#allocation3 + $0x370] sm:$0xff]
    %v203 = vld [vmem:[#allocation3 + $0x378] sm:$0xff]
    %v204 = vld [vmem:[#allocation3 + $0x380] sm:$0xff]
    %v205 = vld [vmem:[#allocation3 + $0x388] sm:$0xff]
    %v206 = vld [vmem:[#allocation3 + $0x390] sm:$0xff]
    %v207 = vld [vmem:[#allocation3 + $0x398] sm:$0xff]
    %v208 = vld [vmem:[#allocation3 + $0x3a0] sm:$0xff]
    %v209 = vld [vmem:[#allocation3 + $0x3a8] sm:$0xff]
    %v210 = vld [vmem:[#allocation3 + $0x3b0] sm:$0xff]
    %v211 = vld [vmem:[#allocation3 + $0x3b8] sm:$0xff]
    %v212 = vld [vmem:[#allocation3 + $0x3c0] sm:$0xff]
    %v213 = vld [vmem:[#allocation3 + $0x3c8] sm:$0xff]
    %v214 = vld [vmem:[#allocation3 + $0x3d0] sm:$0xff]
    %v215 = vld [vmem:[#allocation3 + $0x3d8] sm:$0xff]
    %v216 = vld [vmem:[#allocation3 + $0x3e0] sm:$0xff]
    %v217 = vld [vmem:[#allocation3 + $0x3e8] sm:$0xff]
    %v218 = vld [vmem:[#allocation3 + $0x3f0] sm:$0xff]
    %v219 = vld [vmem:[#allocation3 + $0x3f8] sm:$0xff]
    %v220 = vld [vmem:[#allocation3 + $0x400] sm:$0xff]
    %v221 = vld [vmem:[#allocation3 + $0x408] sm:$0xff]
    %v222 = vld [vmem:[#allocation3 + $0x410] sm:$0xff]
    %v223 = vld [vmem:[#allocation3 + $0x418] sm:$0xff]
    %v224 = vld [vmem:[#allocation3 + $0x420] sm:$0xff]
    %v225 = vld [vmem:[#allocation3 + $0x428] sm:$0xff]
    %v226 = vld [vmem:[#allocation3 + $0x430] sm:$0xff]
    %v227 = vld [vmem:[#allocation3 + $0x438] sm:$0xff]
    %v228 = vld [vmem:[#allocation3 + $0x440] sm:$0xff]
    %v229 = vld [vmem:[#allocation3 + $0x448] sm:$0xff]
    %v230 = vld [vmem:[#allocation3 + $0x450] sm:$0xff]
    %v231 = vld [vmem:[#allocation3 + $0x458] sm:$0xff]
    %v232 = vld [vmem:[#allocation3 + $0x460] sm:$0xff]
    %v233 = vld [vmem:[#allocation3 + $0x468] sm:$0xff]
    %v234 = vld [vmem:[#allocation3 + $0x470] sm:$0xff]
    %v235 = vld [vmem:[#allocation3 + $0x478] sm:$0xff]
    %v236 = vld [vmem:[#allocation3 + $0x480] sm:$0xff]
    %v237 = vld [vmem:[#allocation3 + $0x488] sm:$0xff]
    %v238 = vld [vmem:[#allocation3 + $0x490] sm:$0xff]
    %v239 = vld [vmem:[#allocation3 + $0x498] sm:$0xff]
    %v240 = vld [vmem:[#allocation3 + $0x4a0] sm:$0xff]
    %v241 = vld [vmem:[#allocation3 + $0x4a8] sm:$0xff]
    %v242 = vld [vmem:[#allocation3 + $0x4b0] sm:$0xff]
    %v243 = vld [vmem:[#allocation3 + $0x4b8] sm:$0xff]
    %v244 = vld [vmem:[#allocation3 + $0x4c0] sm:$0xff]
    %v245 = vld [vmem:[#allocation3 + $0x4c8] sm:$0xff]
    %v246 = vld [vmem:[#allocation3 + $0x4d0] sm:$0xff]
    %v247 = vld [vmem:[#allocation3 + $0x4d8] sm:$0xff]
    %v248 = vld [vmem:[#allocation3 + $0x4e0] sm:$0xff]
    %v249 = vld [vmem:[#allocation3 + $0x4e8] sm:$0xff]
    %v250 = vld [vmem:[#allocation3 + $0x4f0] sm:$0xff]
    %v251 = vld [vmem:[#allocation3 + $0x4f8] sm:$0xff]
    %v252 = vld [vmem:[#allocation3 + $0x500] sm:$0xff]
    %v253 = vld [vmem:[#allocation3 + $0x508] sm:$0xff]
    %v254 = vld [vmem:[#allocation3 + $0x510] sm:$0xff]
    %v255 = vld [vmem:[#allocation3 + $0x518] sm:$0xff]
    %v256 = vld [vmem:[#allocation3 + $0x520] sm:$0xff]
    %v257 = vld [vmem:[#allocation3 + $0x528] sm:$0xff]
    %v258 = vld [vmem:[#allocation3 + $0x530] sm:$0xff]
    %v259 = vld [vmem:[#allocation3 + $0x538] sm:$0xff]
    %v260 = vld [vmem:[#allocation3 + $0x540] sm:$0xff]
    %v261 = vld [vmem:[#allocation3 + $0x548] sm:$0xff]
    %v262 = vld [vmem:[#allocation3 + $0x550] sm:$0xff]
    %v263 = vld [vmem:[#allocation3 + $0x558] sm:$0xff]
    %v264 = vld [vmem:[#allocation3 + $0x560] sm:$0xff]
    %v265 = vld [vmem:[#allocation3 + $0x568] sm:$0xff]
    %v266 = vld [vmem:[#allocation3 + $0x570] sm:$0xff]
    %v267 = vld [vmem:[#allocation3 + $0x578] sm:$0xff]
    %v268 = vld [vmem:[#allocation3 + $0x580] sm:$0xff]
    %v269 = vld [vmem:[#allocation3 + $0x588] sm:$0xff]
    %v270 = vld [vmem:[#allocation3 + $0x590] sm:$0xff]
    %v271 = vld [vmem:[#allocation3 + $0x598] sm:$0xff]
    %v272 = vld [vmem:[#allocation3 + $0x5a0] sm:$0xff]
    %v273 = vld [vmem:[#allocation3 + $0x5a8] sm:$0xff]
    %v274 = vld [vmem:[#allocation3 + $0x5b0] sm:$0xff]
    %v275 = vld [vmem:[#allocation3 + $0x5b8] sm:$0xff]
    %v276 = vld [vmem:[#allocation3 + $0x5c0] sm:$0xff]
    %v277 = vld [vmem:[#allocation3 + $0x5c8] sm:$0xff]
    %v278 = vld [vmem:[#allocation3 + $0x5d0] sm:$0xff]
    %v279 = vld [vmem:[#allocation3 + $0x5d8] sm:$0xff]
    %v280 = vld [vmem:[#allocation3 + $0x5e0] sm:$0xff]
    %v281 = vld [vmem:[#allocation3 + $0x5e8] sm:$0xff]
    %v282 = vld [vmem:[#allocation3 + $0x5f0] sm:$0xff]
    %v283 = vld [vmem:[#allocation3 + $0x5f8] sm:$0xff]
    %v284 = vld [vmem:[#allocation3 + $0x600] sm:$0xff]
    %v285 = vld [vmem:[#allocation3 + $0x608] sm:$0xff]
    %v286 = vld [vmem:[#allocation3 + $0x610] sm:$0xff]
    %v287 = vld [vmem:[#allocation3 + $0x618] sm:$0xff]
    %v288 = vld [vmem:[#allocation3 + $0x620] sm:$0xff]
    %v289 = vld [vmem:[#allocation3 + $0x628] sm:$0xff]
    %v290 = vld [vmem:[#allocation3 + $0x630] sm:$0xff]
    %v291 = vld [vmem:[#allocation3 + $0x638] sm:$0xff]
    %v292 = vld [vmem:[#allocation3 + $0x640] sm:$0xff]
    %v293 = vld [vmem:[#allocation3 + $0x648] sm:$0xff]
    %v294 = vld [vmem:[#allocation3 + $0x650] sm:$0xff]
    %v295 = vld [vmem:[#allocation3 + $0x658] sm:$0xff]
    %v296 = vld [vmem:[#allocation3 + $0x660] sm:$0xff]
    %v297 = vld [vmem:[#allocation3 + $0x668] sm:$0xff]
    %v298 = vld [vmem:[#allocation3 + $0x670] sm:$0xff]
    %v299 = vld [vmem:[#allocation3 + $0x678] sm:$0xff]
    %v300 = vld [vmem:[#allocation3 + $0x680] sm:$0xff]
    %v301 = vld [vmem:[#allocation3 + $0x688] sm:$0xff]
    %v302 = vld [vmem:[#allocation3 + $0x690] sm:$0xff]
    %v303 = vld [vmem:[#allocation3 + $0x698] sm:$0xff]
    %v304 = vld [vmem:[#allocation3 + $0x6a0] sm:$0xff]
    %v305 = vld [vmem:[#allocation3 + $0x6a8] sm:$0xff]
    %v306 = vld [vmem:[#allocation3 + $0x6b0] sm:$0xff]
    %v307 = vld [vmem:[#allocation3 + $0x6b8] sm:$0xff]
    %v308 = vld [vmem:[#allocation3 + $0x6c0] sm:$0xff]
    %v309 = vld [vmem:[#allocation3 + $0x6c8] sm:$0xff]
    %v310 = vld [vmem:[#allocation3 + $0x6d0] sm:$0xff]
    %v311 = vld [vmem:[#allocation3 + $0x6d8] sm:$0xff]
    %v312 = vld [vmem:[#allocation3 + $0x6e0] sm:$0xff]
    %v313 = vld [vmem:[#allocation3 + $0x6e8] sm:$0xff]
    %v314 = vld [vmem:[#allocation3 + $0x6f0] sm:$0xff]
    %v315 = vld [vmem:[#allocation3 + $0x6f8] sm:$0xff]
    %v316 = vld [vmem:[#allocation3 + $0x700] sm:$0xff]
    %v317 = vld [vmem:[#allocation3 + $0x708] sm:$0xff]
    %v318 = vld [vmem:[#allocation3 + $0x710] sm:$0xff]
    %v319 = vld [vmem:[#allocation3 + $0x718] sm:$0xff]
    %v320 = vld [vmem:[#allocation3 + $0x720] sm:$0xff]
    %v321 = vld [vmem:[#allocation3 + $0x728] sm:$0xff]
    %v322 = vld [vmem:[#allocation3 + $0x730] sm:$0xff]
    %v323 = vld [vmem:[#allocation3 + $0x738] sm:$0xff]
    %v324 = vld [vmem:[#allocation3 + $0x740] sm:$0xff]
    %v325 = vld [vmem:[#allocation3 + $0x748] sm:$0xff]
    %v326 = vld [vmem:[#allocation3 + $0x750] sm:$0xff]
    %v327 = vld [vmem:[#allocation3 + $0x758] sm:$0xff]
    %v328 = vld [vmem:[#allocation3 + $0x760] sm:$0xff]
    %v329 = vld [vmem:[#allocation3 + $0x768] sm:$0xff]
    %v330 = vld [vmem:[#allocation3 + $0x770] sm:$0xff]
    %v331 = vld [vmem:[#allocation3 + $0x778] sm:$0xff]
    %v332 = vld [vmem:[#allocation3 + $0x780] sm:$0xff]
    %v333 = vld [vmem:[#allocation3 + $0x788] sm:$0xff]
    %v334 = vld [vmem:[#allocation3 + $0x790] sm:$0xff]
    %v335 = vld [vmem:[#allocation3 + $0x798] sm:$0xff]
    %v336 = vld [vmem:[#allocation3 + $0x7a0] sm:$0xff]
    %v337 = vld [vmem:[#allocation3 + $0x7a8] sm:$0xff]
    %v338 = vld [vmem:[#allocation3 + $0x7b0] sm:$0xff]
    %v339 = vld [vmem:[#allocation3 + $0x7b8] sm:$0xff]
    %v340 = vld [vmem:[#allocation3 + $0x7c0] sm:$0xff]
    %v341 = vld [vmem:[#allocation3 + $0x7c8] sm:$0xff]
    %v342 = vld [vmem:[#allocation3 + $0x7d0] sm:$0xff]
    %v343 = vld [vmem:[#allocation3 + $0x7d8] sm:$0xff]
    %v344 = vld [vmem:[#allocation3 + $0x7e0] sm:$0xff]
    %v345 = vld [vmem:[#allocation3 + $0x7e8] sm:$0xff]
    %v346 = vld [vmem:[#allocation3 + $0x7f0] sm:$0xff]
    %v347 = vld [vmem:[#allocation3 + $0x7f8] sm:$0xff]
    %v348 = vld [vmem:[#allocation3 + $0x800] sm:$0xff]
    %v349 = vld [vmem:[#allocation3 + $0x808] sm:$0xff]
    %v350 = vld [vmem:[#allocation3 + $0x810] sm:$0xff]
    %v351 = vld [vmem:[#allocation3 + $0x818] sm:$0xff]
    %v352 = vld [vmem:[#allocation3 + $0x820] sm:$0xff]
    %v353 = vld [vmem:[#allocation3 + $0x828] sm:$0xff]
    %v354 = vld [vmem:[#allocation3 + $0x830] sm:$0xff]
    %v355 = vld [vmem:[#allocation3 + $0x838] sm:$0xff]
    %v356 = vld [vmem:[#allocation3 + $0x840] sm:$0xff]
    %v357 = vld [vmem:[#allocation3 + $0x848] sm:$0xff]
    %v358 = vld [vmem:[#allocation3 + $0x850] sm:$0xff]
    %v359 = vld [vmem:[#allocation3 + $0x858] sm:$0xff]
    %v360 = vld [vmem:[#allocation3 + $0x860] sm:$0xff]
    %v361 = vld [vmem:[#allocation3 + $0x868] sm:$0xff]
    %v362 = vld [vmem:[#allocation3 + $0x870] sm:$0xff]
    %v363 = vld [vmem:[#allocation3 + $0x878] sm:$0xff]
    %v364 = vld [vmem:[#allocation3 + $0x880] sm:$0xff]
    %v365 = vld [vmem:[#allocation3 + $0x888] sm:$0xff]
    %v366 = vld [vmem:[#allocation3 + $0x890] sm:$0xff]
    %v367 = vld [vmem:[#allocation3 + $0x898] sm:$0xff]
    %v368 = vld [vmem:[#allocation3 + $0x8a0] sm:$0xff]
    %v369 = vld [vmem:[#allocation3 + $0x8a8] sm:$0xff]
    %v370 = vld [vmem:[#allocation3 + $0x8b0] sm:$0xff]
    %v371 = vld [vmem:[#allocation3 + $0x8b8] sm:$0xff]
    %v372 = vld [vmem:[#allocation3 + $0x8c0] sm:$0xff]
    %v373 = vld [vmem:[#allocation3 + $0x8c8] sm:$0xff]
    %v374 = vld [vmem:[#allocation3 + $0x8d0] sm:$0xff]
    %v375 = vld [vmem:[#allocation3 + $0x8d8] sm:$0xff]
    %v376 = vld [vmem:[#allocation3 + $0x8e0] sm:$0xff]
    %v377 = vld [vmem:[#allocation3 + $0x8e8] sm:$0xff]
    %v378 = vld [vmem:[#allocation3 + $0x8f0] sm:$0xff]
    %v379 = vld [vmem:[#allocation3 + $0x8f8] sm:$0xff]
    %v380 = vld [vmem:[#allocation3 + $0x900] sm:$0xff]
    %v381 = vld [vmem:[#allocation3 + $0x908] sm:$0xff]
    %v382 = vld [vmem:[#allocation3 + $0x910] sm:$0xff]
    %v383 = vld [vmem:[#allocation3 + $0x918] sm:$0xff]
    %v384 = vld [vmem:[#allocation3 + $0x920] sm:$0xff]
    %v385 = vld [vmem:[#allocation3 + $0x928] sm:$0xff]
    %v386 = vld [vmem:[#allocation3 + $0x930] sm:$0xff]
    %v387 = vld [vmem:[#allocation3 + $0x938] sm:$0xff]
    %v388 = vld [vmem:[#allocation3 + $0x940] sm:$0xff]
    %v389 = vld [vmem:[#allocation3 + $0x948] sm:$0xff]
    %v390 = vld [vmem:[#allocation3 + $0x950] sm:$0xff]
    %v391 = vld [vmem:[#allocation3 + $0x958] sm:$0xff]
    %v392 = vld [vmem:[#allocation3 + $0x960] sm:$0xff]
    %v393 = vld [vmem:[#allocation3 + $0x968] sm:$0xff]
    %v394 = vld [vmem:[#allocation3 + $0x970] sm:$0xff]
    %v395 = vld [vmem:[#allocation3 + $0x978] sm:$0xff]
    %v396 = vld [vmem:[#allocation3 + $0x980] sm:$0xff]
    %v397 = vld [vmem:[#allocation3 + $0x988] sm:$0xff]
    %v398 = vld [vmem:[#allocation3 + $0x990] sm:$0xff]
    %v399 = vld [vmem:[#allocation3 + $0x998] sm:$0xff]
    %v400 = vld [vmem:[#allocation3 + $0x9a0] sm:$0xff]
    %v401 = vld [vmem:[#allocation3 + $0x9a8] sm:$0xff]
    %v402 = vld [vmem:[#allocation3 + $0x9b0] sm:$0xff]
    %v403 = vld [vmem:[#allocation3 + $0x9b8] sm:$0xff]
    %v404 = vld [vmem:[#allocation3 + $0x9c0] sm:$0xff]
    %v405 = vld [vmem:[#allocation3 + $0x9c8] sm:$0xff]
    %v406 = vld [vmem:[#allocation3 + $0x9d0] sm:$0xff]
    %v407 = vld [vmem:[#allocation3 + $0x9d8] sm:$0xff]
    %v408 = vld [vmem:[#allocation3 + $0x9e0] sm:$0xff]
    %v409 = vld [vmem:[#allocation3 + $0x9e8] sm:$0xff]
    %v410 = vld [vmem:[#allocation3 + $0x9f0] sm:$0xff]
    %v411 = vld [vmem:[#allocation3 + $0x9f8] sm:$0xff]
    %v412 = vld [vmem:[#allocation3 + $0xa00] sm:$0xff]
    %v413 = vld [vmem:[#allocation3 + $0xa08] sm:$0xff]
    %v414 = vld [vmem:[#allocation3 + $0xa10] sm:$0xff]
    %v415 = vld [vmem:[#allocation3 + $0xa18] sm:$0xff]
    %v416 = vld [vmem:[#allocation3 + $0xa20] sm:$0xff]
    %v417 = vld [vmem:[#allocation3 + $0xa28] sm:$0xff]
    %v418 = vld [vmem:[#allocation3 + $0xa30] sm:$0xff]
    %v419 = vld [vmem:[#allocation3 + $0xa38] sm:$0xff]
    %v420 = vld [vmem:[#allocation3 + $0xa40] sm:$0xff]
    %v421 = vld [vmem:[#allocation3 + $0xa48] sm:$0xff]
    %v422 = vld [vmem:[#allocation3 + $0xa50] sm:$0xff]
    %v423 = vld [vmem:[#allocation3 + $0xa58] sm:$0xff]
    %v424 = vld [vmem:[#allocation3 + $0xa60] sm:$0xff]
    %v425 = vld [vmem:[#allocation3 + $0xa68] sm:$0xff]
    %v426 = vld [vmem:[#allocation3 + $0xa70] sm:$0xff]
    %v427 = vld [vmem:[#allocation3 + $0xa78] sm:$0xff]
    %v428 = vld [vmem:[#allocation3 + $0xa80] sm:$0xff]
    %v429 = vld [vmem:[#allocation3 + $0xa88] sm:$0xff]
    %v430 = vld [vmem:[#allocation3 + $0xa90] sm:$0xff]
    %v431 = vld [vmem:[#allocation3 + $0xa98] sm:$0xff]
    %v432 = vld [vmem:[#allocation3 + $0xaa0] sm:$0xff]
    %v433 = vld [vmem:[#allocation3 + $0xaa8] sm:$0xff]
    %v434 = vld [vmem:[#allocation3 + $0xab0] sm:$0xff]
    %v435 = vld [vmem:[#allocation3 + $0xab8] sm:$0xff]
    %v436 = vld [vmem:[#allocation3 + $0xac0] sm:$0xff]
    %v437 = vld [vmem:[#allocation3 + $0xac8] sm:$0xff]
    %v438 = vld [vmem:[#allocation3 + $0xad0] sm:$0xff]
    %v439 = vld [vmem:[#allocation3 + $0xad8] sm:$0xff]
    %v440 = vld [vmem:[#allocation3 + $0xae0] sm:$0xff]
    %v441 = vld [vmem:[#allocation3 + $0xae8] sm:$0xff]
    %v442 = vld [vmem:[#allocation3 + $0xaf0] sm:$0xff]
    %v443 = vld [vmem:[#allocation3 + $0xaf8] sm:$0xff]
    %v444 = vld [vmem:[#allocation3 + $0xb00] sm:$0xff]
    %v445 = vld [vmem:[#allocation3 + $0xb08] sm:$0xff]
    %v446 = vld [vmem:[#allocation3 + $0xb10] sm:$0xff]
    %v447 = vld [vmem:[#allocation3 + $0xb18] sm:$0xff]
    %v448 = vld [vmem:[#allocation3 + $0xb20] sm:$0xff]
    %v449 = vld [vmem:[#allocation3 + $0xb28] sm:$0xff]
    %v450 = vld [vmem:[#allocation3 + $0xb30] sm:$0xff]
    %v451 = vld [vmem:[#allocation3 + $0xb38] sm:$0xff]
    %v452 = vld [vmem:[#allocation3 + $0xb40] sm:$0xff]
    %v453 = vld [vmem:[#allocation3 + $0xb48] sm:$0xff]
    %v454 = vld [vmem:[#allocation3 + $0xb50] sm:$0xff]
    %v455 = vld [vmem:[#allocation3 + $0xb58] sm:$0xff]
    %v456 = vld [vmem:[#allocation3 + $0xb60] sm:$0xff]
    %v457 = vld [vmem:[#allocation3 + $0xb68] sm:$0xff]
    %v458 = vld [vmem:[#allocation3 + $0xb70] sm:$0xff]
    %v459 = vld [vmem:[#allocation3 + $0xb78] sm:$0xff]
    %v460 = vld [vmem:[#allocation3 + $0xb80] sm:$0xff]
    %v461 = vld [vmem:[#allocation3 + $0xb88] sm:$0xff]
    %v462 = vld [vmem:[#allocation3 + $0xb90] sm:$0xff]
    %v463 = vld [vmem:[#allocation3 + $0xb98] sm:$0xff]
    %v464 = vld [vmem:[#allocation3 + $0xba0] sm:$0xff]
    %v465 = vld [vmem:[#allocation3 + $0xba8] sm:$0xff]
    %v466 = vld [vmem:[#allocation3 + $0xbb0] sm:$0xff]
    %v467 = vld [vmem:[#allocation3 + $0xbb8] sm:$0xff]
    %v468 = vld [vmem:[#allocation3 + $0xbc0] sm:$0xff]
    %v469 = vld [vmem:[#allocation3 + $0xbc8] sm:$0xff]
    %v470 = vld [vmem:[#allocation3 + $0xbd0] sm:$0xff]
    %v471 = vld [vmem:[#allocation3 + $0xbd8] sm:$0xff]
    %v472 = vld [vmem:[#allocation3 + $0xbe0] sm:$0xff]
    %v473 = vld [vmem:[#allocation3 + $0xbe8] sm:$0xff]
    %v474 = vld [vmem:[#allocation3 + $0xbf0] sm:$0xff]
    %v475 = vld [vmem:[#allocation3 + $0xbf8] sm:$0xff]
    %v476 = vld [vmem:[#allocation3 + $0xc00] sm:$0xff]
    %v477 = vld [vmem:[#allocation3 + $0xc08] sm:$0xff]
    %v478 = vld [vmem:[#allocation3 + $0xc10] sm:$0xff]
    %v479 = vld [vmem:[#allocation3 + $0xc18] sm:$0xff]
    %v480 = vld [vmem:[#allocation3 + $0xc20] sm:$0xff]
    %v481 = vld [vmem:[#allocation3 + $0xc28] sm:$0xff]
    %v482 = vld [vmem:[#allocation3 + $0xc30] sm:$0xff]
    %v483 = vld [vmem:[#allocation3 + $0xc38] sm:$0xff]
    %v484 = vld [vmem:[#allocation3 + $0xc40] sm:$0xff]
    %v485 = vld [vmem:[#allocation3 + $0xc48] sm:$0xff]
    %v486 = vld [vmem:[#allocation3 + $0xc50] sm:$0xff]
    %v487 = vld [vmem:[#allocation3 + $0xc58] sm:$0xff]
    %v488 = vld [vmem:[#allocation3 + $0xc60] sm:$0xff]
    %v489 = vld [vmem:[#allocation3 + $0xc68] sm:$0xff]
    %v490 = vld [vmem:[#allocation3 + $0xc70] sm:$0xff]
    %v491 = vld [vmem:[#allocation3 + $0xc78] sm:$0xff]
    %v492 = vld [vmem:[#allocation3 + $0xc80] sm:$0xff]
    %v493 = vld [vmem:[#allocation3 + $0xc88] sm:$0xff]
    %v494 = vld [vmem:[#allocation3 + $0xc90] sm:$0xff]
    %v495 = vld [vmem:[#allocation3 + $0xc98] sm:$0xff]
    %v496 = vld [vmem:[#allocation3 + $0xca0] sm:$0xff]
    %v497 = vld [vmem:[#allocation3 + $0xca8] sm:$0xff]
    %v498 = vld [vmem:[#allocation3 + $0xcb0] sm:$0xff]
    %v499 = vld [vmem:[#allocation3 + $0xcb8] sm:$0xff]
    %v500 = vld [vmem:[#allocation3 + $0xcc0] sm:$0xff]
    %v501 = vld [vmem:[#allocation3 + $0xcc8] sm:$0xff]
    %v502 = vld [vmem:[#allocation3 + $0xcd0] sm:$0xff]
    %v503 = vld [vmem:[#allocation3 + $0xcd8] sm:$0xff]
    %v504 = vld [vmem:[#allocation3 + $0xce0] sm:$0xff]
    %v505 = vld [vmem:[#allocation3 + $0xce8] sm:$0xff]
    %v506 = vld [vmem:[#allocation3 + $0xcf0] sm:$0xff]
    %v507 = vld [vmem:[#allocation3 + $0xcf8] sm:$0xff]
    %v508 = vld [vmem:[#allocation3 + $0xd00] sm:$0xff]
    %v509 = vld [vmem:[#allocation3 + $0xd08] sm:$0xff]
    %v510 = vld [vmem:[#allocation3 + $0xd10] sm:$0xff]
    %v511 = vld [vmem:[#allocation3 + $0xd18] sm:$0xff]
    %v512 = vld [vmem:[#allocation3 + $0xd20] sm:$0xff]
    %v513 = vld [vmem:[#allocation3 + $0xd28] sm:$0xff]
    %v514 = vld [vmem:[#allocation3 + $0xd30] sm:$0xff]
    %v515 = vld [vmem:[#allocation3 + $0xd38] sm:$0xff]
    %v516 = vld [vmem:[#allocation3 + $0xd40] sm:$0xff]
    %v517 = vld [vmem:[#allocation3 + $0xd48] sm:$0xff]
    %v518 = vld [vmem:[#allocation3 + $0xd50] sm:$0xff]
    %v519 = vld [vmem:[#allocation3 + $0xd58] sm:$0xff]
    %v520 = vld [vmem:[#allocation3 + $0xd60] sm:$0xff]
    %v521 = vld [vmem:[#allocation3 + $0xd68] sm:$0xff]
    %v522 = vld [vmem:[#allocation3 + $0xd70] sm:$0xff]
    %v523 = vld [vmem:[#allocation3 + $0xd78] sm:$0xff]
    %v524 = vld [vmem:[#allocation3 + $0xd80] sm:$0xff]
    %v525 = vld [vmem:[#allocation3 + $0xd88] sm:$0xff]
    %v526 = vld [vmem:[#allocation3 + $0xd90] sm:$0xff]
    %v527 = vld [vmem:[#allocation3 + $0xd98] sm:$0xff]
    %v528 = vld [vmem:[#allocation3 + $0xda0] sm:$0xff]
    %v529 = vld [vmem:[#allocation3 + $0xda8] sm:$0xff]
    %v530 = vld [vmem:[#allocation3 + $0xdb0] sm:$0xff]
    %v531 = vld [vmem:[#allocation3 + $0xdb8] sm:$0xff]
    %v532 = vld [vmem:[#allocation3 + $0xdc0] sm:$0xff]
    %v533 = vld [vmem:[#allocation3 + $0xdc8] sm:$0xff]
    %v534 = vld [vmem:[#allocation3 + $0xdd0] sm:$0xff]
    %v535 = vld [vmem:[#allocation3 + $0xdd8] sm:$0xff]
    %v536 = vld [vmem:[#allocation3 + $0xde0] sm:$0xff]
    %v537 = vld [vmem:[#allocation3 + $0xde8] sm:$0xff]
    %v538 = vld [vmem:[#allocation3 + $0xdf0] sm:$0xff]
    %v539 = vld [vmem:[#allocation3 + $0xdf8] sm:$0xff]
    %v540 = vld [vmem:[#allocation3 + $0xe00] sm:$0xff]
    %v541 = vld [vmem:[#allocation3 + $0xe08] sm:$0xff]
    %v542 = vld [vmem:[#allocation3 + $0xe10] sm:$0xff]
    %v543 = vld [vmem:[#allocation3 + $0xe18] sm:$0xff]
    %v544 = vld [vmem:[#allocation3 + $0xe20] sm:$0xff]
    %v545 = vld [vmem:[#allocation3 + $0xe28] sm:$0xff]
    %v546 = vld [vmem:[#allocation3 + $0xe30] sm:$0xff]
    %v547 = vld [vmem:[#allocation3 + $0xe38] sm:$0xff]
    %v548 = vld [vmem:[#allocation3 + $0xe40] sm:$0xff]
    %v549 = vld [vmem:[#allocation3 + $0xe48] sm:$0xff]
    %v550 = vld [vmem:[#allocation3 + $0xe50] sm:$0xff]
    %v551 = vld [vmem:[#allocation3 + $0xe58] sm:$0xff]
    %v552 = vld [vmem:[#allocation3 + $0xe60] sm:$0xff]
    %v553 = vld [vmem:[#allocation3 + $0xe68] sm:$0xff]
    %v554 = vld [vmem:[#allocation3 + $0xe70] sm:$0xff]
    %v555 = vld [vmem:[#allocation3 + $0xe78] sm:$0xff]
    %v556 = vld [vmem:[#allocation3 + $0xe80] sm:$0xff]
    %v557 = vld [vmem:[#allocation3 + $0xe88] sm:$0xff]
    %v558 = vld [vmem:[#allocation3 + $0xe90] sm:$0xff]
    %v559 = vld [vmem:[#allocation3 + $0xe98] sm:$0xff]
    %v560 = vld [vmem:[#allocation3 + $0xea0] sm:$0xff]
    %v561 = vld [vmem:[#allocation3 + $0xea8] sm:$0xff]
    %v562 = vld [vmem:[#allocation3 + $0xeb0] sm:$0xff]
    %v563 = vld [vmem:[#allocation3 + $0xeb8] sm:$0xff]
    %v564 = vld [vmem:[#allocation3 + $0xec0] sm:$0xff]
    %v565 = vld [vmem:[#allocation3 + $0xec8] sm:$0xff]
    %v566 = vld [vmem:[#allocation3 + $0xed0] sm:$0xff]
    %v567 = vld [vmem:[#allocation3 + $0xed8] sm:$0xff]
    %v568 = vld [vmem:[#allocation3 + $0xee0] sm:$0xff]
    %v569 = vld [vmem:[#allocation3 + $0xee8] sm:$0xff]
    %v570 = vld [vmem:[#allocation3 + $0xef0] sm:$0xff]
    %v571 = vld [vmem:[#allocation3 + $0xef8] sm:$0xff]
    %v572 = vld [vmem:[#allocation3 + $0xf00] sm:$0xff]
    %v573 = vld [vmem:[#allocation3 + $0xf08] sm:$0xff]
    %v574 = vld [vmem:[#allocation3 + $0xf10] sm:$0xff]
    %v575 = vld [vmem:[#allocation3 + $0xf18] sm:$0xff]
    %v576 = vld [vmem:[#allocation3 + $0xf20] sm:$0xff]
    %v577 = vld [vmem:[#allocation3 + $0xf28] sm:$0xff]
    %v578 = vld [vmem:[#allocation3 + $0xf30] sm:$0xff]
    %v579 = vld [vmem:[#allocation3 + $0xf38] sm:$0xff]
    %v580 = vld [vmem:[#allocation3 + $0xf40] sm:$0xff]
    %v581 = vld [vmem:[#allocation3 + $0xf48] sm:$0xff]
    %v582 = vld [vmem:[#allocation3 + $0xf50] sm:$0xff]
    %v583 = vld [vmem:[#allocation3 + $0xf58] sm:$0xff]
    %v584 = vld [vmem:[#allocation3 + $0xf60] sm:$0xff]
    %v585 = vld [vmem:[#allocation3 + $0xf68] sm:$0xff]
    %v586 = vld [vmem:[#allocation3 + $0xf70] sm:$0xff]
    %v587 = vld [vmem:[#allocation3 + $0xf78] sm:$0xff]
    %v588 = vld [vmem:[#allocation3 + $0xf80] sm:$0xff]
    %v589 = vld [vmem:[#allocation3 + $0xf88] sm:$0xff]
    %v590 = vld [vmem:[#allocation3 + $0xf90] sm:$0xff]
    %v591 = vld [vmem:[#allocation3 + $0xf98] sm:$0xff]
    %v592 = vld [vmem:[#allocation3 + $0xfa0] sm:$0xff]
    %v593 = vld [vmem:[#allocation3 + $0xfa8] sm:$0xff]
    %v594 = vld [vmem:[#allocation3 + $0xfb0] sm:$0xff]
    %v595 = vld [vmem:[#allocation3 + $0xfb8] sm:$0xff]
    %v596 = vld [vmem:[#allocation3 + $0xfc0] sm:$0xff]
    %v597 = vld [vmem:[#allocation3 + $0xfc8] sm:$0xff]
    %v598 = vld [vmem:[#allocation3 + $0xfd0] sm:$0xff]
    %v599 = vld [vmem:[#allocation3 + $0xfd8] sm:$0xff]
    %v600 = vld [vmem:[#allocation3 + $0xfe0] sm:$0xff]
    %v601 = vld [vmem:[#allocation3 + $0xfe8] sm:$0xff]
    %v602 = vld [vmem:[#allocation3 + $0xff0] sm:$0xff]
    %v603 = vld [vmem:[#allocation3 + $0xff8] sm:$0xff]
    %v604 = vld [vmem:[#allocation3 + $0x1000] sm:$0xff]
    %v605 = vld [vmem:[#allocation3 + $0x1008] sm:$0xff]
    %v606 = vld [vmem:[#allocation3 + $0x1010] sm:$0xff]
    %v607 = vld [vmem:[#allocation3 + $0x1018] sm:$0xff]
    %v608 = vld [vmem:[#allocation3 + $0x1020] sm:$0xff]
    %v609 = vld [vmem:[#allocation3 + $0x1028] sm:$0xff]
    %v610 = vld [vmem:[#allocation3 + $0x1030] sm:$0xff]
    %v611 = vld [vmem:[#allocation3 + $0x1038] sm:$0xff]
    %v612 = vld [vmem:[#allocation3 + $0x1040] sm:$0xff]
    %v613 = vld [vmem:[#allocation3 + $0x1048] sm:$0xff]
    %v614 = vld [vmem:[#allocation3 + $0x1050] sm:$0xff]
    %v615 = vld [vmem:[#allocation3 + $0x1058] sm:$0xff]
    %v616 = vld [vmem:[#allocation3 + $0x1060] sm:$0xff]
    %v617 = vld [vmem:[#allocation3 + $0x1068] sm:$0xff]
    %v618 = vld [vmem:[#allocation3 + $0x1070] sm:$0xff]
    %v619 = vld [vmem:[#allocation3 + $0x1078] sm:$0xff]
    %v620 = vld [vmem:[#allocation3 + $0x1080] sm:$0xff]
    %v621 = vld [vmem:[#allocation3 + $0x1088] sm:$0xff]
    %v622 = vld [vmem:[#allocation3 + $0x1090] sm:$0xff]
    %v623 = vld [vmem:[#allocation3 + $0x1098] sm:$0xff]
    %v624 = vld [vmem:[#allocation3 + $0x10a0] sm:$0xff]
    %v625 = vld [vmem:[#allocation3 + $0x10a8] sm:$0xff]
    %v626 = vld [vmem:[#allocation3 + $0x10b0] sm:$0xff]
    %v627 = vld [vmem:[#allocation3 + $0x10b8] sm:$0xff]
    %v628 = vld [vmem:[#allocation3 + $0x10c0] sm:$0xff]
    %v629 = vld [vmem:[#allocation3 + $0x10c8] sm:$0xff]
    %v630 = vld [vmem:[#allocation3 + $0x10d0] sm:$0xff]
    %v631 = vld [vmem:[#allocation3 + $0x10d8] sm:$0xff]
    %v632 = vld [vmem:[#allocation3 + $0x10e0] sm:$0xff]
    %v633 = vld [vmem:[#allocation3 + $0x10e8] sm:$0xff]
    %v634 = vld [vmem:[#allocation3 + $0x10f0] sm:$0xff]
    %v635 = vld [vmem:[#allocation3 + $0x10f8] sm:$0xff]
    %v636 = vld [vmem:[#allocation3 + $0x1100] sm:$0xff]
    %v637 = vld [vmem:[#allocation3 + $0x1108] sm:$0xff]
    %v638 = vld [vmem:[#allocation3 + $0x1110] sm:$0xff]
    %v639 = vld [vmem:[#allocation3 + $0x1118] sm:$0xff]
    %v640 = vld [vmem:[#allocation3 + $0x1120] sm:$0xff]
    %v641 = vld [vmem:[#allocation3 + $0x1128] sm:$0xff]
    %v642 = vld [vmem:[#allocation3 + $0x1130] sm:$0xff]
    %v643 = vld [vmem:[#allocation3 + $0x1138] sm:$0xff]
    %v644 = vld [vmem:[#allocation3 + $0x1140] sm:$0xff]
    %v645 = vld [vmem:[#allocation3 + $0x1148] sm:$0xff]
    %v646 = vld [vmem:[#allocation3 + $0x1150] sm:$0xff]
    %v647 = vld [vmem:[#allocation3 + $0x1158] sm:$0xff]
    %v648 = vld [vmem:[#allocation3 + $0x1160] sm:$0xff]
    %v649 = vld [vmem:[#allocation3 + $0x1168] sm:$0xff]
    %v650 = vld [vmem:[#allocation3 + $0x1170] sm:$0xff]
    %v651 = vld [vmem:[#allocation3 + $0x1178] sm:$0xff]
    %v652 = vld [vmem:[#allocation3 + $0x1180] sm:$0xff]
    %v653 = vld [vmem:[#allocation3 + $0x1188] sm:$0xff]
    %v654 = vld [vmem:[#allocation3 + $0x1190] sm:$0xff]
    %v655 = vld [vmem:[#allocation3 + $0x1198] sm:$0xff]
    %v656 = vld [vmem:[#allocation3 + $0x11a0] sm:$0xff]
    %v657 = vld [vmem:[#allocation3 + $0x11a8] sm:$0xff]
    %v658 = vld [vmem:[#allocation3 + $0x11b0] sm:$0xff]
    %v659 = vld [vmem:[#allocation3 + $0x11b8] sm:$0xff]
    %v660 = vld [vmem:[#allocation3 + $0x11c0] sm:$0xff]
    %v661 = vld [vmem:[#allocation3 + $0x11c8] sm:$0xff]
    %v662 = vld [vmem:[#allocation3 + $0x11d0] sm:$0xff]
    %v663 = vld [vmem:[#allocation3 + $0x11d8] sm:$0xff]
    %v664 = vld [vmem:[#allocation3 + $0x11e0] sm:$0xff]
    %v665 = vld [vmem:[#allocation3 + $0x11e8] sm:$0xff]
    %v666 = vld [vmem:[#allocation3 + $0x11f0] sm:$0xff]
    %v667 = vld [vmem:[#allocation3 + $0x11f8] sm:$0xff]
    %v668 = vld [vmem:[#allocation3 + $0x1200] sm:$0xff]
    %v669 = vld [vmem:[#allocation3 + $0x1208] sm:$0xff]
    %v670 = vld [vmem:[#allocation3 + $0x1210] sm:$0xff]
    %v671 = vld [vmem:[#allocation3 + $0x1218] sm:$0xff]
    %v672 = vld [vmem:[#allocation3 + $0x1220] sm:$0xff]
    %v673 = vld [vmem:[#allocation3 + $0x1228] sm:$0xff]
    %v674 = vld [vmem:[#allocation3 + $0x1230] sm:$0xff]
    %v675 = vld [vmem:[#allocation3 + $0x1238] sm:$0xff]
    %v676 = vld [vmem:[#allocation3 + $0x1240] sm:$0xff]
    %v677 = vld [vmem:[#allocation3 + $0x1248] sm:$0xff]
    %v678 = vld [vmem:[#allocation3 + $0x1250] sm:$0xff]
    %v679 = vld [vmem:[#allocation3 + $0x1258] sm:$0xff]
    %v680 = vld [vmem:[#allocation3 + $0x1260] sm:$0xff]
    %v681 = vld [vmem:[#allocation3 + $0x1268] sm:$0xff]
    %v682 = vld [vmem:[#allocation3 + $0x1270] sm:$0xff]
    %v683 = vld [vmem:[#allocation3 + $0x1278] sm:$0xff]
    %v684 = vld [vmem:[#allocation3 + $0x1280] sm:$0xff]
    %v685 = vld [vmem:[#allocation3 + $0x1288] sm:$0xff]
    %v686 = vld [vmem:[#allocation3 + $0x1290] sm:$0xff]
    %v687 = vld [vmem:[#allocation3 + $0x1298] sm:$0xff]
    %v688 = vld [vmem:[#allocation3 + $0x12a0] sm:$0xff]
    %v689 = vld [vmem:[#allocation3 + $0x12a8] sm:$0xff]
    %v690 = vld [vmem:[#allocation3 + $0x12b0] sm:$0xff]
    %v691 = vld [vmem:[#allocation3 + $0x12b8] sm:$0xff]
    %v692 = vld [vmem:[#allocation3 + $0x12c0] sm:$0xff]
    %v693 = vld [vmem:[#allocation3 + $0x12c8] sm:$0xff]
    %v694 = vld [vmem:[#allocation3 + $0x12d0] sm:$0xff]
    %v695 = vld [vmem:[#allocation3 + $0x12d8] sm:$0xff]
    %v696 = vld [vmem:[#allocation3 + $0x12e0] sm:$0xff]
    %v697 = vld [vmem:[#allocation3 + $0x12e8] sm:$0xff]
    %v698 = vld [vmem:[#allocation3 + $0x12f0] sm:$0xff]
    %v699 = vld [vmem:[#allocation3 + $0x12f8] sm:$0xff]
    %v700 = vld [vmem:[#allocation3 + $0x1300] sm:$0xff]
    %v701 = vld [vmem:[#allocation3 + $0x1308] sm:$0xff]
    %v702 = vld [vmem:[#allocation3 + $0x1310] sm:$0xff]
    %v703 = vld [vmem:[#allocation3 + $0x1318] sm:$0xff]
    %v704 = vld [vmem:[#allocation3 + $0x1320] sm:$0xff]
    %v705 = vld [vmem:[#allocation3 + $0x1328] sm:$0xff]
    %v706 = vld [vmem:[#allocation3 + $0x1330] sm:$0xff]
    %v707 = vld [vmem:[#allocation3 + $0x1338] sm:$0xff]
    %v708 = vld [vmem:[#allocation3 + $0x1340] sm:$0xff]
    %v709 = vld [vmem:[#allocation3 + $0x1348] sm:$0xff]
    %v710 = vld [vmem:[#allocation3 + $0x1350] sm:$0xff]
    %v711 = vld [vmem:[#allocation3 + $0x1358] sm:$0xff]
    %v712 = vld [vmem:[#allocation3 + $0x1360] sm:$0xff]
    %v713 = vld [vmem:[#allocation3 + $0x1368] sm:$0xff]
    %v714 = vld [vmem:[#allocation3 + $0x1370] sm:$0xff]
    %v715 = vld [vmem:[#allocation3 + $0x1378] sm:$0xff]
    %v716 = vld [vmem:[#allocation3 + $0x1380] sm:$0xff]
    %v717 = vld [vmem:[#allocation3 + $0x1388] sm:$0xff]
    %v718 = vld [vmem:[#allocation3 + $0x1390] sm:$0xff]
    %v719 = vld [vmem:[#allocation3 + $0x1398] sm:$0xff]
    %v720 = vld [vmem:[#allocation3 + $0x13a0] sm:$0xff]
    %v721 = vld [vmem:[#allocation3 + $0x13a8] sm:$0xff]
    %v722 = vld [vmem:[#allocation3 + $0x13b0] sm:$0xff]
    %v723 = vld [vmem:[#allocation3 + $0x13b8] sm:$0xff]
    %v724 = vld [vmem:[#allocation3 + $0x13c0] sm:$0xff]
    %v725 = vld [vmem:[#allocation3 + $0x13c8] sm:$0xff]
    %v726 = vld [vmem:[#allocation3 + $0x13d0] sm:$0xff]
    %v727 = vld [vmem:[#allocation3 + $0x13d8] sm:$0xff]
    %v728 = vld [vmem:[#allocation3 + $0x13e0] sm:$0xff]
    %v729 = vld [vmem:[#allocation3 + $0x13e8] sm:$0xff]
    %v730 = vld [vmem:[#allocation3 + $0x13f0] sm:$0xff]
    %v731 = vld [vmem:[#allocation3 + $0x13f8] sm:$0xff]
    %v732 = vld [vmem:[#allocation3 + $0x1400] sm:$0xff]
    %v733 = vld [vmem:[#allocation3 + $0x1408] sm:$0xff]
    %v734 = vld [vmem:[#allocation3 + $0x1410] sm:$0xff]
    %v735 = vld [vmem:[#allocation3 + $0x1418] sm:$0xff]
    %v736 = vld [vmem:[#allocation3 + $0x1420] sm:$0xff]
    %v737 = vld [vmem:[#allocation3 + $0x1428] sm:$0xff]
    %v738 = vld [vmem:[#allocation3 + $0x1430] sm:$0xff]
    %v739 = vld [vmem:[#allocation3 + $0x1438] sm:$0xff]
    %v740 = vld [vmem:[#allocation3 + $0x1440] sm:$0xff]
    %v741 = vld [vmem:[#allocation3 + $0x1448] sm:$0xff]
    %v742 = vld [vmem:[#allocation3 + $0x1450] sm:$0xff]
    %v743 = vld [vmem:[#allocation3 + $0x1458] sm:$0xff]
    %v744 = vld [vmem:[#allocation3 + $0x1460] sm:$0xff]
    %v745 = vld [vmem:[#allocation3 + $0x1468] sm:$0xff]
    %v746 = vld [vmem:[#allocation3 + $0x1470] sm:$0xff]
    %v747 = vld [vmem:[#allocation3 + $0x1478] sm:$0xff]
    %v748 = vld [vmem:[#allocation3 + $0x1480] sm:$0xff]
    %v749 = vld [vmem:[#allocation3 + $0x1488] sm:$0xff]
    %v750 = vld [vmem:[#allocation3 + $0x1490] sm:$0xff]
    %v751 = vld [vmem:[#allocation3 + $0x1498] sm:$0xff]
    %v752 = vld [vmem:[#allocation3 + $0x14a0] sm:$0xff]
    %v753 = vld [vmem:[#allocation3 + $0x14a8] sm:$0xff]
    %v754 = vld [vmem:[#allocation3 + $0x14b0] sm:$0xff]
    %v755 = vld [vmem:[#allocation3 + $0x14b8] sm:$0xff]
    %v756 = vld [vmem:[#allocation3 + $0x14c0] sm:$0xff]
    %v757 = vld [vmem:[#allocation3 + $0x14c8] sm:$0xff]
    %v758 = vld [vmem:[#allocation3 + $0x14d0] sm:$0xff]
    %v759 = vld [vmem:[#allocation3 + $0x14d8] sm:$0xff]
    %v760 = vld [vmem:[#allocation3 + $0x14e0] sm:$0xff]
    %v761 = vld [vmem:[#allocation3 + $0x14e8] sm:$0xff]
    %v762 = vld [vmem:[#allocation3 + $0x14f0] sm:$0xff]
    %v763 = vld [vmem:[#allocation3 + $0x14f8] sm:$0xff]
    %v764 = vld [vmem:[#allocation3 + $0x1500] sm:$0xff]
    %v765 = vld [vmem:[#allocation3 + $0x1508] sm:$0xff]
    %v766 = vld [vmem:[#allocation3 + $0x1510] sm:$0xff]
    %v767 = vld [vmem:[#allocation3 + $0x1518] sm:$0xff]
    %v768 = vld [vmem:[#allocation3 + $0x1520] sm:$0xff]
    %v769 = vld [vmem:[#allocation3 + $0x1528] sm:$0xff]
    %v770 = vld [vmem:[#allocation3 + $0x1530] sm:$0xff]
    %v771 = vld [vmem:[#allocation3 + $0x1538] sm:$0xff]
    %v772 = vld [vmem:[#allocation3 + $0x1540] sm:$0xff]
    %v773 = vld [vmem:[#allocation3 + $0x1548] sm:$0xff]
    %v774 = vld [vmem:[#allocation3 + $0x1550] sm:$0xff]
    %v775 = vld [vmem:[#allocation3 + $0x1558] sm:$0xff]
    %v776 = vld [vmem:[#allocation3 + $0x1560] sm:$0xff]
    %v777 = vld [vmem:[#allocation3 + $0x1568] sm:$0xff]
    %v778 = vld [vmem:[#allocation3 + $0x1570] sm:$0xff]
    %v779 = vld [vmem:[#allocation3 + $0x1578] sm:$0xff]
    %v780 = vld [vmem:[#allocation3 + $0x1580] sm:$0xff]
    %v781 = vld [vmem:[#allocation3 + $0x1588] sm:$0xff]
    %v782 = vld [vmem:[#allocation3 + $0x1590] sm:$0xff]
    %v783 = vld [vmem:[#allocation3 + $0x1598] sm:$0xff]
    %v784 = vld [vmem:[#allocation3 + $0x15a0] sm:$0xff]
    %v785 = vld [vmem:[#allocation3 + $0x15a8] sm:$0xff]
    %v786 = vld [vmem:[#allocation3 + $0x15b0] sm:$0xff]
    %v787 = vld [vmem:[#allocation3 + $0x15b8] sm:$0xff]
    %v788 = vld [vmem:[#allocation3 + $0x15c0] sm:$0xff]
    %v789 = vld [vmem:[#allocation3 + $0x15c8] sm:$0xff]
    %v790 = vld [vmem:[#allocation3 + $0x15d0] sm:$0xff]
    %v791 = vld [vmem:[#allocation3 + $0x15d8] sm:$0xff]
    %v792 = vld [vmem:[#allocation3 + $0x15e0] sm:$0xff]
    %v793 = vld [vmem:[#allocation3 + $0x15e8] sm:$0xff]
    %v794 = vld [vmem:[#allocation3 + $0x15f0] sm:$0xff]
    %v795 = vld [vmem:[#allocation3 + $0x15f8] sm:$0xff]
    %v796 = vld [vmem:[#allocation3 + $0x1600] sm:$0xff]
    %v797 = vld [vmem:[#allocation3 + $0x1608] sm:$0xff]
    %v798 = vld [vmem:[#allocation3 + $0x1610] sm:$0xff]
    %v799 = vld [vmem:[#allocation3 + $0x1618] sm:$0xff]
    %v800 = vld [vmem:[#allocation3 + $0x1620] sm:$0xff]
    %v801 = vld [vmem:[#allocation3 + $0x1628] sm:$0xff]
    %v802 = vld [vmem:[#allocation3 + $0x1630] sm:$0xff]
    %v803 = vld [vmem:[#allocation3 + $0x1638] sm:$0xff]
    %v804 = vld [vmem:[#allocation3 + $0x1640] sm:$0xff]
    %v805 = vld [vmem:[#allocation3 + $0x1648] sm:$0xff]
    %v806 = vld [vmem:[#allocation3 + $0x1650] sm:$0xff]
    %v807 = vld [vmem:[#allocation3 + $0x1658] sm:$0xff]
    %v808 = vld [vmem:[#allocation3 + $0x1660] sm:$0xff]
    %v809 = vld [vmem:[#allocation3 + $0x1668] sm:$0xff]
    %v810 = vld [vmem:[#allocation3 + $0x1670] sm:$0xff]
    %v811 = vld [vmem:[#allocation3 + $0x1678] sm:$0xff]
    %v812 = vld [vmem:[#allocation3 + $0x1680] sm:$0xff]
    %v813 = vld [vmem:[#allocation3 + $0x1688] sm:$0xff]
    %v814 = vld [vmem:[#allocation3 + $0x1690] sm:$0xff]
    %v815 = vld [vmem:[#allocation3 + $0x1698] sm:$0xff]
    %v816 = vld [vmem:[#allocation3 + $0x16a0] sm:$0xff]
    %v817 = vld [vmem:[#allocation3 + $0x16a8] sm:$0xff]
    %v818 = vld [vmem:[#allocation3 + $0x16b0] sm:$0xff]
    %v819 = vld [vmem:[#allocation3 + $0x16b8] sm:$0xff]
    %v820 = vld [vmem:[#allocation3 + $0x16c0] sm:$0xff]
    %v821 = vld [vmem:[#allocation3 + $0x16c8] sm:$0xff]
    %v822 = vld [vmem:[#allocation3 + $0x16d0] sm:$0xff]
    %v823 = vld [vmem:[#allocation3 + $0x16d8] sm:$0xff]
    %v824 = vld [vmem:[#allocation3 + $0x16e0] sm:$0xff]
    %v825 = vld [vmem:[#allocation3 + $0x16e8] sm:$0xff]
    %v826 = vld [vmem:[#allocation3 + $0x16f0] sm:$0xff]
    %v827 = vld [vmem:[#allocation3 + $0x16f8] sm:$0xff]
    %v828 = vld [vmem:[#allocation3 + $0x1700] sm:$0xff]
    %v829 = vld [vmem:[#allocation3 + $0x1708] sm:$0xff]
    %v830 = vld [vmem:[#allocation3 + $0x1710] sm:$0xff]
    %v831 = vld [vmem:[#allocation3 + $0x1718] sm:$0xff]
    %v832 = vld [vmem:[#allocation3 + $0x1720] sm:$0xff]
    %v833 = vld [vmem:[#allocation3 + $0x1728] sm:$0xff]
    %v834 = vld [vmem:[#allocation3 + $0x1730] sm:$0xff]
    %v835 = vld [vmem:[#allocation3 + $0x1738] sm:$0xff]
    %v836 = vld [vmem:[#allocation3 + $0x1740] sm:$0xff]
    %v837 = vld [vmem:[#allocation3 + $0x1748] sm:$0xff]
    %v838 = vld [vmem:[#allocation3 + $0x1750] sm:$0xff]
    %v839 = vld [vmem:[#allocation3 + $0x1758] sm:$0xff]
    %v840 = vld [vmem:[#allocation3 + $0x1760] sm:$0xff]
    %v841 = vld [vmem:[#allocation3 + $0x1768] sm:$0xff]
    %v842 = vld [vmem:[#allocation3 + $0x1770] sm:$0xff]
    %v843 = vld [vmem:[#allocation3 + $0x1778] sm:$0xff]
    %v844 = vld [vmem:[#allocation3 + $0x1780] sm:$0xff]
    %v845 = vld [vmem:[#allocation3 + $0x1788] sm:$0xff]
    %v846 = vld [vmem:[#allocation3 + $0x1790] sm:$0xff]
    %v847 = vld [vmem:[#allocation3 + $0x1798] sm:$0xff]
    %v848 = vld [vmem:[#allocation3 + $0x17a0] sm:$0xff]
    %v849 = vld [vmem:[#allocation3 + $0x17a8] sm:$0xff]
    %v850 = vld [vmem:[#allocation3 + $0x17b0] sm:$0xff]
    %v851 = vld [vmem:[#allocation3 + $0x17b8] sm:$0xff]
    %v852 = vld [vmem:[#allocation3 + $0x17c0] sm:$0xff]
    %v853 = vld [vmem:[#allocation3 + $0x17c8] sm:$0xff]
    %v854 = vld [vmem:[#allocation3 + $0x17d0] sm:$0xff]
    %v855 = vld [vmem:[#allocation3 + $0x17d8] sm:$0xff]
    %v856 = vld [vmem:[#allocation3 + $0x17e0] sm:$0xff]
    %v857 = vld [vmem:[#allocation3 + $0x17e8] sm:$0xff]
    %v858 = vld [vmem:[#allocation3 + $0x17f0] sm:$0xff]
    %v859 = vld [vmem:[#allocation3 + $0x17f8] sm:$0xff]
    %v860 = vld [vmem:[#allocation3 + $0x1800] sm:$0xff]
    %v861 = vld [vmem:[#allocation3 + $0x1808] sm:$0xff]
    %v862 = vld [vmem:[#allocation3 + $0x1810] sm:$0xff]
    %v863 = vld [vmem:[#allocation3 + $0x1818] sm:$0xff]
    %v864 = vld [vmem:[#allocation3 + $0x1820] sm:$0xff]
    %v865 = vld [vmem:[#allocation3 + $0x1828] sm:$0xff]
    %v866 = vld [vmem:[#allocation3 + $0x1830] sm:$0xff]
    %v867 = vld [vmem:[#allocation3 + $0x1838] sm:$0xff]
    %v868 = vld [vmem:[#allocation3 + $0x1840] sm:$0xff]
    %v869 = vld [vmem:[#allocation3 + $0x1848] sm:$0xff]
    %v870 = vld [vmem:[#allocation3 + $0x1850] sm:$0xff]
    %v871 = vld [vmem:[#allocation3 + $0x1858] sm:$0xff]
    %v872 = vld [vmem:[#allocation3 + $0x1860] sm:$0xff]
    %v873 = vld [vmem:[#allocation3 + $0x1868] sm:$0xff]
    %v874 = vld [vmem:[#allocation3 + $0x1870] sm:$0xff]
    %v875 = vld [vmem:[#allocation3 + $0x1878] sm:$0xff]
    %v876 = vld [vmem:[#allocation3 + $0x1880] sm:$0xff]
    %v877 = vld [vmem:[#allocation3 + $0x1888] sm:$0xff]
    %v878 = vld [vmem:[#allocation3 + $0x1890] sm:$0xff]
    %v879 = vld [vmem:[#allocation3 + $0x1898] sm:$0xff]
    %v880 = vld [vmem:[#allocation3 + $0x18a0] sm:$0xff]
    %v881 = vld [vmem:[#allocation3 + $0x18a8] sm:$0xff]
    %v882 = vld [vmem:[#allocation3 + $0x18b0] sm:$0xff]
    %v883 = vld [vmem:[#allocation3 + $0x18b8] sm:$0xff]
    %v884 = vld [vmem:[#allocation3 + $0x18c0] sm:$0xff]
    %v885 = vld [vmem:[#allocation3 + $0x18c8] sm:$0xff]
    %v886 = vld [vmem:[#allocation3 + $0x18d0] sm:$0xff]
    %v887 = vld [vmem:[#allocation3 + $0x18d8] sm:$0xff]
    %v888 = vld [vmem:[#allocation3 + $0x18e0] sm:$0xff]
    %v889 = vld [vmem:[#allocation3 + $0x18e8] sm:$0xff]
    %v890 = vld [vmem:[#allocation3 + $0x18f0] sm:$0xff]
    %v891 = vld [vmem:[#allocation3 + $0x18f8] sm:$0xff]
    %v892 = vld [vmem:[#allocation3 + $0x1900] sm:$0xff]
    %v893 = vld [vmem:[#allocation3 + $0x1908] sm:$0xff]
    %v894 = vld [vmem:[#allocation3 + $0x1910] sm:$0xff]
    %v895 = vld [vmem:[#allocation3 + $0x1918] sm:$0xff]
    %v896 = vld [vmem:[#allocation3 + $0x1920] sm:$0xff]
    %v897 = vld [vmem:[#allocation3 + $0x1928] sm:$0xff]
    %v898 = vld [vmem:[#allocation3 + $0x1930] sm:$0xff]
    %v899 = vld [vmem:[#allocation3 + $0x1938] sm:$0xff]
    %v900 = vld [vmem:[#allocation3 + $0x1940] sm:$0xff]
    %v901 = vld [vmem:[#allocation3 + $0x1948] sm:$0xff]
    %v902 = vld [vmem:[#allocation3 + $0x1950] sm:$0xff]
    %v903 = vld [vmem:[#allocation3 + $0x1958] sm:$0xff]
    %v904 = vld [vmem:[#allocation3 + $0x1960] sm:$0xff]
    %v905 = vld [vmem:[#allocation3 + $0x1968] sm:$0xff]
    %v906 = vld [vmem:[#allocation3 + $0x1970] sm:$0xff]
    %v907 = vld [vmem:[#allocation3 + $0x1978] sm:$0xff]
    %v908 = vld [vmem:[#allocation3 + $0x1980] sm:$0xff]
    %v909 = vld [vmem:[#allocation3 + $0x1988] sm:$0xff]
    %v910 = vld [vmem:[#allocation3 + $0x1990] sm:$0xff]
    %v911 = vld [vmem:[#allocation3 + $0x1998] sm:$0xff]
    %v912 = vld [vmem:[#allocation3 + $0x19a0] sm:$0xff]
    %v913 = vld [vmem:[#allocation3 + $0x19a8] sm:$0xff]
    %v914 = vld [vmem:[#allocation3 + $0x19b0] sm:$0xff]
    %v915 = vld [vmem:[#allocation3 + $0x19b8] sm:$0xff]
    %v916 = vld [vmem:[#allocation3 + $0x19c0] sm:$0xff]
    %v917 = vld [vmem:[#allocation3 + $0x19c8] sm:$0xff]
    %v918 = vld [vmem:[#allocation3 + $0x19d0] sm:$0xff]
    %v919 = vld [vmem:[#allocation3 + $0x19d8] sm:$0xff]
    %v920 = vld [vmem:[#allocation3 + $0x19e0] sm:$0xff]
    %v921 = vld [vmem:[#allocation3 + $0x19e8] sm:$0xff]
    %v922 = vld [vmem:[#allocation3 + $0x19f0] sm:$0xff]
    %v923 = vld [vmem:[#allocation3 + $0x19f8] sm:$0xff]
    %v924 = vld [vmem:[#allocation3 + $0x1a00] sm:$0xff]
    %v925 = vld [vmem:[#allocation3 + $0x1a08] sm:$0xff]
    %v926 = vld [vmem:[#allocation3 + $0x1a10] sm:$0xff]
    %v927 = vld [vmem:[#allocation3 + $0x1a18] sm:$0xff]
    %v928 = vld [vmem:[#allocation3 + $0x1a20] sm:$0xff]
    %v929 = vld [vmem:[#allocation3 + $0x1a28] sm:$0xff]
    %v930 = vld [vmem:[#allocation3 + $0x1a30] sm:$0xff]
    %v931 = vld [vmem:[#allocation3 + $0x1a38] sm:$0xff]
    %v932 = vld [vmem:[#allocation3 + $0x1a40] sm:$0xff]
    %v933 = vld [vmem:[#allocation3 + $0x1a48] sm:$0xff]
    %v934 = vld [vmem:[#allocation3 + $0x1a50] sm:$0xff]
    %v935 = vld [vmem:[#allocation3 + $0x1a58] sm:$0xff]
    %v936 = vld [vmem:[#allocation3 + $0x1a60] sm:$0xff]
    %v937 = vld [vmem:[#allocation3 + $0x1a68] sm:$0xff]
    %v938 = vld [vmem:[#allocation3 + $0x1a70] sm:$0xff]
    %v939 = vld [vmem:[#allocation3 + $0x1a78] sm:$0xff]
    %v940 = vld [vmem:[#allocation3 + $0x1a80] sm:$0xff]
    %v941 = vld [vmem:[#allocation3 + $0x1a88] sm:$0xff]
    %v942 = vld [vmem:[#allocation3 + $0x1a90] sm:$0xff]
    %v943 = vld [vmem:[#allocation3 + $0x1a98] sm:$0xff]
    %v944 = vld [vmem:[#allocation3 + $0x1aa0] sm:$0xff]
    %v945 = vld [vmem:[#allocation3 + $0x1aa8] sm:$0xff]
    %v946 = vld [vmem:[#allocation3 + $0x1ab0] sm:$0xff]
    %v947 = vld [vmem:[#allocation3 + $0x1ab8] sm:$0xff]
    %v948 = vld [vmem:[#allocation3 + $0x1ac0] sm:$0xff]
    %v949 = vld [vmem:[#allocation3 + $0x1ac8] sm:$0xff]
    %v950 = vld [vmem:[#allocation3 + $0x1ad0] sm:$0xff]
    %v951 = vld [vmem:[#allocation3 + $0x1ad8] sm:$0xff]
    %v952 = vld [vmem:[#allocation3 + $0x1ae0] sm:$0xff]
    %v953 = vld [vmem:[#allocation3 + $0x1ae8] sm:$0xff]
    %v954 = vld [vmem:[#allocation3 + $0x1af0] sm:$0xff]
    %v955 = vld [vmem:[#allocation3 + $0x1af8] sm:$0xff]
    %v956 = vld [vmem:[#allocation3 + $0x1b00] sm:$0xff]
    %v957 = vld [vmem:[#allocation3 + $0x1b08] sm:$0xff]
    %v958 = vld [vmem:[#allocation3 + $0x1b10] sm:$0xff]
    %v959 = vld [vmem:[#allocation3 + $0x1b18] sm:$0xff]
    %v960 = vld [vmem:[#allocation3 + $0x1b20] sm:$0xff]
    %v961 = vld [vmem:[#allocation3 + $0x1b28] sm:$0xff]
    %v962 = vld [vmem:[#allocation3 + $0x1b30] sm:$0xff]
    %v963 = vld [vmem:[#allocation3 + $0x1b38] sm:$0xff]
    %v964 = vld [vmem:[#allocation3 + $0x1b40] sm:$0xff]
    %v965 = vld [vmem:[#allocation3 + $0x1b48] sm:$0xff]
    %v966 = vld [vmem:[#allocation3 + $0x1b50] sm:$0xff]
    %v967 = vld [vmem:[#allocation3 + $0x1b58] sm:$0xff]
    %v968 = vld [vmem:[#allocation3 + $0x1b60] sm:$0xff]
    %v969 = vld [vmem:[#allocation3 + $0x1b68] sm:$0xff]
    %v970 = vld [vmem:[#allocation3 + $0x1b70] sm:$0xff]
    %v971 = vld [vmem:[#allocation3 + $0x1b78] sm:$0xff]
    %v972 = vld [vmem:[#allocation3 + $0x1b80] sm:$0xff]
    %v973 = vld [vmem:[#allocation3 + $0x1b88] sm:$0xff]
    %v974 = vld [vmem:[#allocation3 + $0x1b90] sm:$0xff]
    %v975 = vld [vmem:[#allocation3 + $0x1b98] sm:$0xff]
    %v976 = vld [vmem:[#allocation3 + $0x1ba0] sm:$0xff]
    %v977 = vld [vmem:[#allocation3 + $0x1ba8] sm:$0xff]
    %v978 = vld [vmem:[#allocation3 + $0x1bb0] sm:$0xff]
    %v979 = vld [vmem:[#allocation3 + $0x1bb8] sm:$0xff]
    %v980 = vld [vmem:[#allocation3 + $0x1bc0] sm:$0xff]
    %v981 = vld [vmem:[#allocation3 + $0x1bc8] sm:$0xff]
    %v982 = vld [vmem:[#allocation3 + $0x1bd0] sm:$0xff]
    %v983 = vld [vmem:[#allocation3 + $0x1bd8] sm:$0xff]
    %v984 = vld [vmem:[#allocation3 + $0x1be0] sm:$0xff]
    %v985 = vld [vmem:[#allocation3 + $0x1be8] sm:$0xff]
    %v986 = vld [vmem:[#allocation3 + $0x1bf0] sm:$0xff]
    %v987 = vld [vmem:[#allocation3 + $0x1bf8] sm:$0xff]
    %v988 = vld [vmem:[#allocation3 + $0x1c00] sm:$0xff]
    %v989 = vld [vmem:[#allocation3 + $0x1c08] sm:$0xff]
    %v990 = vld [vmem:[#allocation3 + $0x1c10] sm:$0xff]
    %v991 = vld [vmem:[#allocation3 + $0x1c18] sm:$0xff]
    %v992 = vld [vmem:[#allocation3 + $0x1c20] sm:$0xff]
    %v993 = vld [vmem:[#allocation3 + $0x1c28] sm:$0xff]
    %v994 = vld [vmem:[#allocation3 + $0x1c30] sm:$0xff]
    %v995 = vld [vmem:[#allocation3 + $0x1c38] sm:$0xff]
    %v996 = vld [vmem:[#allocation3 + $0x1c40] sm:$0xff]
    %v997 = vld [vmem:[#allocation3 + $0x1c48] sm:$0xff]
    %v998 = vld [vmem:[#allocation3 + $0x1c50] sm:$0xff]
    %v999 = vld [vmem:[#allocation3 + $0x1c58] sm:$0xff]
    %v1000 = vld [vmem:[#allocation3 + $0x1c60] sm:$0xff]
    %v1001 = vld [vmem:[#allocation3 + $0x1c68] sm:$0xff]
    %v1002 = vld [vmem:[#allocation3 + $0x1c70] sm:$0xff]
    %v1003 = vld [vmem:[#allocation3 + $0x1c78] sm:$0xff]
    %v1004 = vld [vmem:[#allocation3 + $0x1c80] sm:$0xff]
    %v1005 = vld [vmem:[#allocation3 + $0x1c88] sm:$0xff]
    %v1006 = vld [vmem:[#allocation3 + $0x1c90] sm:$0xff]
    %v1007 = vld [vmem:[#allocation3 + $0x1c98] sm:$0xff]
    %v1008 = vld [vmem:[#allocation3 + $0x1ca0] sm:$0xff]
    %v1009 = vld [vmem:[#allocation3 + $0x1ca8] sm:$0xff]
    %v1010 = vld [vmem:[#allocation3 + $0x1cb0] sm:$0xff]
    %v1011 = vld [vmem:[#allocation3 + $0x1cb8] sm:$0xff]
    %v1012 = vld [vmem:[#allocation3 + $0x1cc0] sm:$0xff]
    %v1013 = vld [vmem:[#allocation3 + $0x1cc8] sm:$0xff]
    %v1014 = vld [vmem:[#allocation3 + $0x1cd0] sm:$0xff]
    %v1015 = vld [vmem:[#allocation3 + $0x1cd8] sm:$0xff]
    %v1016 = vld [vmem:[#allocation3 + $0x1ce0] sm:$0xff]
    %v1017 = vld [vmem:[#allocation3 + $0x1ce8] sm:$0xff]
    %v1018 = vld [vmem:[#allocation3 + $0x1cf0] sm:$0xff]
    %v1019 = vld [vmem:[#allocation3 + $0x1cf8] sm:$0xff]
    %v1020 = vld [vmem:[#allocation3 + $0x1d00] sm:$0xff]
    %v1021 = vld [vmem:[#allocation3 + $0x1d08] sm:$0xff]
    %v1022 = vld [vmem:[#allocation3 + $0x1d10] sm:$0xff]
    %v1023 = vld [vmem:[#allocation3 + $0x1d18] sm:$0xff]
    %v1024 = vld [vmem:[#allocation3 + $0x1d20] sm:$0xff]
    %v1025 = vld [vmem:[#allocation3 + $0x1d28] sm:$0xff]
    %v1026 = vld [vmem:[#allocation3 + $0x1d30] sm:$0xff]
    %v1027 = vld [vmem:[#allocation3 + $0x1d38] sm:$0xff]
    %v1028 = vld [vmem:[#allocation3 + $0x1d40] sm:$0xff]
    %v1029 = vld [vmem:[#allocation3 + $0x1d48] sm:$0xff]
    %v1030 = vld [vmem:[#allocation3 + $0x1d50] sm:$0xff]
    %v1031 = vld [vmem:[#allocation3 + $0x1d58] sm:$0xff]
    %v1032 = vld [vmem:[#allocation3 + $0x1d60] sm:$0xff]
    %v1033 = vld [vmem:[#allocation3 + $0x1d68] sm:$0xff]
    %v1034 = vld [vmem:[#allocation3 + $0x1d70] sm:$0xff]
    %v1035 = vld [vmem:[#allocation3 + $0x1d78] sm:$0xff]
    %v1036 = vld [vmem:[#allocation3 + $0x1d80] sm:$0xff]
    %v1037 = vld [vmem:[#allocation3 + $0x1d88] sm:$0xff]
    %v1038 = vld [vmem:[#allocation3 + $0x1d90] sm:$0xff]
    %v1039 = vld [vmem:[#allocation3 + $0x1d98] sm:$0xff]
    %v1040 = vld [vmem:[#allocation3 + $0x1da0] sm:$0xff]
    %v1041 = vld [vmem:[#allocation3 + $0x1da8] sm:$0xff]
    %v1042 = vld [vmem:[#allocation3 + $0x1db0] sm:$0xff]
    %v1043 = vld [vmem:[#allocation3 + $0x1db8] sm:$0xff]
    %v1044 = vld [vmem:[#allocation3 + $0x1dc0] sm:$0xff]
    %v1045 = vld [vmem:[#allocation3 + $0x1dc8] sm:$0xff]
    %v1046 = vld [vmem:[#allocation3 + $0x1dd0] sm:$0xff]
    %v1047 = vld [vmem:[#allocation3 + $0x1dd8] sm:$0xff]
    %v1048 = vld [vmem:[#allocation3 + $0x1de0] sm:$0xff]
    %v1049 = vld [vmem:[#allocation3 + $0x1de8] sm:$0xff]
    %v1050 = vld [vmem:[#allocation3 + $0x1df0] sm:$0xff]
    %v1051 = vld [vmem:[#allocation3 + $0x1df8] sm:$0xff]
    %v1052 = vld [vmem:[#allocation3 + $0x1e00] sm:$0xff]
    %v1053 = vld [vmem:[#allocation3 + $0x1e08] sm:$0xff]
    %v1054 = vld [vmem:[#allocation3 + $0x1e10] sm:$0xff]
    %v1055 = vld [vmem:[#allocation3 + $0x1e18] sm:$0xff]
    %v1056 = vld [vmem:[#allocation3 + $0x1e20] sm:$0xff]
    %v1057 = vld [vmem:[#allocation3 + $0x1e28] sm:$0xff]
    %v1058 = vld [vmem:[#allocation3 + $0x1e30] sm:$0xff]
    %v1059 = vld [vmem:[#allocation3 + $0x1e38] sm:$0xff]
    %v1060 = vld [vmem:[#allocation3 + $0x1e40] sm:$0xff]
    %v1061 = vld [vmem:[#allocation3 + $0x1e48] sm:$0xff]
    %v1062 = vld [vmem:[#allocation3 + $0x1e50] sm:$0xff]
    %v1063 = vld [vmem:[#allocation3 + $0x1e58] sm:$0xff]
    %v1064 = vld [vmem:[#allocation3 + $0x1e60] sm:$0xff]
    %v1065 = vld [vmem:[#allocation3 + $0x1e68] sm:$0xff]
    %v1066 = vld [vmem:[#allocation3 + $0x1e70] sm:$0xff]
    %v1067 = vld [vmem:[#allocation3 + $0x1e78] sm:$0xff]
    %v1068 = vld [vmem:[#allocation3 + $0x1e80] sm:$0xff]
    %v1069 = vld [vmem:[#allocation3 + $0x1e88] sm:$0xff]
    %v1070 = vld [vmem:[#allocation3 + $0x1e90] sm:$0xff]
    %v1071 = vld [vmem:[#allocation3 + $0x1e98] sm:$0xff]
    %v1072 = vld [vmem:[#allocation3 + $0x1ea0] sm:$0xff]
    %v1073 = vld [vmem:[#allocation3 + $0x1ea8] sm:$0xff]
    %v1074 = vld [vmem:[#allocation3 + $0x1eb0] sm:$0xff]
    %v1075 = vld [vmem:[#allocation3 + $0x1eb8] sm:$0xff]
    %v1076 = vld [vmem:[#allocation3 + $0x1ec0] sm:$0xff]
    %v1077 = vld [vmem:[#allocation3 + $0x1ec8] sm:$0xff]
    %v1078 = vld [vmem:[#allocation3 + $0x1ed0] sm:$0xff]
    %v1079 = vld [vmem:[#allocation3 + $0x1ed8] sm:$0xff]
    %v1080 = vld [vmem:[#allocation3 + $0x1ee0] sm:$0xff]
    %v1081 = vld [vmem:[#allocation3 + $0x1ee8] sm:$0xff]
    %v1082 = vld [vmem:[#allocation3 + $0x1ef0] sm:$0xff]
    %v1083 = vld [vmem:[#allocation3 + $0x1ef8] sm:$0xff]
    %v1084 = vld [vmem:[#allocation3 + $0x1f00] sm:$0xff]
    %v1085 = vld [vmem:[#allocation3 + $0x1f08] sm:$0xff]
    %v1086 = vld [vmem:[#allocation3 + $0x1f10] sm:$0xff]
    %v1087 = vld [vmem:[#allocation3 + $0x1f18] sm:$0xff]
    %v1088 = vld [vmem:[#allocation3 + $0x1f20] sm:$0xff]
    %v1089 = vld [vmem:[#allocation3 + $0x1f28] sm:$0xff]
    %v1090 = vld [vmem:[#allocation3 + $0x1f30] sm:$0xff]
    %v1091 = vld [vmem:[#allocation3 + $0x1f38] sm:$0xff]
    %v1092 = vld [vmem:[#allocation3 + $0x1f40] sm:$0xff]
    %v1093 = vld [vmem:[#allocation3 + $0x1f48] sm:$0xff]
    %v1094 = vld [vmem:[#allocation3 + $0x1f50] sm:$0xff]
    %v1095 = vld [vmem:[#allocation3 + $0x1f58] sm:$0xff]
    %v1096 = vld [vmem:[#allocation3 + $0x1f60] sm:$0xff]
    %v1097 = vld [vmem:[#allocation3 + $0x1f68] sm:$0xff]
    %v1098 = vld [vmem:[#allocation3 + $0x1f70] sm:$0xff]
    %v1099 = vld [vmem:[#allocation3 + $0x1f78] sm:$0xff]
    %v1100 = vld [vmem:[#allocation3 + $0x1f80] sm:$0xff]
    %v1101 = vld [vmem:[#allocation3 + $0x1f88] sm:$0xff]
    %v1102 = vld [vmem:[#allocation3 + $0x1f90] sm:$0xff]
    %v1103 = vld [vmem:[#allocation3 + $0x1f98] sm:$0xff]
    %v1104 = vld [vmem:[#allocation3 + $0x1fa0] sm:$0xff]
    %v1105 = vld [vmem:[#allocation3 + $0x1fa8] sm:$0xff]
    %v1106 = vld [vmem:[#allocation3 + $0x1fb0] sm:$0xff]
    %v1107 = vld [vmem:[#allocation3 + $0x1fb8] sm:$0xff]
    %v1108 = vld [vmem:[#allocation3 + $0x1fc0] sm:$0xff]
    %v1109 = vld [vmem:[#allocation3 + $0x1fc8] sm:$0xff]
    %v1110 = vld [vmem:[#allocation3 + $0x1fd0] sm:$0xff]
    %v1111 = vld [vmem:[#allocation3 + $0x1fd8] sm:$0xff]
    %v1112 = vld [vmem:[#allocation3 + $0x1fe0] sm:$0xff]
    %v1113 = vld [vmem:[#allocation3 + $0x1fe8] sm:$0xff]
    %v1114 = vld [vmem:[#allocation3 + $0x1ff0] sm:$0xff]
    %v1115 = vld [vmem:[#allocation3 + $0x1ff8] sm:$0xff]
    %1120 = vst [vmem:[#allocation1] ss:$2 sm:$0xff] %v88
    %s1121 = scalar_lea.vmem [#allocation1], 16
    %1122 = vst [vmem:[%s1121] ss:$2 sm:$0xff] %v89
    %s1123 = scalar_lea.vmem [#allocation1], 32
    %1124 = vst [vmem:[%s1123] ss:$2 sm:$0xff] %v90
    %s1125 = scalar_lea.vmem [#allocation1], 48
    %1126 = vst [vmem:[%s1125] ss:$2 sm:$0xff] %v91
    %v1127 = vld.sshfl [vmem:[#allocation1] sm:$0xff pattern:$0x75316420]
    %v1128 = vld.sshfl [vmem:[#allocation1 + $0x8] sm:$0xff pattern:$0x75316420]
    %v1129 = vld.sshfl [vmem:[#allocation1 + $0x10] sm:$0xff pattern:$0x75316420]
    %v1130 = vld.sshfl [vmem:[#allocation1 + $0x18] sm:$0xff pattern:$0x75316420]
    %v1131 = vld.sshfl [vmem:[#allocation1 + $0x20] sm:$0xff pattern:$0x75316420]
    %v1132 = vld.sshfl [vmem:[#allocation1 + $0x28] sm:$0xff pattern:$0x75316420]
    %v1133 = vld.sshfl [vmem:[#allocation1 + $0x30] sm:$0xff pattern:$0x75316420]
    %v1134 = vld.sshfl [vmem:[#allocation1 + $0x38] sm:$0xff pattern:$0x75316420]
    %1143 = vmatpush.msra.mxu0 %v212
    %1144 = vmatpush.msra.mxu0 %v204
    %1145 = vmatpush.msra.mxu0 %v196
    %1146 = vmatpush.msra.mxu0 %v188
    %1147 = vmatpush.msra.mxu0 %v180
    %1148 = vmatpush.msra.mxu0 %v172
    %1149 = vmatpush.msra.mxu0 %v164
    %1150 = vmatpush.msra.mxu0 %v156
    %1151 = vmatpush.msra.mxu0 %v148
    %1152 = vmatpush.msra.mxu0 %v140
    %1153 = vmatpush.msra.mxu0 %v132
    %1154 = vmatpush.msra.mxu0 %v124
    %1155 = vmatpush.msra.mxu0 %v116
    %1156 = vmatpush.msra.mxu0 %v108
    %1157 = vmatpush.msra.mxu0 %v100
    %1158 = vmatpush.msra.mxu0 %v92
    %1159 = vmatmul.f32.gmra.mxu0 %v1127
    %v1160 = vpop.f32.mrf.mxu0
    %v1161 = vadd.f32 0.0, %v1160
    %1162 = vdwg.mxu0
    %1163 = vmatpush.msra.mxu0 %v340
    %1164 = vmatpush.msra.mxu0 %v332
    %1165 = vmatpush.msra.mxu0 %v324
    %1166 = vmatpush.msra.mxu0 %v316
    %1167 = vmatpush.msra.mxu0 %v308
    %1168 = vmatpush.msra.mxu0 %v300
    %1169 = vmatpush.msra.mxu0 %v292
    %1170 = vmatpush.msra.mxu0 %v284
    %1171 = vmatpush.msra.mxu0 %v276
    %1172 = vmatpush.msra.mxu0 %v268
    %1173 = vmatpush.msra.mxu0 %v260
    %1174 = vmatpush.msra.mxu0 %v252
    %1175 = vmatpush.msra.mxu0 %v244
    %1176 = vmatpush.msra.mxu0 %v236
    %1177 = vmatpush.msra.mxu0 %v228
    %1178 = vmatpush.msra.mxu0 %v220
    %1179 = vmatmul.f32.gmra.mxu0 %v1128
    %v1180 = vpop.f32.mrf.mxu0
    %v1181 = vadd.f32 %v1161, %v1180
    %1182 = vdwg.mxu0
    %1183 = vmatpush.msra.mxu0 %v468
    %1184 = vmatpush.msra.mxu0 %v460
    %1185 = vmatpush.msra.mxu0 %v452
    %1186 = vmatpush.msra.mxu0 %v444
    %1187 = vmatpush.msra.mxu0 %v436
    %1188 = vmatpush.msra.mxu0 %v428
    %1189 = vmatpush.msra.mxu0 %v420
    %1190 = vmatpush.msra.mxu0 %v412
    %1191 = vmatpush.msra.mxu0 %v404
    %1192 = vmatpush.msra.mxu0 %v396
    %1193 = vmatpush.msra.mxu0 %v388
    %1194 = vmatpush.msra.mxu0 %v380
    %1195 = vmatpush.msra.mxu0 %v372
    %1196 = vmatpush.msra.mxu0 %v364
    %1197 = vmatpush.msra.mxu0 %v356
    %1198 = vmatpush.msra.mxu0 %v348
    %1199 = vmatmul.f32.gmra.mxu0 %v1129
    %v1200 = vpop.f32.mrf.mxu0
    %v1201 = vadd.f32 %v1181, %v1200
    %1202 = vdwg.mxu0
    %1203 = vmatpush.msra.mxu0 %v596
    %1204 = vmatpush.msra.mxu0 %v588
    %1205 = vmatpush.msra.mxu0 %v580
    %1206 = vmatpush.msra.mxu0 %v572
    %1207 = vmatpush.msra.mxu0 %v564
    %1208 = vmatpush.msra.mxu0 %v556
    %1209 = vmatpush.msra.mxu0 %v548
    %1210 = vmatpush.msra.mxu0 %v540
    %1211 = vmatpush.msra.mxu0 %v532
    %1212 = vmatpush.msra.mxu0 %v524
    %1213 = vmatpush.msra.mxu0 %v516
    %1214 = vmatpush.msra.mxu0 %v508
    %1215 = vmatpush.msra.mxu0 %v500
    %1216 = vmatpush.msra.mxu0 %v492
    %1217 = vmatpush.msra.mxu0 %v484
    %1218 = vmatpush.msra.mxu0 %v476
    %1219 = vmatmul.f32.gmra.mxu0 %v1130
    %v1220 = vpop.f32.mrf.mxu0
    %v1221 = vadd.f32 %v1201, %v1220
    %1222 = vdwg.mxu0
    %1223 = vmatpush.msra.mxu0 %v724
    %1224 = vmatpush.msra.mxu0 %v716
    %1225 = vmatpush.msra.mxu0 %v708
    %1226 = vmatpush.msra.mxu0 %v700
    %1227 = vmatpush.msra.mxu0 %v692
    %1228 = vmatpush.msra.mxu0 %v684
    %1229 = vmatpush.msra.mxu0 %v676
    %1230 = vmatpush.msra.mxu0 %v668
    %1231 = vmatpush.msra.mxu0 %v660
    %1232 = vmatpush.msra.mxu0 %v652
    %1233 = vmatpush.msra.mxu0 %v644
    %1234 = vmatpush.msra.mxu0 %v636
    %1235 = vmatpush.msra.mxu0 %v628
    %1236 = vmatpush.msra.mxu0 %v620
    %1237 = vmatpush.msra.mxu0 %v612
    %1238 = vmatpush.msra.mxu0 %v604
    %1239 = vmatmul.f32.gmra.mxu0 %v1131
    %v1240 = vpop.f32.mrf.mxu0
    %v1241 = vadd.f32 %v1221, %v1240
    %1242 = vdwg.mxu0
    %1243 = vmatpush.msra.mxu0 %v852
    %1244 = vmatpush.msra.mxu0 %v844
    %1245 = vmatpush.msra.mxu0 %v836
    %1246 = vmatpush.msra.mxu0 %v828
    %1247 = vmatpush.msra.mxu0 %v820
    %1248 = vmatpush.msra.mxu0 %v812
    %1249 = vmatpush.msra.mxu0 %v804
    %1250 = vmatpush.msra.mxu0 %v796
    %1251 = vmatpush.msra.mxu0 %v788
    %1252 = vmatpush.msra.mxu0 %v780
    %1253 = vmatpush.msra.mxu0 %v772
    %1254 = vmatpush.msra.mxu0 %v764
    %1255 = vmatpush.msra.mxu0 %v756
    %1256 = vmatpush.msra.mxu0 %v748
    %1257 = vmatpush.msra.mxu0 %v740
    %1258 = vmatpush.msra.mxu0 %v732
    %1259 = vmatmul.f32.gmra.mxu0 %v1132
    %v1260 = vpop.f32.mrf.mxu0
    %v1261 = vadd.f32 %v1241, %v1260
    %1262 = vdwg.mxu0
    %1263 = vmatpush.msra.mxu0 %v980
    %1264 = vmatpush.msra.mxu0 %v972
    %1265 = vmatpush.msra.mxu0 %v964
    %1266 = vmatpush.msra.mxu0 %v956
    %1267 = vmatpush.msra.mxu0 %v948
    %1268 = vmatpush.msra.mxu0 %v940
    %1269 = vmatpush.msra.mxu0 %v932
    %1270 = vmatpush.msra.mxu0 %v924
    %1271 = vmatpush.msra.mxu0 %v916
    %1272 = vmatpush.msra.mxu0 %v908
    %1273 = vmatpush.msra.mxu0 %v900
    %1274 = vmatpush.msra.mxu0 %v892
    %1275 = vmatpush.msra.mxu0 %v884
    %1276 = vmatpush.msra.mxu0 %v876
    %1277 = vmatpush.msra.mxu0 %v868
    %1278 = vmatpush.msra.mxu0 %v860
    %1279 = vmatmul.f32.gmra.mxu0 %v1133
    %v1280 = vpop.f32.mrf.mxu0
    %v1281 = vadd.f32 %v1261, %v1280
    %1282 = vdwg.mxu0
    %1283 = vmatpush.msra.mxu0 %v1108
    %1284 = vmatpush.msra.mxu0 %v1100
    %1285 = vmatpush.msra.mxu0 %v1092
    %1286 = vmatpush.msra.mxu0 %v1084
    %1287 = vmatpush.msra.mxu0 %v1076
    %1288 = vmatpush.msra.mxu0 %v1068
    %1289 = vmatpush.msra.mxu0 %v1060
    %1290 = vmatpush.msra.mxu0 %v1052
    %1291 = vmatpush.msra.mxu0 %v1044
    %1292 = vmatpush.msra.mxu0 %v1036
    %1293 = vmatpush.msra.mxu0 %v1028
    %1294 = vmatpush.msra.mxu0 %v1020
    %1295 = vmatpush.msra.mxu0 %v1012
    %1296 = vmatpush.msra.mxu0 %v1004
    %1297 = vmatpush.msra.mxu0 %v996
    %1298 = vmatpush.msra.mxu0 %v988
    %1299 = vmatmul.f32.gmra.mxu0 %v1134
    %v1300 = vpop.f32.mrf.mxu0
    %v1301 = vadd.f32 %v1281, %v1300
    %1302 = vdwg.mxu0
    %1303 = vmatpush.msra.mxu0 %v213
    %1304 = vmatpush.msra.mxu0 %v205
    %1305 = vmatpush.msra.mxu0 %v197
    %1306 = vmatpush.msra.mxu0 %v189
    %1307 = vmatpush.msra.mxu0 %v181
    %1308 = vmatpush.msra.mxu0 %v173
    %1309 = vmatpush.msra.mxu0 %v165
    %1310 = vmatpush.msra.mxu0 %v157
    %1311 = vmatpush.msra.mxu0 %v149
    %1312 = vmatpush.msra.mxu0 %v141
    %1313 = vmatpush.msra.mxu0 %v133
    %1314 = vmatpush.msra.mxu0 %v125
    %1315 = vmatpush.msra.mxu0 %v117
    %1316 = vmatpush.msra.mxu0 %v109
    %1317 = vmatpush.msra.mxu0 %v101
    %1318 = vmatpush.msra.mxu0 %v93
    %1319 = vmatmul.f32.gmra.mxu0 %v1127
    %v1320 = vpop.f32.mrf.mxu0
    %v1321 = vadd.f32 0.0, %v1320
    %1322 = vdwg.mxu0
    %1323 = vmatpush.msra.mxu0 %v341
    %1324 = vmatpush.msra.mxu0 %v333
    %1325 = vmatpush.msra.mxu0 %v325
    %1326 = vmatpush.msra.mxu0 %v317
    %1327 = vmatpush.msra.mxu0 %v309
    %1328 = vmatpush.msra.mxu0 %v301
    %1329 = vmatpush.msra.mxu0 %v293
    %1330 = vmatpush.msra.mxu0 %v285
    %1331 = vmatpush.msra.mxu0 %v277
    %1332 = vmatpush.msra.mxu0 %v269
    %1333 = vmatpush.msra.mxu0 %v261
    %1334 = vmatpush.msra.mxu0 %v253
    %1335 = vmatpush.msra.mxu0 %v245
    %1336 = vmatpush.msra.mxu0 %v237
    %1337 = vmatpush.msra.mxu0 %v229
    %1338 = vmatpush.msra.mxu0 %v221
    %1339 = vmatmul.f32.gmra.mxu0 %v1128
    %v1340 = vpop.f32.mrf.mxu0
    %v1341 = vadd.f32 %v1321, %v1340
    %1342 = vdwg.mxu0
    %1343 = vmatpush.msra.mxu0 %v469
    %1344 = vmatpush.msra.mxu0 %v461
    %1345 = vmatpush.msra.mxu0 %v453
    %1346 = vmatpush.msra.mxu0 %v445
    %1347 = vmatpush.msra.mxu0 %v437
    %1348 = vmatpush.msra.mxu0 %v429
    %1349 = vmatpush.msra.mxu0 %v421
    %1350 = vmatpush.msra.mxu0 %v413
    %1351 = vmatpush.msra.mxu0 %v405
    %1352 = vmatpush.msra.mxu0 %v397
    %1353 = vmatpush.msra.mxu0 %v389
    %1354 = vmatpush.msra.mxu0 %v381
    %1355 = vmatpush.msra.mxu0 %v373
    %1356 = vmatpush.msra.mxu0 %v365
    %1357 = vmatpush.msra.mxu0 %v357
    %1358 = vmatpush.msra.mxu0 %v349
    %1359 = vmatmul.f32.gmra.mxu0 %v1129
    %v1360 = vpop.f32.mrf.mxu0
    %v1361 = vadd.f32 %v1341, %v1360
    %1362 = vdwg.mxu0
    %1363 = vmatpush.msra.mxu0 %v597
    %1364 = vmatpush.msra.mxu0 %v589
    %1365 = vmatpush.msra.mxu0 %v581
    %1366 = vmatpush.msra.mxu0 %v573
    %1367 = vmatpush.msra.mxu0 %v565
    %1368 = vmatpush.msra.mxu0 %v557
    %1369 = vmatpush.msra.mxu0 %v549
    %1370 = vmatpush.msra.mxu0 %v541
    %1371 = vmatpush.msra.mxu0 %v533
    %1372 = vmatpush.msra.mxu0 %v525
    %1373 = vmatpush.msra.mxu0 %v517
    %1374 = vmatpush.msra.mxu0 %v509
    %1375 = vmatpush.msra.mxu0 %v501
    %1376 = vmatpush.msra.mxu0 %v493
    %1377 = vmatpush.msra.mxu0 %v485
    %1378 = vmatpush.msra.mxu0 %v477
    %1379 = vmatmul.f32.gmra.mxu0 %v1130
    %v1380 = vpop.f32.mrf.mxu0
    %v1381 = vadd.f32 %v1361, %v1380
    %1382 = vdwg.mxu0
    %1383 = vmatpush.msra.mxu0 %v725
    %1384 = vmatpush.msra.mxu0 %v717
    %1385 = vmatpush.msra.mxu0 %v709
    %1386 = vmatpush.msra.mxu0 %v701
    %1387 = vmatpush.msra.mxu0 %v693
    %1388 = vmatpush.msra.mxu0 %v685
    %1389 = vmatpush.msra.mxu0 %v677
    %1390 = vmatpush.msra.mxu0 %v669
    %1391 = vmatpush.msra.mxu0 %v661
    %1392 = vmatpush.msra.mxu0 %v653
    %1393 = vmatpush.msra.mxu0 %v645
    %1394 = vmatpush.msra.mxu0 %v637
    %1395 = vmatpush.msra.mxu0 %v629
    %1396 = vmatpush.msra.mxu0 %v621
    %1397 = vmatpush.msra.mxu0 %v613
    %1398 = vmatpush.msra.mxu0 %v605
    %1399 = vmatmul.f32.gmra.mxu0 %v1131
    %v1400 = vpop.f32.mrf.mxu0
    %v1401 = vadd.f32 %v1381, %v1400
    %1402 = vdwg.mxu0
    %1403 = vmatpush.msra.mxu0 %v853
    %1404 = vmatpush.msra.mxu0 %v845
    %1405 = vmatpush.msra.mxu0 %v837
    %1406 = vmatpush.msra.mxu0 %v829
    %1407 = vmatpush.msra.mxu0 %v821
    %1408 = vmatpush.msra.mxu0 %v813
    %1409 = vmatpush.msra.mxu0 %v805
    %1410 = vmatpush.msra.mxu0 %v797
    %1411 = vmatpush.msra.mxu0 %v789
    %1412 = vmatpush.msra.mxu0 %v781
    %1413 = vmatpush.msra.mxu0 %v773
    %1414 = vmatpush.msra.mxu0 %v765
    %1415 = vmatpush.msra.mxu0 %v757
    %1416 = vmatpush.msra.mxu0 %v749
    %1417 = vmatpush.msra.mxu0 %v741
    %1418 = vmatpush.msra.mxu0 %v733
    %1419 = vmatmul.f32.gmra.mxu0 %v1132
    %v1420 = vpop.f32.mrf.mxu0
    %v1421 = vadd.f32 %v1401, %v1420
    %1422 = vdwg.mxu0
    %1423 = vmatpush.msra.mxu0 %v981
    %1424 = vmatpush.msra.mxu0 %v973
    %1425 = vmatpush.msra.mxu0 %v965
    %1426 = vmatpush.msra.mxu0 %v957
    %1427 = vmatpush.msra.mxu0 %v949
    %1428 = vmatpush.msra.mxu0 %v941
    %1429 = vmatpush.msra.mxu0 %v933
    %1430 = vmatpush.msra.mxu0 %v925
    %1431 = vmatpush.msra.mxu0 %v917
    %1432 = vmatpush.msra.mxu0 %v909
    %1433 = vmatpush.msra.mxu0 %v901
    %1434 = vmatpush.msra.mxu0 %v893
    %1435 = vmatpush.msra.mxu0 %v885
    %1436 = vmatpush.msra.mxu0 %v877
    %1437 = vmatpush.msra.mxu0 %v869
    %1438 = vmatpush.msra.mxu0 %v861
    %1439 = vmatmul.f32.gmra.mxu0 %v1133
    %v1440 = vpop.f32.mrf.mxu0
    %v1441 = vadd.f32 %v1421, %v1440
    %1442 = vdwg.mxu0
    %1443 = vmatpush.msra.mxu0 %v1109
    %1444 = vmatpush.msra.mxu0 %v1101
    %1445 = vmatpush.msra.mxu0 %v1093
    %1446 = vmatpush.msra.mxu0 %v1085
    %1447 = vmatpush.msra.mxu0 %v1077
    %1448 = vmatpush.msra.mxu0 %v1069
    %1449 = vmatpush.msra.mxu0 %v1061
    %1450 = vmatpush.msra.mxu0 %v1053
    %1451 = vmatpush.msra.mxu0 %v1045
    %1452 = vmatpush.msra.mxu0 %v1037
    %1453 = vmatpush.msra.mxu0 %v1029
    %1454 = vmatpush.msra.mxu0 %v1021
    %1455 = vmatpush.msra.mxu0 %v1013
    %1456 = vmatpush.msra.mxu0 %v1005
    %1457 = vmatpush.msra.mxu0 %v997
    %1458 = vmatpush.msra.mxu0 %v989
    %1459 = vmatmul.f32.gmra.mxu0 %v1134
    %v1460 = vpop.f32.mrf.mxu0
    %v1461 = vadd.f32 %v1441, %v1460
    %1462 = vdwg.mxu0
    %1463 = vmatpush.msra.mxu0 %v214
    %1464 = vmatpush.msra.mxu0 %v206
    %1465 = vmatpush.msra.mxu0 %v198
    %1466 = vmatpush.msra.mxu0 %v190
    %1467 = vmatpush.msra.mxu0 %v182
    %1468 = vmatpush.msra.mxu0 %v174
    %1469 = vmatpush.msra.mxu0 %v166
    %1470 = vmatpush.msra.mxu0 %v158
    %1471 = vmatpush.msra.mxu0 %v150
    %1472 = vmatpush.msra.mxu0 %v142
    %1473 = vmatpush.msra.mxu0 %v134
    %1474 = vmatpush.msra.mxu0 %v126
    %1475 = vmatpush.msra.mxu0 %v118
    %1476 = vmatpush.msra.mxu0 %v110
    %1477 = vmatpush.msra.mxu0 %v102
    %1478 = vmatpush.msra.mxu0 %v94
    %1479 = vmatmul.f32.gmra.mxu0 %v1127
    %v1480 = vpop.f32.mrf.mxu0
    %v1481 = vadd.f32 0.0, %v1480
    %1482 = vdwg.mxu0
    %1483 = vmatpush.msra.mxu0 %v342
    %1484 = vmatpush.msra.mxu0 %v334
    %1485 = vmatpush.msra.mxu0 %v326
    %1486 = vmatpush.msra.mxu0 %v318
    %1487 = vmatpush.msra.mxu0 %v310
    %1488 = vmatpush.msra.mxu0 %v302
    %1489 = vmatpush.msra.mxu0 %v294
    %1490 = vmatpush.msra.mxu0 %v286
    %1491 = vmatpush.msra.mxu0 %v278
    %1492 = vmatpush.msra.mxu0 %v270
    %1493 = vmatpush.msra.mxu0 %v262
    %1494 = vmatpush.msra.mxu0 %v254
    %1495 = vmatpush.msra.mxu0 %v246
    %1496 = vmatpush.msra.mxu0 %v238
    %1497 = vmatpush.msra.mxu0 %v230
    %1498 = vmatpush.msra.mxu0 %v222
    %1499 = vmatmul.f32.gmra.mxu0 %v1128
    %v1500 = vpop.f32.mrf.mxu0
    %v1501 = vadd.f32 %v1481, %v1500
    %1502 = vdwg.mxu0
    %1503 = vmatpush.msra.mxu0 %v470
    %1504 = vmatpush.msra.mxu0 %v462
    %1505 = vmatpush.msra.mxu0 %v454
    %1506 = vmatpush.msra.mxu0 %v446
    %1507 = vmatpush.msra.mxu0 %v438
    %1508 = vmatpush.msra.mxu0 %v430
    %1509 = vmatpush.msra.mxu0 %v422
    %1510 = vmatpush.msra.mxu0 %v414
    %1511 = vmatpush.msra.mxu0 %v406
    %1512 = vmatpush.msra.mxu0 %v398
    %1513 = vmatpush.msra.mxu0 %v390
    %1514 = vmatpush.msra.mxu0 %v382
    %1515 = vmatpush.msra.mxu0 %v374
    %1516 = vmatpush.msra.mxu0 %v366
    %1517 = vmatpush.msra.mxu0 %v358
    %1518 = vmatpush.msra.mxu0 %v350
    %1519 = vmatmul.f32.gmra.mxu0 %v1129
    %v1520 = vpop.f32.mrf.mxu0
    %v1521 = vadd.f32 %v1501, %v1520
    %1522 = vdwg.mxu0
    %1523 = vmatpush.msra.mxu0 %v598
    %1524 = vmatpush.msra.mxu0 %v590
    %1525 = vmatpush.msra.mxu0 %v582
    %1526 = vmatpush.msra.mxu0 %v574
    %1527 = vmatpush.msra.mxu0 %v566
    %1528 = vmatpush.msra.mxu0 %v558
    %1529 = vmatpush.msra.mxu0 %v550
    %1530 = vmatpush.msra.mxu0 %v542
    %1531 = vmatpush.msra.mxu0 %v534
    %1532 = vmatpush.msra.mxu0 %v526
    %1533 = vmatpush.msra.mxu0 %v518
    %1534 = vmatpush.msra.mxu0 %v510
    %1535 = vmatpush.msra.mxu0 %v502
    %1536 = vmatpush.msra.mxu0 %v494
    %1537 = vmatpush.msra.mxu0 %v486
    %1538 = vmatpush.msra.mxu0 %v478
    %1539 = vmatmul.f32.gmra.mxu0 %v1130
    %v1540 = vpop.f32.mrf.mxu0
    %v1541 = vadd.f32 %v1521, %v1540
    %1542 = vdwg.mxu0
    %1543 = vmatpush.msra.mxu0 %v726
    %1544 = vmatpush.msra.mxu0 %v718
    %1545 = vmatpush.msra.mxu0 %v710
    %1546 = vmatpush.msra.mxu0 %v702
    %1547 = vmatpush.msra.mxu0 %v694
    %1548 = vmatpush.msra.mxu0 %v686
    %1549 = vmatpush.msra.mxu0 %v678
    %1550 = vmatpush.msra.mxu0 %v670
    %1551 = vmatpush.msra.mxu0 %v662
    %1552 = vmatpush.msra.mxu0 %v654
    %1553 = vmatpush.msra.mxu0 %v646
    %1554 = vmatpush.msra.mxu0 %v638
    %1555 = vmatpush.msra.mxu0 %v630
    %1556 = vmatpush.msra.mxu0 %v622
    %1557 = vmatpush.msra.mxu0 %v614
    %1558 = vmatpush.msra.mxu0 %v606
    %1559 = vmatmul.f32.gmra.mxu0 %v1131
    %v1560 = vpop.f32.mrf.mxu0
    %v1561 = vadd.f32 %v1541, %v1560
    %1562 = vdwg.mxu0
    %1563 = vmatpush.msra.mxu0 %v854
    %1564 = vmatpush.msra.mxu0 %v846
    %1565 = vmatpush.msra.mxu0 %v838
    %1566 = vmatpush.msra.mxu0 %v830
    %1567 = vmatpush.msra.mxu0 %v822
    %1568 = vmatpush.msra.mxu0 %v814
    %1569 = vmatpush.msra.mxu0 %v806
    %1570 = vmatpush.msra.mxu0 %v798
    %1571 = vmatpush.msra.mxu0 %v790
    %1572 = vmatpush.msra.mxu0 %v782
    %1573 = vmatpush.msra.mxu0 %v774
    %1574 = vmatpush.msra.mxu0 %v766
    %1575 = vmatpush.msra.mxu0 %v758
    %1576 = vmatpush.msra.mxu0 %v750
    %1577 = vmatpush.msra.mxu0 %v742
    %1578 = vmatpush.msra.mxu0 %v734
    %1579 = vmatmul.f32.gmra.mxu0 %v1132
    %v1580 = vpop.f32.mrf.mxu0
    %v1581 = vadd.f32 %v1561, %v1580
    %1582 = vdwg.mxu0
    %1583 = vmatpush.msra.mxu0 %v982
    %1584 = vmatpush.msra.mxu0 %v974
    %1585 = vmatpush.msra.mxu0 %v966
    %1586 = vmatpush.msra.mxu0 %v958
    %1587 = vmatpush.msra.mxu0 %v950
    %1588 = vmatpush.msra.mxu0 %v942
    %1589 = vmatpush.msra.mxu0 %v934
    %1590 = vmatpush.msra.mxu0 %v926
    %1591 = vmatpush.msra.mxu0 %v918
    %1592 = vmatpush.msra.mxu0 %v910
    %1593 = vmatpush.msra.mxu0 %v902
    %1594 = vmatpush.msra.mxu0 %v894
    %1595 = vmatpush.msra.mxu0 %v886
    %1596 = vmatpush.msra.mxu0 %v878
    %1597 = vmatpush.msra.mxu0 %v870
    %1598 = vmatpush.msra.mxu0 %v862
    %1599 = vmatmul.f32.gmra.mxu0 %v1133
    %v1600 = vpop.f32.mrf.mxu0
    %v1601 = vadd.f32 %v1581, %v1600
    %1602 = vdwg.mxu0
    %1603 = vmatpush.msra.mxu0 %v1110
    %1604 = vmatpush.msra.mxu0 %v1102
    %1605 = vmatpush.msra.mxu0 %v1094
    %1606 = vmatpush.msra.mxu0 %v1086
    %1607 = vmatpush.msra.mxu0 %v1078
    %1608 = vmatpush.msra.mxu0 %v1070
    %1609 = vmatpush.msra.mxu0 %v1062
    %1610 = vmatpush.msra.mxu0 %v1054
    %1611 = vmatpush.msra.mxu0 %v1046
    %1612 = vmatpush.msra.mxu0 %v1038
    %1613 = vmatpush.msra.mxu0 %v1030
    %1614 = vmatpush.msra.mxu0 %v1022
    %1615 = vmatpush.msra.mxu0 %v1014
    %1616 = vmatpush.msra.mxu0 %v1006
    %1617 = vmatpush.msra.mxu0 %v998
    %1618 = vmatpush.msra.mxu0 %v990
    %1619 = vmatmul.f32.gmra.mxu0 %v1134
    %v1620 = vpop.f32.mrf.mxu0
    %v1621 = vadd.f32 %v1601, %v1620
    %1622 = vdwg.mxu0
    %1623 = vmatpush.msra.mxu0 %v215
    %1624 = vmatpush.msra.mxu0 %v207
    %1625 = vmatpush.msra.mxu0 %v199
    %1626 = vmatpush.msra.mxu0 %v191
    %1627 = vmatpush.msra.mxu0 %v183
    %1628 = vmatpush.msra.mxu0 %v175
    %1629 = vmatpush.msra.mxu0 %v167
    %1630 = vmatpush.msra.mxu0 %v159
    %1631 = vmatpush.msra.mxu0 %v151
    %1632 = vmatpush.msra.mxu0 %v143
    %1633 = vmatpush.msra.mxu0 %v135
    %1634 = vmatpush.msra.mxu0 %v127
    %1635 = vmatpush.msra.mxu0 %v119
    %1636 = vmatpush.msra.mxu0 %v111
    %1637 = vmatpush.msra.mxu0 %v103
    %1638 = vmatpush.msra.mxu0 %v95
    %1639 = vmatmul.f32.gmra.mxu0 %v1127
    %v1640 = vpop.f32.mrf.mxu0
    %v1641 = vadd.f32 0.0, %v1640
    %1642 = vdwg.mxu0
    %1643 = vmatpush.msra.mxu0 %v343
    %1644 = vmatpush.msra.mxu0 %v335
    %1645 = vmatpush.msra.mxu0 %v327
    %1646 = vmatpush.msra.mxu0 %v319
    %1647 = vmatpush.msra.mxu0 %v311
    %1648 = vmatpush.msra.mxu0 %v303
    %1649 = vmatpush.msra.mxu0 %v295
    %1650 = vmatpush.msra.mxu0 %v287
    %1651 = vmatpush.msra.mxu0 %v279
    %1652 = vmatpush.msra.mxu0 %v271
    %1653 = vmatpush.msra.mxu0 %v263
    %1654 = vmatpush.msra.mxu0 %v255
    %1655 = vmatpush.msra.mxu0 %v247
    %1656 = vmatpush.msra.mxu0 %v239
    %1657 = vmatpush.msra.mxu0 %v231
    %1658 = vmatpush.msra.mxu0 %v223
    %1659 = vmatmul.f32.gmra.mxu0 %v1128
    %v1660 = vpop.f32.mrf.mxu0
    %v1661 = vadd.f32 %v1641, %v1660
    %1662 = vdwg.mxu0
    %1663 = vmatpush.msra.mxu0 %v471
    %1664 = vmatpush.msra.mxu0 %v463
    %1665 = vmatpush.msra.mxu0 %v455
    %1666 = vmatpush.msra.mxu0 %v447
    %1667 = vmatpush.msra.mxu0 %v439
    %1668 = vmatpush.msra.mxu0 %v431
    %1669 = vmatpush.msra.mxu0 %v423
    %1670 = vmatpush.msra.mxu0 %v415
    %1671 = vmatpush.msra.mxu0 %v407
    %1672 = vmatpush.msra.mxu0 %v399
    %1673 = vmatpush.msra.mxu0 %v391
    %1674 = vmatpush.msra.mxu0 %v383
    %1675 = vmatpush.msra.mxu0 %v375
    %1676 = vmatpush.msra.mxu0 %v367
    %1677 = vmatpush.msra.mxu0 %v359
    %1678 = vmatpush.msra.mxu0 %v351
    %1679 = vmatmul.f32.gmra.mxu0 %v1129
    %v1680 = vpop.f32.mrf.mxu0
    %v1681 = vadd.f32 %v1661, %v1680
    %1682 = vdwg.mxu0
    %1683 = vmatpush.msra.mxu0 %v599
    %1684 = vmatpush.msra.mxu0 %v591
    %1685 = vmatpush.msra.mxu0 %v583
    %1686 = vmatpush.msra.mxu0 %v575
    %1687 = vmatpush.msra.mxu0 %v567
    %1688 = vmatpush.msra.mxu0 %v559
    %1689 = vmatpush.msra.mxu0 %v551
    %1690 = vmatpush.msra.mxu0 %v543
    %1691 = vmatpush.msra.mxu0 %v535
    %1692 = vmatpush.msra.mxu0 %v527
    %1693 = vmatpush.msra.mxu0 %v519
    %1694 = vmatpush.msra.mxu0 %v511
    %1695 = vmatpush.msra.mxu0 %v503
    %1696 = vmatpush.msra.mxu0 %v495
    %1697 = vmatpush.msra.mxu0 %v487
    %1698 = vmatpush.msra.mxu0 %v479
    %1699 = vmatmul.f32.gmra.mxu0 %v1130
    %v1700 = vpop.f32.mrf.mxu0
    %v1701 = vadd.f32 %v1681, %v1700
    %1702 = vdwg.mxu0
    %1703 = vmatpush.msra.mxu0 %v727
    %1704 = vmatpush.msra.mxu0 %v719
    %1705 = vmatpush.msra.mxu0 %v711
    %1706 = vmatpush.msra.mxu0 %v703
    %1707 = vmatpush.msra.mxu0 %v695
    %1708 = vmatpush.msra.mxu0 %v687
    %1709 = vmatpush.msra.mxu0 %v679
    %1710 = vmatpush.msra.mxu0 %v671
    %1711 = vmatpush.msra.mxu0 %v663
    %1712 = vmatpush.msra.mxu0 %v655
    %1713 = vmatpush.msra.mxu0 %v647
    %1714 = vmatpush.msra.mxu0 %v639
    %1715 = vmatpush.msra.mxu0 %v631
    %1716 = vmatpush.msra.mxu0 %v623
    %1717 = vmatpush.msra.mxu0 %v615
    %1718 = vmatpush.msra.mxu0 %v607
    %1719 = vmatmul.f32.gmra.mxu0 %v1131
    %v1720 = vpop.f32.mrf.mxu0
    %v1721 = vadd.f32 %v1701, %v1720
    %1722 = vdwg.mxu0
    %1723 = vmatpush.msra.mxu0 %v855
    %1724 = vmatpush.msra.mxu0 %v847
    %1725 = vmatpush.msra.mxu0 %v839
    %1726 = vmatpush.msra.mxu0 %v831
    %1727 = vmatpush.msra.mxu0 %v823
    %1728 = vmatpush.msra.mxu0 %v815
    %1729 = vmatpush.msra.mxu0 %v807
    %1730 = vmatpush.msra.mxu0 %v799
    %1731 = vmatpush.msra.mxu0 %v791
    %1732 = vmatpush.msra.mxu0 %v783
    %1733 = vmatpush.msra.mxu0 %v775
    %1734 = vmatpush.msra.mxu0 %v767
    %1735 = vmatpush.msra.mxu0 %v759
    %1736 = vmatpush.msra.mxu0 %v751
    %1737 = vmatpush.msra.mxu0 %v743
    %1738 = vmatpush.msra.mxu0 %v735
    %1739 = vmatmul.f32.gmra.mxu0 %v1132
    %v1740 = vpop.f32.mrf.mxu0
    %v1741 = vadd.f32 %v1721, %v1740
    %1742 = vdwg.mxu0
    %1743 = vmatpush.msra.mxu0 %v983
    %1744 = vmatpush.msra.mxu0 %v975
    %1745 = vmatpush.msra.mxu0 %v967
    %1746 = vmatpush.msra.mxu0 %v959
    %1747 = vmatpush.msra.mxu0 %v951
    %1748 = vmatpush.msra.mxu0 %v943
    %1749 = vmatpush.msra.mxu0 %v935
    %1750 = vmatpush.msra.mxu0 %v927
    %1751 = vmatpush.msra.mxu0 %v919
    %1752 = vmatpush.msra.mxu0 %v911
    %1753 = vmatpush.msra.mxu0 %v903
    %1754 = vmatpush.msra.mxu0 %v895
    %1755 = vmatpush.msra.mxu0 %v887
    %1756 = vmatpush.msra.mxu0 %v879
    %1757 = vmatpush.msra.mxu0 %v871
    %1758 = vmatpush.msra.mxu0 %v863
    %1759 = vmatmul.f32.gmra.mxu0 %v1133
    %v1760 = vpop.f32.mrf.mxu0
    %v1761 = vadd.f32 %v1741, %v1760
    %1762 = vdwg.mxu0
    %1763 = vmatpush.msra.mxu0 %v1111
    %1764 = vmatpush.msra.mxu0 %v1103
    %1765 = vmatpush.msra.mxu0 %v1095
    %1766 = vmatpush.msra.mxu0 %v1087
    %1767 = vmatpush.msra.mxu0 %v1079
    %1768 = vmatpush.msra.mxu0 %v1071
    %1769 = vmatpush.msra.mxu0 %v1063
    %1770 = vmatpush.msra.mxu0 %v1055
    %1771 = vmatpush.msra.mxu0 %v1047
    %1772 = vmatpush.msra.mxu0 %v1039
    %1773 = vmatpush.msra.mxu0 %v1031
    %1774 = vmatpush.msra.mxu0 %v1023
    %1775 = vmatpush.msra.mxu0 %v1015
    %1776 = vmatpush.msra.mxu0 %v1007
    %1777 = vmatpush.msra.mxu0 %v999
    %1778 = vmatpush.msra.mxu0 %v991
    %1779 = vmatmul.f32.gmra.mxu0 %v1134
    %v1780 = vpop.f32.mrf.mxu0
    %v1781 = vadd.f32 %v1761, %v1780
    %1782 = vdwg.mxu0
    %1783 = vmatpush.msra.mxu0 %v216
    %1784 = vmatpush.msra.mxu0 %v208
    %1785 = vmatpush.msra.mxu0 %v200
    %1786 = vmatpush.msra.mxu0 %v192
    %1787 = vmatpush.msra.mxu0 %v184
    %1788 = vmatpush.msra.mxu0 %v176
    %1789 = vmatpush.msra.mxu0 %v168
    %1790 = vmatpush.msra.mxu0 %v160
    %1791 = vmatpush.msra.mxu0 %v152
    %1792 = vmatpush.msra.mxu0 %v144
    %1793 = vmatpush.msra.mxu0 %v136
    %1794 = vmatpush.msra.mxu0 %v128
    %1795 = vmatpush.msra.mxu0 %v120
    %1796 = vmatpush.msra.mxu0 %v112
    %1797 = vmatpush.msra.mxu0 %v104
    %1798 = vmatpush.msra.mxu0 %v96
    %1799 = vmatmul.f32.gmra.mxu0 %v1127
    %v1800 = vpop.f32.mrf.mxu0
    %v1801 = vadd.f32 0.0, %v1800
    %1802 = vdwg.mxu0
    %1803 = vmatpush.msra.mxu0 %v344
    %1804 = vmatpush.msra.mxu0 %v336
    %1805 = vmatpush.msra.mxu0 %v328
    %1806 = vmatpush.msra.mxu0 %v320
    %1807 = vmatpush.msra.mxu0 %v312
    %1808 = vmatpush.msra.mxu0 %v304
    %1809 = vmatpush.msra.mxu0 %v296
    %1810 = vmatpush.msra.mxu0 %v288
    %1811 = vmatpush.msra.mxu0 %v280
    %1812 = vmatpush.msra.mxu0 %v272
    %1813 = vmatpush.msra.mxu0 %v264
    %1814 = vmatpush.msra.mxu0 %v256
    %1815 = vmatpush.msra.mxu0 %v248
    %1816 = vmatpush.msra.mxu0 %v240
    %1817 = vmatpush.msra.mxu0 %v232
    %1818 = vmatpush.msra.mxu0 %v224
    %1819 = vmatmul.f32.gmra.mxu0 %v1128
    %v1820 = vpop.f32.mrf.mxu0
    %v1821 = vadd.f32 %v1801, %v1820
    %1822 = vdwg.mxu0
    %1823 = vmatpush.msra.mxu0 %v472
    %1824 = vmatpush.msra.mxu0 %v464
    %1825 = vmatpush.msra.mxu0 %v456
    %1826 = vmatpush.msra.mxu0 %v448
    %1827 = vmatpush.msra.mxu0 %v440
    %1828 = vmatpush.msra.mxu0 %v432
    %1829 = vmatpush.msra.mxu0 %v424
    %1830 = vmatpush.msra.mxu0 %v416
    %1831 = vmatpush.msra.mxu0 %v408
    %1832 = vmatpush.msra.mxu0 %v400
    %1833 = vmatpush.msra.mxu0 %v392
    %1834 = vmatpush.msra.mxu0 %v384
    %1835 = vmatpush.msra.mxu0 %v376
    %1836 = vmatpush.msra.mxu0 %v368
    %1837 = vmatpush.msra.mxu0 %v360
    %1838 = vmatpush.msra.mxu0 %v352
    %1839 = vmatmul.f32.gmra.mxu0 %v1129
    %v1840 = vpop.f32.mrf.mxu0
    %v1841 = vadd.f32 %v1821, %v1840
    %1842 = vdwg.mxu0
    %1843 = vmatpush.msra.mxu0 %v600
    %1844 = vmatpush.msra.mxu0 %v592
    %1845 = vmatpush.msra.mxu0 %v584
    %1846 = vmatpush.msra.mxu0 %v576
    %1847 = vmatpush.msra.mxu0 %v568
    %1848 = vmatpush.msra.mxu0 %v560
    %1849 = vmatpush.msra.mxu0 %v552
    %1850 = vmatpush.msra.mxu0 %v544
    %1851 = vmatpush.msra.mxu0 %v536
    %1852 = vmatpush.msra.mxu0 %v528
    %1853 = vmatpush.msra.mxu0 %v520
    %1854 = vmatpush.msra.mxu0 %v512
    %1855 = vmatpush.msra.mxu0 %v504
    %1856 = vmatpush.msra.mxu0 %v496
    %1857 = vmatpush.msra.mxu0 %v488
    %1858 = vmatpush.msra.mxu0 %v480
    %1859 = vmatmul.f32.gmra.mxu0 %v1130
    %v1860 = vpop.f32.mrf.mxu0
    %v1861 = vadd.f32 %v1841, %v1860
    %1862 = vdwg.mxu0
    %1863 = vmatpush.msra.mxu0 %v728
    %1864 = vmatpush.msra.mxu0 %v720
    %1865 = vmatpush.msra.mxu0 %v712
    %1866 = vmatpush.msra.mxu0 %v704
    %1867 = vmatpush.msra.mxu0 %v696
    %1868 = vmatpush.msra.mxu0 %v688
    %1869 = vmatpush.msra.mxu0 %v680
    %1870 = vmatpush.msra.mxu0 %v672
    %1871 = vmatpush.msra.mxu0 %v664
    %1872 = vmatpush.msra.mxu0 %v656
    %1873 = vmatpush.msra.mxu0 %v648
    %1874 = vmatpush.msra.mxu0 %v640
    %1875 = vmatpush.msra.mxu0 %v632
    %1876 = vmatpush.msra.mxu0 %v624
    %1877 = vmatpush.msra.mxu0 %v616
    %1878 = vmatpush.msra.mxu0 %v608
    %1879 = vmatmul.f32.gmra.mxu0 %v1131
    %v1880 = vpop.f32.mrf.mxu0
    %v1881 = vadd.f32 %v1861, %v1880
    %1882 = vdwg.mxu0
    %1883 = vmatpush.msra.mxu0 %v856
    %1884 = vmatpush.msra.mxu0 %v848
    %1885 = vmatpush.msra.mxu0 %v840
    %1886 = vmatpush.msra.mxu0 %v832
    %1887 = vmatpush.msra.mxu0 %v824
    %1888 = vmatpush.msra.mxu0 %v816
    %1889 = vmatpush.msra.mxu0 %v808
    %1890 = vmatpush.msra.mxu0 %v800
    %1891 = vmatpush.msra.mxu0 %v792
    %1892 = vmatpush.msra.mxu0 %v784
    %1893 = vmatpush.msra.mxu0 %v776
    %1894 = vmatpush.msra.mxu0 %v768
    %1895 = vmatpush.msra.mxu0 %v760
    %1896 = vmatpush.msra.mxu0 %v752
    %1897 = vmatpush.msra.mxu0 %v744
    %1898 = vmatpush.msra.mxu0 %v736
    %1899 = vmatmul.f32.gmra.mxu0 %v1132
    %v1900 = vpop.f32.mrf.mxu0
    %v1901 = vadd.f32 %v1881, %v1900
    %1902 = vdwg.mxu0
    %1903 = vmatpush.msra.mxu0 %v984
    %1904 = vmatpush.msra.mxu0 %v976
    %1905 = vmatpush.msra.mxu0 %v968
    %1906 = vmatpush.msra.mxu0 %v960
    %1907 = vmatpush.msra.mxu0 %v952
    %1908 = vmatpush.msra.mxu0 %v944
    %1909 = vmatpush.msra.mxu0 %v936
    %1910 = vmatpush.msra.mxu0 %v928
    %1911 = vmatpush.msra.mxu0 %v920
    %1912 = vmatpush.msra.mxu0 %v912
    %1913 = vmatpush.msra.mxu0 %v904
    %1914 = vmatpush.msra.mxu0 %v896
    %1915 = vmatpush.msra.mxu0 %v888
    %1916 = vmatpush.msra.mxu0 %v880
    %1917 = vmatpush.msra.mxu0 %v872
    %1918 = vmatpush.msra.mxu0 %v864
    %1919 = vmatmul.f32.gmra.mxu0 %v1133
    %v1920 = vpop.f32.mrf.mxu0
    %v1921 = vadd.f32 %v1901, %v1920
    %1922 = vdwg.mxu0
    %1923 = vmatpush.msra.mxu0 %v1112
    %1924 = vmatpush.msra.mxu0 %v1104
    %1925 = vmatpush.msra.mxu0 %v1096
    %1926 = vmatpush.msra.mxu0 %v1088
    %1927 = vmatpush.msra.mxu0 %v1080
    %1928 = vmatpush.msra.mxu0 %v1072
    %1929 = vmatpush.msra.mxu0 %v1064
    %1930 = vmatpush.msra.mxu0 %v1056
    %1931 = vmatpush.msra.mxu0 %v1048
    %1932 = vmatpush.msra.mxu0 %v1040
    %1933 = vmatpush.msra.mxu0 %v1032
    %1934 = vmatpush.msra.mxu0 %v1024
    %1935 = vmatpush.msra.mxu0 %v1016
    %1936 = vmatpush.msra.mxu0 %v1008
    %1937 = vmatpush.msra.mxu0 %v1000
    %1938 = vmatpush.msra.mxu0 %v992
    %1939 = vmatmul.f32.gmra.mxu0 %v1134
    %v1940 = vpop.f32.mrf.mxu0
    %v1941 = vadd.f32 %v1921, %v1940
    %1942 = vdwg.mxu0
    %1943 = vmatpush.msra.mxu0 %v217
    %1944 = vmatpush.msra.mxu0 %v209
    %1945 = vmatpush.msra.mxu0 %v201
    %1946 = vmatpush.msra.mxu0 %v193
    %1947 = vmatpush.msra.mxu0 %v185
    %1948 = vmatpush.msra.mxu0 %v177
    %1949 = vmatpush.msra.mxu0 %v169
    %1950 = vmatpush.msra.mxu0 %v161
    %1951 = vmatpush.msra.mxu0 %v153
    %1952 = vmatpush.msra.mxu0 %v145
    %1953 = vmatpush.msra.mxu0 %v137
    %1954 = vmatpush.msra.mxu0 %v129
    %1955 = vmatpush.msra.mxu0 %v121
    %1956 = vmatpush.msra.mxu0 %v113
    %1957 = vmatpush.msra.mxu0 %v105
    %1958 = vmatpush.msra.mxu0 %v97
    %1959 = vmatmul.f32.gmra.mxu0 %v1127
    %v1960 = vpop.f32.mrf.mxu0
    %v1961 = vadd.f32 0.0, %v1960
    %1962 = vdwg.mxu0
    %1963 = vmatpush.msra.mxu0 %v345
    %1964 = vmatpush.msra.mxu0 %v337
    %1965 = vmatpush.msra.mxu0 %v329
    %1966 = vmatpush.msra.mxu0 %v321
    %1967 = vmatpush.msra.mxu0 %v313
    %1968 = vmatpush.msra.mxu0 %v305
    %1969 = vmatpush.msra.mxu0 %v297
    %1970 = vmatpush.msra.mxu0 %v289
    %1971 = vmatpush.msra.mxu0 %v281
    %1972 = vmatpush.msra.mxu0 %v273
    %1973 = vmatpush.msra.mxu0 %v265
    %1974 = vmatpush.msra.mxu0 %v257
    %1975 = vmatpush.msra.mxu0 %v249
    %1976 = vmatpush.msra.mxu0 %v241
    %1977 = vmatpush.msra.mxu0 %v233
    %1978 = vmatpush.msra.mxu0 %v225
    %1979 = vmatmul.f32.gmra.mxu0 %v1128
    %v1980 = vpop.f32.mrf.mxu0
    %v1981 = vadd.f32 %v1961, %v1980
    %1982 = vdwg.mxu0
    %1983 = vmatpush.msra.mxu0 %v473
    %1984 = vmatpush.msra.mxu0 %v465
    %1985 = vmatpush.msra.mxu0 %v457
    %1986 = vmatpush.msra.mxu0 %v449
    %1987 = vmatpush.msra.mxu0 %v441
    %1988 = vmatpush.msra.mxu0 %v433
    %1989 = vmatpush.msra.mxu0 %v425
    %1990 = vmatpush.msra.mxu0 %v417
    %1991 = vmatpush.msra.mxu0 %v409
    %1992 = vmatpush.msra.mxu0 %v401
    %1993 = vmatpush.msra.mxu0 %v393
    %1994 = vmatpush.msra.mxu0 %v385
    %1995 = vmatpush.msra.mxu0 %v377
    %1996 = vmatpush.msra.mxu0 %v369
    %1997 = vmatpush.msra.mxu0 %v361
    %1998 = vmatpush.msra.mxu0 %v353
    %1999 = vmatmul.f32.gmra.mxu0 %v1129
    %v2000 = vpop.f32.mrf.mxu0
    %v2001 = vadd.f32 %v1981, %v2000
    %2002 = vdwg.mxu0
    %2003 = vmatpush.msra.mxu0 %v601
    %2004 = vmatpush.msra.mxu0 %v593
    %2005 = vmatpush.msra.mxu0 %v585
    %2006 = vmatpush.msra.mxu0 %v577
    %2007 = vmatpush.msra.mxu0 %v569
    %2008 = vmatpush.msra.mxu0 %v561
    %2009 = vmatpush.msra.mxu0 %v553
    %2010 = vmatpush.msra.mxu0 %v545
    %2011 = vmatpush.msra.mxu0 %v537
    %2012 = vmatpush.msra.mxu0 %v529
    %2013 = vmatpush.msra.mxu0 %v521
    %2014 = vmatpush.msra.mxu0 %v513
    %2015 = vmatpush.msra.mxu0 %v505
    %2016 = vmatpush.msra.mxu0 %v497
    %2017 = vmatpush.msra.mxu0 %v489
    %2018 = vmatpush.msra.mxu0 %v481
    %2019 = vmatmul.f32.gmra.mxu0 %v1130
    %v2020 = vpop.f32.mrf.mxu0
    %v2021 = vadd.f32 %v2001, %v2020
    %2022 = vdwg.mxu0
    %2023 = vmatpush.msra.mxu0 %v729
    %2024 = vmatpush.msra.mxu0 %v721
    %2025 = vmatpush.msra.mxu0 %v713
    %2026 = vmatpush.msra.mxu0 %v705
    %2027 = vmatpush.msra.mxu0 %v697
    %2028 = vmatpush.msra.mxu0 %v689
    %2029 = vmatpush.msra.mxu0 %v681
    %2030 = vmatpush.msra.mxu0 %v673
    %2031 = vmatpush.msra.mxu0 %v665
    %2032 = vmatpush.msra.mxu0 %v657
    %2033 = vmatpush.msra.mxu0 %v649
    %2034 = vmatpush.msra.mxu0 %v641
    %2035 = vmatpush.msra.mxu0 %v633
    %2036 = vmatpush.msra.mxu0 %v625
    %2037 = vmatpush.msra.mxu0 %v617
    %2038 = vmatpush.msra.mxu0 %v609
    %2039 = vmatmul.f32.gmra.mxu0 %v1131
    %v2040 = vpop.f32.mrf.mxu0
    %v2041 = vadd.f32 %v2021, %v2040
    %2042 = vdwg.mxu0
    %2043 = vmatpush.msra.mxu0 %v857
    %2044 = vmatpush.msra.mxu0 %v849
    %2045 = vmatpush.msra.mxu0 %v841
    %2046 = vmatpush.msra.mxu0 %v833
    %2047 = vmatpush.msra.mxu0 %v825
    %2048 = vmatpush.msra.mxu0 %v817
    %2049 = vmatpush.msra.mxu0 %v809
    %2050 = vmatpush.msra.mxu0 %v801
    %2051 = vmatpush.msra.mxu0 %v793
    %2052 = vmatpush.msra.mxu0 %v785
    %2053 = vmatpush.msra.mxu0 %v777
    %2054 = vmatpush.msra.mxu0 %v769
    %2055 = vmatpush.msra.mxu0 %v761
    %2056 = vmatpush.msra.mxu0 %v753
    %2057 = vmatpush.msra.mxu0 %v745
    %2058 = vmatpush.msra.mxu0 %v737
    %2059 = vmatmul.f32.gmra.mxu0 %v1132
    %v2060 = vpop.f32.mrf.mxu0
    %v2061 = vadd.f32 %v2041, %v2060
    %2062 = vdwg.mxu0
    %2063 = vmatpush.msra.mxu0 %v985
    %2064 = vmatpush.msra.mxu0 %v977
    %2065 = vmatpush.msra.mxu0 %v969
    %2066 = vmatpush.msra.mxu0 %v961
    %2067 = vmatpush.msra.mxu0 %v953
    %2068 = vmatpush.msra.mxu0 %v945
    %2069 = vmatpush.msra.mxu0 %v937
    %2070 = vmatpush.msra.mxu0 %v929
    %2071 = vmatpush.msra.mxu0 %v921
    %2072 = vmatpush.msra.mxu0 %v913
    %2073 = vmatpush.msra.mxu0 %v905
    %2074 = vmatpush.msra.mxu0 %v897
    %2075 = vmatpush.msra.mxu0 %v889
    %2076 = vmatpush.msra.mxu0 %v881
    %2077 = vmatpush.msra.mxu0 %v873
    %2078 = vmatpush.msra.mxu0 %v865
    %2079 = vmatmul.f32.gmra.mxu0 %v1133
    %v2080 = vpop.f32.mrf.mxu0
    %v2081 = vadd.f32 %v2061, %v2080
    %2082 = vdwg.mxu0
    %2083 = vmatpush.msra.mxu0 %v1113
    %2084 = vmatpush.msra.mxu0 %v1105
    %2085 = vmatpush.msra.mxu0 %v1097
    %2086 = vmatpush.msra.mxu0 %v1089
    %2087 = vmatpush.msra.mxu0 %v1081
    %2088 = vmatpush.msra.mxu0 %v1073
    %2089 = vmatpush.msra.mxu0 %v1065
    %2090 = vmatpush.msra.mxu0 %v1057
    %2091 = vmatpush.msra.mxu0 %v1049
    %2092 = vmatpush.msra.mxu0 %v1041
    %2093 = vmatpush.msra.mxu0 %v1033
    %2094 = vmatpush.msra.mxu0 %v1025
    %2095 = vmatpush.msra.mxu0 %v1017
    %2096 = vmatpush.msra.mxu0 %v1009
    %2097 = vmatpush.msra.mxu0 %v1001
    %2098 = vmatpush.msra.mxu0 %v993
    %2099 = vmatmul.f32.gmra.mxu0 %v1134
    %v2100 = vpop.f32.mrf.mxu0
    %v2101 = vadd.f32 %v2081, %v2100
    %2102 = vdwg.mxu0
    %2103 = vmatpush.msra.mxu0 %v218
    %2104 = vmatpush.msra.mxu0 %v210
    %2105 = vmatpush.msra.mxu0 %v202
    %2106 = vmatpush.msra.mxu0 %v194
    %2107 = vmatpush.msra.mxu0 %v186
    %2108 = vmatpush.msra.mxu0 %v178
    %2109 = vmatpush.msra.mxu0 %v170
    %2110 = vmatpush.msra.mxu0 %v162
    %2111 = vmatpush.msra.mxu0 %v154
    %2112 = vmatpush.msra.mxu0 %v146
    %2113 = vmatpush.msra.mxu0 %v138
    %2114 = vmatpush.msra.mxu0 %v130
    %2115 = vmatpush.msra.mxu0 %v122
    %2116 = vmatpush.msra.mxu0 %v114
    %2117 = vmatpush.msra.mxu0 %v106
    %2118 = vmatpush.msra.mxu0 %v98
    %2119 = vmatmul.f32.gmra.mxu0 %v1127
    %v2120 = vpop.f32.mrf.mxu0
    %v2121 = vadd.f32 0.0, %v2120
    %2122 = vdwg.mxu0
    %2123 = vmatpush.msra.mxu0 %v346
    %2124 = vmatpush.msra.mxu0 %v338
    %2125 = vmatpush.msra.mxu0 %v330
    %2126 = vmatpush.msra.mxu0 %v322
    %2127 = vmatpush.msra.mxu0 %v314
    %2128 = vmatpush.msra.mxu0 %v306
    %2129 = vmatpush.msra.mxu0 %v298
    %2130 = vmatpush.msra.mxu0 %v290
    %2131 = vmatpush.msra.mxu0 %v282
    %2132 = vmatpush.msra.mxu0 %v274
    %2133 = vmatpush.msra.mxu0 %v266
    %2134 = vmatpush.msra.mxu0 %v258
    %2135 = vmatpush.msra.mxu0 %v250
    %2136 = vmatpush.msra.mxu0 %v242
    %2137 = vmatpush.msra.mxu0 %v234
    %2138 = vmatpush.msra.mxu0 %v226
    %2139 = vmatmul.f32.gmra.mxu0 %v1128
    %v2140 = vpop.f32.mrf.mxu0
    %v2141 = vadd.f32 %v2121, %v2140
    %2142 = vdwg.mxu0
    %2143 = vmatpush.msra.mxu0 %v474
    %2144 = vmatpush.msra.mxu0 %v466
    %2145 = vmatpush.msra.mxu0 %v458
    %2146 = vmatpush.msra.mxu0 %v450
    %2147 = vmatpush.msra.mxu0 %v442
    %2148 = vmatpush.msra.mxu0 %v434
    %2149 = vmatpush.msra.mxu0 %v426
    %2150 = vmatpush.msra.mxu0 %v418
    %2151 = vmatpush.msra.mxu0 %v410
    %2152 = vmatpush.msra.mxu0 %v402
    %2153 = vmatpush.msra.mxu0 %v394
    %2154 = vmatpush.msra.mxu0 %v386
    %2155 = vmatpush.msra.mxu0 %v378
    %2156 = vmatpush.msra.mxu0 %v370
    %2157 = vmatpush.msra.mxu0 %v362
    %2158 = vmatpush.msra.mxu0 %v354
    %2159 = vmatmul.f32.gmra.mxu0 %v1129
    %v2160 = vpop.f32.mrf.mxu0
    %v2161 = vadd.f32 %v2141, %v2160
    %2162 = vdwg.mxu0
    %2163 = vmatpush.msra.mxu0 %v602
    %2164 = vmatpush.msra.mxu0 %v594
    %2165 = vmatpush.msra.mxu0 %v586
    %2166 = vmatpush.msra.mxu0 %v578
    %2167 = vmatpush.msra.mxu0 %v570
    %2168 = vmatpush.msra.mxu0 %v562
    %2169 = vmatpush.msra.mxu0 %v554
    %2170 = vmatpush.msra.mxu0 %v546
    %2171 = vmatpush.msra.mxu0 %v538
    %2172 = vmatpush.msra.mxu0 %v530
    %2173 = vmatpush.msra.mxu0 %v522
    %2174 = vmatpush.msra.mxu0 %v514
    %2175 = vmatpush.msra.mxu0 %v506
    %2176 = vmatpush.msra.mxu0 %v498
    %2177 = vmatpush.msra.mxu0 %v490
    %2178 = vmatpush.msra.mxu0 %v482
    %2179 = vmatmul.f32.gmra.mxu0 %v1130
    %v2180 = vpop.f32.mrf.mxu0
    %v2181 = vadd.f32 %v2161, %v2180
    %2182 = vdwg.mxu0
    %2183 = vmatpush.msra.mxu0 %v730
    %2184 = vmatpush.msra.mxu0 %v722
    %2185 = vmatpush.msra.mxu0 %v714
    %2186 = vmatpush.msra.mxu0 %v706
    %2187 = vmatpush.msra.mxu0 %v698
    %2188 = vmatpush.msra.mxu0 %v690
    %2189 = vmatpush.msra.mxu0 %v682
    %2190 = vmatpush.msra.mxu0 %v674
    %2191 = vmatpush.msra.mxu0 %v666
    %2192 = vmatpush.msra.mxu0 %v658
    %2193 = vmatpush.msra.mxu0 %v650
    %2194 = vmatpush.msra.mxu0 %v642
    %2195 = vmatpush.msra.mxu0 %v634
    %2196 = vmatpush.msra.mxu0 %v626
    %2197 = vmatpush.msra.mxu0 %v618
    %2198 = vmatpush.msra.mxu0 %v610
    %2199 = vmatmul.f32.gmra.mxu0 %v1131
    %v2200 = vpop.f32.mrf.mxu0
    %v2201 = vadd.f32 %v2181, %v2200
    %2202 = vdwg.mxu0
    %2203 = vmatpush.msra.mxu0 %v858
    %2204 = vmatpush.msra.mxu0 %v850
    %2205 = vmatpush.msra.mxu0 %v842
    %2206 = vmatpush.msra.mxu0 %v834
    %2207 = vmatpush.msra.mxu0 %v826
    %2208 = vmatpush.msra.mxu0 %v818
    %2209 = vmatpush.msra.mxu0 %v810
    %2210 = vmatpush.msra.mxu0 %v802
    %2211 = vmatpush.msra.mxu0 %v794
    %2212 = vmatpush.msra.mxu0 %v786
    %2213 = vmatpush.msra.mxu0 %v778
    %2214 = vmatpush.msra.mxu0 %v770
    %2215 = vmatpush.msra.mxu0 %v762
    %2216 = vmatpush.msra.mxu0 %v754
    %2217 = vmatpush.msra.mxu0 %v746
    %2218 = vmatpush.msra.mxu0 %v738
    %2219 = vmatmul.f32.gmra.mxu0 %v1132
    %v2220 = vpop.f32.mrf.mxu0
    %v2221 = vadd.f32 %v2201, %v2220
    %2222 = vdwg.mxu0
    %2223 = vmatpush.msra.mxu0 %v986
    %2224 = vmatpush.msra.mxu0 %v978
    %2225 = vmatpush.msra.mxu0 %v970
    %2226 = vmatpush.msra.mxu0 %v962
    %2227 = vmatpush.msra.mxu0 %v954
    %2228 = vmatpush.msra.mxu0 %v946
    %2229 = vmatpush.msra.mxu0 %v938
    %2230 = vmatpush.msra.mxu0 %v930
    %2231 = vmatpush.msra.mxu0 %v922
    %2232 = vmatpush.msra.mxu0 %v914
    %2233 = vmatpush.msra.mxu0 %v906
    %2234 = vmatpush.msra.mxu0 %v898
    %2235 = vmatpush.msra.mxu0 %v890
    %2236 = vmatpush.msra.mxu0 %v882
    %2237 = vmatpush.msra.mxu0 %v874
    %2238 = vmatpush.msra.mxu0 %v866
    %2239 = vmatmul.f32.gmra.mxu0 %v1133
    %v2240 = vpop.f32.mrf.mxu0
    %v2241 = vadd.f32 %v2221, %v2240
    %2242 = vdwg.mxu0
    %2243 = vmatpush.msra.mxu0 %v1114
    %2244 = vmatpush.msra.mxu0 %v1106
    %2245 = vmatpush.msra.mxu0 %v1098
    %2246 = vmatpush.msra.mxu0 %v1090
    %2247 = vmatpush.msra.mxu0 %v1082
    %2248 = vmatpush.msra.mxu0 %v1074
    %2249 = vmatpush.msra.mxu0 %v1066
    %2250 = vmatpush.msra.mxu0 %v1058
    %2251 = vmatpush.msra.mxu0 %v1050
    %2252 = vmatpush.msra.mxu0 %v1042
    %2253 = vmatpush.msra.mxu0 %v1034
    %2254 = vmatpush.msra.mxu0 %v1026
    %2255 = vmatpush.msra.mxu0 %v1018
    %2256 = vmatpush.msra.mxu0 %v1010
    %2257 = vmatpush.msra.mxu0 %v1002
    %2258 = vmatpush.msra.mxu0 %v994
    %2259 = vmatmul.f32.gmra.mxu0 %v1134
    %v2260 = vpop.f32.mrf.mxu0
    %v2261 = vadd.f32 %v2241, %v2260
    %2262 = vdwg.mxu0
    %2263 = vmatpush.msra.mxu0 %v219
    %2264 = vmatpush.msra.mxu0 %v211
    %2265 = vmatpush.msra.mxu0 %v203
    %2266 = vmatpush.msra.mxu0 %v195
    %2267 = vmatpush.msra.mxu0 %v187
    %2268 = vmatpush.msra.mxu0 %v179
    %2269 = vmatpush.msra.mxu0 %v171
    %2270 = vmatpush.msra.mxu0 %v163
    %2271 = vmatpush.msra.mxu0 %v155
    %2272 = vmatpush.msra.mxu0 %v147
    %2273 = vmatpush.msra.mxu0 %v139
    %2274 = vmatpush.msra.mxu0 %v131
    %2275 = vmatpush.msra.mxu0 %v123
    %2276 = vmatpush.msra.mxu0 %v115
    %2277 = vmatpush.msra.mxu0 %v107
    %2278 = vmatpush.msra.mxu0 %v99
    %2279 = vmatmul.f32.gmra.mxu0 %v1127
    %v2280 = vpop.f32.mrf.mxu0
    %v2281 = vadd.f32 0.0, %v2280
    %2282 = vdwg.mxu0
    %2283 = vmatpush.msra.mxu0 %v347
    %2284 = vmatpush.msra.mxu0 %v339
    %2285 = vmatpush.msra.mxu0 %v331
    %2286 = vmatpush.msra.mxu0 %v323
    %2287 = vmatpush.msra.mxu0 %v315
    %2288 = vmatpush.msra.mxu0 %v307
    %2289 = vmatpush.msra.mxu0 %v299
    %2290 = vmatpush.msra.mxu0 %v291
    %2291 = vmatpush.msra.mxu0 %v283
    %2292 = vmatpush.msra.mxu0 %v275
    %2293 = vmatpush.msra.mxu0 %v267
    %2294 = vmatpush.msra.mxu0 %v259
    %2295 = vmatpush.msra.mxu0 %v251
    %2296 = vmatpush.msra.mxu0 %v243
    %2297 = vmatpush.msra.mxu0 %v235
    %2298 = vmatpush.msra.mxu0 %v227
    %2299 = vmatmul.f32.gmra.mxu0 %v1128
    %v2300 = vpop.f32.mrf.mxu0
    %v2301 = vadd.f32 %v2281, %v2300
    %2302 = vdwg.mxu0
    %2303 = vmatpush.msra.mxu0 %v475
    %2304 = vmatpush.msra.mxu0 %v467
    %2305 = vmatpush.msra.mxu0 %v459
    %2306 = vmatpush.msra.mxu0 %v451
    %2307 = vmatpush.msra.mxu0 %v443
    %2308 = vmatpush.msra.mxu0 %v435
    %2309 = vmatpush.msra.mxu0 %v427
    %2310 = vmatpush.msra.mxu0 %v419
    %2311 = vmatpush.msra.mxu0 %v411
    %2312 = vmatpush.msra.mxu0 %v403
    %2313 = vmatpush.msra.mxu0 %v395
    %2314 = vmatpush.msra.mxu0 %v387
    %2315 = vmatpush.msra.mxu0 %v379
    %2316 = vmatpush.msra.mxu0 %v371
    %2317 = vmatpush.msra.mxu0 %v363
    %2318 = vmatpush.msra.mxu0 %v355
    %2319 = vmatmul.f32.gmra.mxu0 %v1129
    %v2320 = vpop.f32.mrf.mxu0
    %v2321 = vadd.f32 %v2301, %v2320
    %2322 = vdwg.mxu0
    %2323 = vmatpush.msra.mxu0 %v603
    %2324 = vmatpush.msra.mxu0 %v595
    %2325 = vmatpush.msra.mxu0 %v587
    %2326 = vmatpush.msra.mxu0 %v579
    %2327 = vmatpush.msra.mxu0 %v571
    %2328 = vmatpush.msra.mxu0 %v563
    %2329 = vmatpush.msra.mxu0 %v555
    %2330 = vmatpush.msra.mxu0 %v547
    %2331 = vmatpush.msra.mxu0 %v539
    %2332 = vmatpush.msra.mxu0 %v531
    %2333 = vmatpush.msra.mxu0 %v523
    %2334 = vmatpush.msra.mxu0 %v515
    %2335 = vmatpush.msra.mxu0 %v507
    %2336 = vmatpush.msra.mxu0 %v499
    %2337 = vmatpush.msra.mxu0 %v491
    %2338 = vmatpush.msra.mxu0 %v483
    %2339 = vmatmul.f32.gmra.mxu0 %v1130
    %v2340 = vpop.f32.mrf.mxu0
    %v2341 = vadd.f32 %v2321, %v2340
    %2342 = vdwg.mxu0
    %2343 = vmatpush.msra.mxu0 %v731
    %2344 = vmatpush.msra.mxu0 %v723
    %2345 = vmatpush.msra.mxu0 %v715
    %2346 = vmatpush.msra.mxu0 %v707
    %2347 = vmatpush.msra.mxu0 %v699
    %2348 = vmatpush.msra.mxu0 %v691
    %2349 = vmatpush.msra.mxu0 %v683
    %2350 = vmatpush.msra.mxu0 %v675
    %2351 = vmatpush.msra.mxu0 %v667
    %2352 = vmatpush.msra.mxu0 %v659
    %2353 = vmatpush.msra.mxu0 %v651
    %2354 = vmatpush.msra.mxu0 %v643
    %2355 = vmatpush.msra.mxu0 %v635
    %2356 = vmatpush.msra.mxu0 %v627
    %2357 = vmatpush.msra.mxu0 %v619
    %2358 = vmatpush.msra.mxu0 %v611
    %2359 = vmatmul.f32.gmra.mxu0 %v1131
    %v2360 = vpop.f32.mrf.mxu0
    %v2361 = vadd.f32 %v2341, %v2360
    %2362 = vdwg.mxu0
    %2363 = vmatpush.msra.mxu0 %v859
    %2364 = vmatpush.msra.mxu0 %v851
    %2365 = vmatpush.msra.mxu0 %v843
    %2366 = vmatpush.msra.mxu0 %v835
    %2367 = vmatpush.msra.mxu0 %v827
    %2368 = vmatpush.msra.mxu0 %v819
    %2369 = vmatpush.msra.mxu0 %v811
    %2370 = vmatpush.msra.mxu0 %v803
    %2371 = vmatpush.msra.mxu0 %v795
    %2372 = vmatpush.msra.mxu0 %v787
    %2373 = vmatpush.msra.mxu0 %v779
    %2374 = vmatpush.msra.mxu0 %v771
    %2375 = vmatpush.msra.mxu0 %v763
    %2376 = vmatpush.msra.mxu0 %v755
    %2377 = vmatpush.msra.mxu0 %v747
    %2378 = vmatpush.msra.mxu0 %v739
    %2379 = vmatmul.f32.gmra.mxu0 %v1132
    %v2380 = vpop.f32.mrf.mxu0
    %v2381 = vadd.f32 %v2361, %v2380
    %2382 = vdwg.mxu0
    %2383 = vmatpush.msra.mxu0 %v987
    %2384 = vmatpush.msra.mxu0 %v979
    %2385 = vmatpush.msra.mxu0 %v971
    %2386 = vmatpush.msra.mxu0 %v963
    %2387 = vmatpush.msra.mxu0 %v955
    %2388 = vmatpush.msra.mxu0 %v947
    %2389 = vmatpush.msra.mxu0 %v939
    %2390 = vmatpush.msra.mxu0 %v931
    %2391 = vmatpush.msra.mxu0 %v923
    %2392 = vmatpush.msra.mxu0 %v915
    %2393 = vmatpush.msra.mxu0 %v907
    %2394 = vmatpush.msra.mxu0 %v899
    %2395 = vmatpush.msra.mxu0 %v891
    %2396 = vmatpush.msra.mxu0 %v883
    %2397 = vmatpush.msra.mxu0 %v875
    %2398 = vmatpush.msra.mxu0 %v867
    %2399 = vmatmul.f32.gmra.mxu0 %v1133
    %v2400 = vpop.f32.mrf.mxu0
    %v2401 = vadd.f32 %v2381, %v2400
    %2402 = vdwg.mxu0
    %2403 = vmatpush.msra.mxu0 %v1115
    %2404 = vmatpush.msra.mxu0 %v1107
    %2405 = vmatpush.msra.mxu0 %v1099
    %2406 = vmatpush.msra.mxu0 %v1091
    %2407 = vmatpush.msra.mxu0 %v1083
    %2408 = vmatpush.msra.mxu0 %v1075
    %2409 = vmatpush.msra.mxu0 %v1067
    %2410 = vmatpush.msra.mxu0 %v1059
    %2411 = vmatpush.msra.mxu0 %v1051
    %2412 = vmatpush.msra.mxu0 %v1043
    %2413 = vmatpush.msra.mxu0 %v1035
    %2414 = vmatpush.msra.mxu0 %v1027
    %2415 = vmatpush.msra.mxu0 %v1019
    %2416 = vmatpush.msra.mxu0 %v1011
    %2417 = vmatpush.msra.mxu0 %v1003
    %2418 = vmatpush.msra.mxu0 %v995
    %2419 = vmatmul.f32.gmra.mxu0 %v1134
    %v2420 = vpop.f32.mrf.mxu0
    %v2421 = vadd.f32 %v2401, %v2420
    %2422 = vdwg.mxu0
    %v2423 = vld [vmem:[#allocation5] sm:$0xff]
    %v2424 = vld [vmem:[#allocation5 + $0x8] sm:$0xff]
    %v2425 = vld [vmem:[#allocation5 + $0x10] sm:$0xff]
    %v2426 = vld [vmem:[#allocation5 + $0x18] sm:$0xff]
    %v2427 = vld [vmem:[#allocation5 + $0x20] sm:$0xff]
    %v2428 = vld [vmem:[#allocation5 + $0x28] sm:$0xff]
    %v2429 = vld [vmem:[#allocation5 + $0x30] sm:$0xff]
    %v2430 = vld [vmem:[#allocation5 + $0x38] sm:$0xff]
    %v2431 = vld [vmem:[#allocation5 + $0x40] sm:$0xff]
    %v2432 = vld [vmem:[#allocation5 + $0x48] sm:$0xff]
    %v2433 = vld [vmem:[#allocation5 + $0x50] sm:$0xff]
    %v2434 = vld [vmem:[#allocation5 + $0x58] sm:$0xff]
    %v2435 = vld [vmem:[#allocation5 + $0x60] sm:$0xff]
    %v2436 = vld [vmem:[#allocation5 + $0x68] sm:$0xff]
    %v2437 = vld [vmem:[#allocation5 + $0x70] sm:$0xff]
    %v2438 = vld [vmem:[#allocation5 + $0x78] sm:$0xff]
    %v2439 = vld [vmem:[#allocation5 + $0x80] sm:$0xff]
    %v2440 = vld [vmem:[#allocation5 + $0x88] sm:$0xff]
    %v2441 = vld [vmem:[#allocation5 + $0x90] sm:$0xff]
    %v2442 = vld [vmem:[#allocation5 + $0x98] sm:$0xff]
    %v2443 = vld [vmem:[#allocation5 + $0xa0] sm:$0xff]
    %v2444 = vld [vmem:[#allocation5 + $0xa8] sm:$0xff]
    %v2445 = vld [vmem:[#allocation5 + $0xb0] sm:$0xff]
    %v2446 = vld [vmem:[#allocation5 + $0xb8] sm:$0xff]
    %v2447 = vld [vmem:[#allocation5 + $0xc0] sm:$0xff]
    %v2448 = vld [vmem:[#allocation5 + $0xc8] sm:$0xff]
    %v2449 = vld [vmem:[#allocation5 + $0xd0] sm:$0xff]
    %v2450 = vld [vmem:[#allocation5 + $0xd8] sm:$0xff]
    %v2451 = vld [vmem:[#allocation5 + $0xe0] sm:$0xff]
    %v2452 = vld [vmem:[#allocation5 + $0xe8] sm:$0xff]
    %v2453 = vld [vmem:[#allocation5 + $0xf0] sm:$0xff]
    %v2454 = vld [vmem:[#allocation5 + $0xf8] sm:$0xff]
    %v2455 = vld [vmem:[#allocation5 + $0x100] sm:$0xff]
    %v2456 = vld [vmem:[#allocation5 + $0x108] sm:$0xff]
    %v2457 = vld [vmem:[#allocation5 + $0x110] sm:$0xff]
    %v2458 = vld [vmem:[#allocation5 + $0x118] sm:$0xff]
    %v2459 = vld [vmem:[#allocation5 + $0x120] sm:$0xff]
    %v2460 = vld [vmem:[#allocation5 + $0x128] sm:$0xff]
    %v2461 = vld [vmem:[#allocation5 + $0x130] sm:$0xff]
    %v2462 = vld [vmem:[#allocation5 + $0x138] sm:$0xff]
    %v2463 = vld [vmem:[#allocation5 + $0x140] sm:$0xff]
    %v2464 = vld [vmem:[#allocation5 + $0x148] sm:$0xff]
    %v2465 = vld [vmem:[#allocation5 + $0x150] sm:$0xff]
    %v2466 = vld [vmem:[#allocation5 + $0x158] sm:$0xff]
    %v2467 = vld [vmem:[#allocation5 + $0x160] sm:$0xff]
    %v2468 = vld [vmem:[#allocation5 + $0x168] sm:$0xff]
    %v2469 = vld [vmem:[#allocation5 + $0x170] sm:$0xff]
    %v2470 = vld [vmem:[#allocation5 + $0x178] sm:$0xff]
    %v2471 = vld [vmem:[#allocation5 + $0x180] sm:$0xff]
    %v2472 = vld [vmem:[#allocation5 + $0x188] sm:$0xff]
    %v2473 = vld [vmem:[#allocation5 + $0x190] sm:$0xff]
    %v2474 = vld [vmem:[#allocation5 + $0x198] sm:$0xff]
    %v2475 = vld [vmem:[#allocation5 + $0x1a0] sm:$0xff]
    %v2476 = vld [vmem:[#allocation5 + $0x1a8] sm:$0xff]
    %v2477 = vld [vmem:[#allocation5 + $0x1b0] sm:$0xff]
    %v2478 = vld [vmem:[#allocation5 + $0x1b8] sm:$0xff]
    %v2479 = vld [vmem:[#allocation5 + $0x1c0] sm:$0xff]
    %v2480 = vld [vmem:[#allocation5 + $0x1c8] sm:$0xff]
    %v2481 = vld [vmem:[#allocation5 + $0x1d0] sm:$0xff]
    %v2482 = vld [vmem:[#allocation5 + $0x1d8] sm:$0xff]
    %v2483 = vld [vmem:[#allocation5 + $0x1e0] sm:$0xff]
    %v2484 = vld [vmem:[#allocation5 + $0x1e8] sm:$0xff]
    %v2485 = vld [vmem:[#allocation5 + $0x1f0] sm:$0xff]
    %v2486 = vld [vmem:[#allocation5 + $0x1f8] sm:$0xff]
    %v2487 = vld [vmem:[#allocation5 + $0x200] sm:$0xff]
    %v2488 = vld [vmem:[#allocation5 + $0x208] sm:$0xff]
    %v2489 = vld [vmem:[#allocation5 + $0x210] sm:$0xff]
    %v2490 = vld [vmem:[#allocation5 + $0x218] sm:$0xff]
    %v2491 = vld [vmem:[#allocation5 + $0x220] sm:$0xff]
    %v2492 = vld [vmem:[#allocation5 + $0x228] sm:$0xff]
    %v2493 = vld [vmem:[#allocation5 + $0x230] sm:$0xff]
    %v2494 = vld [vmem:[#allocation5 + $0x238] sm:$0xff]
    %v2495 = vld [vmem:[#allocation5 + $0x240] sm:$0xff]
    %v2496 = vld [vmem:[#allocation5 + $0x248] sm:$0xff]
    %v2497 = vld [vmem:[#allocation5 + $0x250] sm:$0xff]
    %v2498 = vld [vmem:[#allocation5 + $0x258] sm:$0xff]
    %v2499 = vld [vmem:[#allocation5 + $0x260] sm:$0xff]
    %v2500 = vld [vmem:[#allocation5 + $0x268] sm:$0xff]
    %v2501 = vld [vmem:[#allocation5 + $0x270] sm:$0xff]
    %v2502 = vld [vmem:[#allocation5 + $0x278] sm:$0xff]
    %v2503 = vld [vmem:[#allocation5 + $0x280] sm:$0xff]
    %v2504 = vld [vmem:[#allocation5 + $0x288] sm:$0xff]
    %v2505 = vld [vmem:[#allocation5 + $0x290] sm:$0xff]
    %v2506 = vld [vmem:[#allocation5 + $0x298] sm:$0xff]
    %v2507 = vld [vmem:[#allocation5 + $0x2a0] sm:$0xff]
    %v2508 = vld [vmem:[#allocation5 + $0x2a8] sm:$0xff]
    %v2509 = vld [vmem:[#allocation5 + $0x2b0] sm:$0xff]
    %v2510 = vld [vmem:[#allocation5 + $0x2b8] sm:$0xff]
    %v2511 = vld [vmem:[#allocation5 + $0x2c0] sm:$0xff]
    %v2512 = vld [vmem:[#allocation5 + $0x2c8] sm:$0xff]
    %v2513 = vld [vmem:[#allocation5 + $0x2d0] sm:$0xff]
    %v2514 = vld [vmem:[#allocation5 + $0x2d8] sm:$0xff]
    %v2515 = vld [vmem:[#allocation5 + $0x2e0] sm:$0xff]
    %v2516 = vld [vmem:[#allocation5 + $0x2e8] sm:$0xff]
    %v2517 = vld [vmem:[#allocation5 + $0x2f0] sm:$0xff]
    %v2518 = vld [vmem:[#allocation5 + $0x2f8] sm:$0xff]
    %v2519 = vld [vmem:[#allocation5 + $0x300] sm:$0xff]
    %v2520 = vld [vmem:[#allocation5 + $0x308] sm:$0xff]
    %v2521 = vld [vmem:[#allocation5 + $0x310] sm:$0xff]
    %v2522 = vld [vmem:[#allocation5 + $0x318] sm:$0xff]
    %v2523 = vld [vmem:[#allocation5 + $0x320] sm:$0xff]
    %v2524 = vld [vmem:[#allocation5 + $0x328] sm:$0xff]
    %v2525 = vld [vmem:[#allocation5 + $0x330] sm:$0xff]
    %v2526 = vld [vmem:[#allocation5 + $0x338] sm:$0xff]
    %v2527 = vld [vmem:[#allocation5 + $0x340] sm:$0xff]
    %v2528 = vld [vmem:[#allocation5 + $0x348] sm:$0xff]
    %v2529 = vld [vmem:[#allocation5 + $0x350] sm:$0xff]
    %v2530 = vld [vmem:[#allocation5 + $0x358] sm:$0xff]
    %v2531 = vld [vmem:[#allocation5 + $0x360] sm:$0xff]
    %v2532 = vld [vmem:[#allocation5 + $0x368] sm:$0xff]
    %v2533 = vld [vmem:[#allocation5 + $0x370] sm:$0xff]
    %v2534 = vld [vmem:[#allocation5 + $0x378] sm:$0xff]
    %v2535 = vld [vmem:[#allocation5 + $0x380] sm:$0xff]
    %v2536 = vld [vmem:[#allocation5 + $0x388] sm:$0xff]
    %v2537 = vld [vmem:[#allocation5 + $0x390] sm:$0xff]
    %v2538 = vld [vmem:[#allocation5 + $0x398] sm:$0xff]
    %v2539 = vld [vmem:[#allocation5 + $0x3a0] sm:$0xff]
    %v2540 = vld [vmem:[#allocation5 + $0x3a8] sm:$0xff]
    %v2541 = vld [vmem:[#allocation5 + $0x3b0] sm:$0xff]
    %v2542 = vld [vmem:[#allocation5 + $0x3b8] sm:$0xff]
    %v2543 = vld [vmem:[#allocation5 + $0x3c0] sm:$0xff]
    %v2544 = vld [vmem:[#allocation5 + $0x3c8] sm:$0xff]
    %v2545 = vld [vmem:[#allocation5 + $0x3d0] sm:$0xff]
    %v2546 = vld [vmem:[#allocation5 + $0x3d8] sm:$0xff]
    %v2547 = vld [vmem:[#allocation5 + $0x3e0] sm:$0xff]
    %v2548 = vld [vmem:[#allocation5 + $0x3e8] sm:$0xff]
    %v2549 = vld [vmem:[#allocation5 + $0x3f0] sm:$0xff]
    %v2550 = vld [vmem:[#allocation5 + $0x3f8] sm:$0xff]
    %v2551 = vld [vmem:[#allocation5 + $0x400] sm:$0xff]
    %v2552 = vld [vmem:[#allocation5 + $0x408] sm:$0xff]
    %v2553 = vld [vmem:[#allocation5 + $0x410] sm:$0xff]
    %v2554 = vld [vmem:[#allocation5 + $0x418] sm:$0xff]
    %v2555 = vld [vmem:[#allocation5 + $0x420] sm:$0xff]
    %v2556 = vld [vmem:[#allocation5 + $0x428] sm:$0xff]
    %v2557 = vld [vmem:[#allocation5 + $0x430] sm:$0xff]
    %v2558 = vld [vmem:[#allocation5 + $0x438] sm:$0xff]
    %v2559 = vld [vmem:[#allocation5 + $0x440] sm:$0xff]
    %v2560 = vld [vmem:[#allocation5 + $0x448] sm:$0xff]
    %v2561 = vld [vmem:[#allocation5 + $0x450] sm:$0xff]
    %v2562 = vld [vmem:[#allocation5 + $0x458] sm:$0xff]
    %v2563 = vld [vmem:[#allocation5 + $0x460] sm:$0xff]
    %v2564 = vld [vmem:[#allocation5 + $0x468] sm:$0xff]
    %v2565 = vld [vmem:[#allocation5 + $0x470] sm:$0xff]
    %v2566 = vld [vmem:[#allocation5 + $0x478] sm:$0xff]
    %v2567 = vld [vmem:[#allocation5 + $0x480] sm:$0xff]
    %v2568 = vld [vmem:[#allocation5 + $0x488] sm:$0xff]
    %v2569 = vld [vmem:[#allocation5 + $0x490] sm:$0xff]
    %v2570 = vld [vmem:[#allocation5 + $0x498] sm:$0xff]
    %v2571 = vld [vmem:[#allocation5 + $0x4a0] sm:$0xff]
    %v2572 = vld [vmem:[#allocation5 + $0x4a8] sm:$0xff]
    %v2573 = vld [vmem:[#allocation5 + $0x4b0] sm:$0xff]
    %v2574 = vld [vmem:[#allocation5 + $0x4b8] sm:$0xff]
    %v2575 = vld [vmem:[#allocation5 + $0x4c0] sm:$0xff]
    %v2576 = vld [vmem:[#allocation5 + $0x4c8] sm:$0xff]
    %v2577 = vld [vmem:[#allocation5 + $0x4d0] sm:$0xff]
    %v2578 = vld [vmem:[#allocation5 + $0x4d8] sm:$0xff]
    %v2579 = vld [vmem:[#allocation5 + $0x4e0] sm:$0xff]
    %v2580 = vld [vmem:[#allocation5 + $0x4e8] sm:$0xff]
    %v2581 = vld [vmem:[#allocation5 + $0x4f0] sm:$0xff]
    %v2582 = vld [vmem:[#allocation5 + $0x4f8] sm:$0xff]
    %v2583 = vld [vmem:[#allocation5 + $0x500] sm:$0xff]
    %v2584 = vld [vmem:[#allocation5 + $0x508] sm:$0xff]
    %v2585 = vld [vmem:[#allocation5 + $0x510] sm:$0xff]
    %v2586 = vld [vmem:[#allocation5 + $0x518] sm:$0xff]
    %v2587 = vld [vmem:[#allocation5 + $0x520] sm:$0xff]
    %v2588 = vld [vmem:[#allocation5 + $0x528] sm:$0xff]
    %v2589 = vld [vmem:[#allocation5 + $0x530] sm:$0xff]
    %v2590 = vld [vmem:[#allocation5 + $0x538] sm:$0xff]
    %v2591 = vld [vmem:[#allocation5 + $0x540] sm:$0xff]
    %v2592 = vld [vmem:[#allocation5 + $0x548] sm:$0xff]
    %v2593 = vld [vmem:[#allocation5 + $0x550] sm:$0xff]
    %v2594 = vld [vmem:[#allocation5 + $0x558] sm:$0xff]
    %v2595 = vld [vmem:[#allocation5 + $0x560] sm:$0xff]
    %v2596 = vld [vmem:[#allocation5 + $0x568] sm:$0xff]
    %v2597 = vld [vmem:[#allocation5 + $0x570] sm:$0xff]
    %v2598 = vld [vmem:[#allocation5 + $0x578] sm:$0xff]
    %v2599 = vld [vmem:[#allocation5 + $0x580] sm:$0xff]
    %v2600 = vld [vmem:[#allocation5 + $0x588] sm:$0xff]
    %v2601 = vld [vmem:[#allocation5 + $0x590] sm:$0xff]
    %v2602 = vld [vmem:[#allocation5 + $0x598] sm:$0xff]
    %v2603 = vld [vmem:[#allocation5 + $0x5a0] sm:$0xff]
    %v2604 = vld [vmem:[#allocation5 + $0x5a8] sm:$0xff]
    %v2605 = vld [vmem:[#allocation5 + $0x5b0] sm:$0xff]
    %v2606 = vld [vmem:[#allocation5 + $0x5b8] sm:$0xff]
    %v2607 = vld [vmem:[#allocation5 + $0x5c0] sm:$0xff]
    %v2608 = vld [vmem:[#allocation5 + $0x5c8] sm:$0xff]
    %v2609 = vld [vmem:[#allocation5 + $0x5d0] sm:$0xff]
    %v2610 = vld [vmem:[#allocation5 + $0x5d8] sm:$0xff]
    %v2611 = vld [vmem:[#allocation5 + $0x5e0] sm:$0xff]
    %v2612 = vld [vmem:[#allocation5 + $0x5e8] sm:$0xff]
    %v2613 = vld [vmem:[#allocation5 + $0x5f0] sm:$0xff]
    %v2614 = vld [vmem:[#allocation5 + $0x5f8] sm:$0xff]
    %v2615 = vld [vmem:[#allocation5 + $0x600] sm:$0xff]
    %v2616 = vld [vmem:[#allocation5 + $0x608] sm:$0xff]
    %v2617 = vld [vmem:[#allocation5 + $0x610] sm:$0xff]
    %v2618 = vld [vmem:[#allocation5 + $0x618] sm:$0xff]
    %v2619 = vld [vmem:[#allocation5 + $0x620] sm:$0xff]
    %v2620 = vld [vmem:[#allocation5 + $0x628] sm:$0xff]
    %v2621 = vld [vmem:[#allocation5 + $0x630] sm:$0xff]
    %v2622 = vld [vmem:[#allocation5 + $0x638] sm:$0xff]
    %v2623 = vld [vmem:[#allocation5 + $0x640] sm:$0xff]
    %v2624 = vld [vmem:[#allocation5 + $0x648] sm:$0xff]
    %v2625 = vld [vmem:[#allocation5 + $0x650] sm:$0xff]
    %v2626 = vld [vmem:[#allocation5 + $0x658] sm:$0xff]
    %v2627 = vld [vmem:[#allocation5 + $0x660] sm:$0xff]
    %v2628 = vld [vmem:[#allocation5 + $0x668] sm:$0xff]
    %v2629 = vld [vmem:[#allocation5 + $0x670] sm:$0xff]
    %v2630 = vld [vmem:[#allocation5 + $0x678] sm:$0xff]
    %v2631 = vld [vmem:[#allocation5 + $0x680] sm:$0xff]
    %v2632 = vld [vmem:[#allocation5 + $0x688] sm:$0xff]
    %v2633 = vld [vmem:[#allocation5 + $0x690] sm:$0xff]
    %v2634 = vld [vmem:[#allocation5 + $0x698] sm:$0xff]
    %v2635 = vld [vmem:[#allocation5 + $0x6a0] sm:$0xff]
    %v2636 = vld [vmem:[#allocation5 + $0x6a8] sm:$0xff]
    %v2637 = vld [vmem:[#allocation5 + $0x6b0] sm:$0xff]
    %v2638 = vld [vmem:[#allocation5 + $0x6b8] sm:$0xff]
    %v2639 = vld [vmem:[#allocation5 + $0x6c0] sm:$0xff]
    %v2640 = vld [vmem:[#allocation5 + $0x6c8] sm:$0xff]
    %v2641 = vld [vmem:[#allocation5 + $0x6d0] sm:$0xff]
    %v2642 = vld [vmem:[#allocation5 + $0x6d8] sm:$0xff]
    %v2643 = vld [vmem:[#allocation5 + $0x6e0] sm:$0xff]
    %v2644 = vld [vmem:[#allocation5 + $0x6e8] sm:$0xff]
    %v2645 = vld [vmem:[#allocation5 + $0x6f0] sm:$0xff]
    %v2646 = vld [vmem:[#allocation5 + $0x6f8] sm:$0xff]
    %v2647 = vld [vmem:[#allocation5 + $0x700] sm:$0xff]
    %v2648 = vld [vmem:[#allocation5 + $0x708] sm:$0xff]
    %v2649 = vld [vmem:[#allocation5 + $0x710] sm:$0xff]
    %v2650 = vld [vmem:[#allocation5 + $0x718] sm:$0xff]
    %v2651 = vld [vmem:[#allocation5 + $0x720] sm:$0xff]
    %v2652 = vld [vmem:[#allocation5 + $0x728] sm:$0xff]
    %v2653 = vld [vmem:[#allocation5 + $0x730] sm:$0xff]
    %v2654 = vld [vmem:[#allocation5 + $0x738] sm:$0xff]
    %v2655 = vld [vmem:[#allocation5 + $0x740] sm:$0xff]
    %v2656 = vld [vmem:[#allocation5 + $0x748] sm:$0xff]
    %v2657 = vld [vmem:[#allocation5 + $0x750] sm:$0xff]
    %v2658 = vld [vmem:[#allocation5 + $0x758] sm:$0xff]
    %v2659 = vld [vmem:[#allocation5 + $0x760] sm:$0xff]
    %v2660 = vld [vmem:[#allocation5 + $0x768] sm:$0xff]
    %v2661 = vld [vmem:[#allocation5 + $0x770] sm:$0xff]
    %v2662 = vld [vmem:[#allocation5 + $0x778] sm:$0xff]
    %v2663 = vld [vmem:[#allocation5 + $0x780] sm:$0xff]
    %v2664 = vld [vmem:[#allocation5 + $0x788] sm:$0xff]
    %v2665 = vld [vmem:[#allocation5 + $0x790] sm:$0xff]
    %v2666 = vld [vmem:[#allocation5 + $0x798] sm:$0xff]
    %v2667 = vld [vmem:[#allocation5 + $0x7a0] sm:$0xff]
    %v2668 = vld [vmem:[#allocation5 + $0x7a8] sm:$0xff]
    %v2669 = vld [vmem:[#allocation5 + $0x7b0] sm:$0xff]
    %v2670 = vld [vmem:[#allocation5 + $0x7b8] sm:$0xff]
    %v2671 = vld [vmem:[#allocation5 + $0x7c0] sm:$0xff]
    %v2672 = vld [vmem:[#allocation5 + $0x7c8] sm:$0xff]
    %v2673 = vld [vmem:[#allocation5 + $0x7d0] sm:$0xff]
    %v2674 = vld [vmem:[#allocation5 + $0x7d8] sm:$0xff]
    %v2675 = vld [vmem:[#allocation5 + $0x7e0] sm:$0xff]
    %v2676 = vld [vmem:[#allocation5 + $0x7e8] sm:$0xff]
    %v2677 = vld [vmem:[#allocation5 + $0x7f0] sm:$0xff]
    %v2678 = vld [vmem:[#allocation5 + $0x7f8] sm:$0xff]
    %v2679 = vld [vmem:[#allocation5 + $0x800] sm:$0xff]
    %v2680 = vld [vmem:[#allocation5 + $0x808] sm:$0xff]
    %v2681 = vld [vmem:[#allocation5 + $0x810] sm:$0xff]
    %v2682 = vld [vmem:[#allocation5 + $0x818] sm:$0xff]
    %v2683 = vld [vmem:[#allocation5 + $0x820] sm:$0xff]
    %v2684 = vld [vmem:[#allocation5 + $0x828] sm:$0xff]
    %v2685 = vld [vmem:[#allocation5 + $0x830] sm:$0xff]
    %v2686 = vld [vmem:[#allocation5 + $0x838] sm:$0xff]
    %v2687 = vld [vmem:[#allocation5 + $0x840] sm:$0xff]
    %v2688 = vld [vmem:[#allocation5 + $0x848] sm:$0xff]
    %v2689 = vld [vmem:[#allocation5 + $0x850] sm:$0xff]
    %v2690 = vld [vmem:[#allocation5 + $0x858] sm:$0xff]
    %v2691 = vld [vmem:[#allocation5 + $0x860] sm:$0xff]
    %v2692 = vld [vmem:[#allocation5 + $0x868] sm:$0xff]
    %v2693 = vld [vmem:[#allocation5 + $0x870] sm:$0xff]
    %v2694 = vld [vmem:[#allocation5 + $0x878] sm:$0xff]
    %v2695 = vld [vmem:[#allocation5 + $0x880] sm:$0xff]
    %v2696 = vld [vmem:[#allocation5 + $0x888] sm:$0xff]
    %v2697 = vld [vmem:[#allocation5 + $0x890] sm:$0xff]
    %v2698 = vld [vmem:[#allocation5 + $0x898] sm:$0xff]
    %v2699 = vld [vmem:[#allocation5 + $0x8a0] sm:$0xff]
    %v2700 = vld [vmem:[#allocation5 + $0x8a8] sm:$0xff]
    %v2701 = vld [vmem:[#allocation5 + $0x8b0] sm:$0xff]
    %v2702 = vld [vmem:[#allocation5 + $0x8b8] sm:$0xff]
    %v2703 = vld [vmem:[#allocation5 + $0x8c0] sm:$0xff]
    %v2704 = vld [vmem:[#allocation5 + $0x8c8] sm:$0xff]
    %v2705 = vld [vmem:[#allocation5 + $0x8d0] sm:$0xff]
    %v2706 = vld [vmem:[#allocation5 + $0x8d8] sm:$0xff]
    %v2707 = vld [vmem:[#allocation5 + $0x8e0] sm:$0xff]
    %v2708 = vld [vmem:[#allocation5 + $0x8e8] sm:$0xff]
    %v2709 = vld [vmem:[#allocation5 + $0x8f0] sm:$0xff]
    %v2710 = vld [vmem:[#allocation5 + $0x8f8] sm:$0xff]
    %v2711 = vld [vmem:[#allocation5 + $0x900] sm:$0xff]
    %v2712 = vld [vmem:[#allocation5 + $0x908] sm:$0xff]
    %v2713 = vld [vmem:[#allocation5 + $0x910] sm:$0xff]
    %v2714 = vld [vmem:[#allocation5 + $0x918] sm:$0xff]
    %v2715 = vld [vmem:[#allocation5 + $0x920] sm:$0xff]
    %v2716 = vld [vmem:[#allocation5 + $0x928] sm:$0xff]
    %v2717 = vld [vmem:[#allocation5 + $0x930] sm:$0xff]
    %v2718 = vld [vmem:[#allocation5 + $0x938] sm:$0xff]
    %v2719 = vld [vmem:[#allocation5 + $0x940] sm:$0xff]
    %v2720 = vld [vmem:[#allocation5 + $0x948] sm:$0xff]
    %v2721 = vld [vmem:[#allocation5 + $0x950] sm:$0xff]
    %v2722 = vld [vmem:[#allocation5 + $0x958] sm:$0xff]
    %v2723 = vld [vmem:[#allocation5 + $0x960] sm:$0xff]
    %v2724 = vld [vmem:[#allocation5 + $0x968] sm:$0xff]
    %v2725 = vld [vmem:[#allocation5 + $0x970] sm:$0xff]
    %v2726 = vld [vmem:[#allocation5 + $0x978] sm:$0xff]
    %v2727 = vld [vmem:[#allocation5 + $0x980] sm:$0xff]
    %v2728 = vld [vmem:[#allocation5 + $0x988] sm:$0xff]
    %v2729 = vld [vmem:[#allocation5 + $0x990] sm:$0xff]
    %v2730 = vld [vmem:[#allocation5 + $0x998] sm:$0xff]
    %v2731 = vld [vmem:[#allocation5 + $0x9a0] sm:$0xff]
    %v2732 = vld [vmem:[#allocation5 + $0x9a8] sm:$0xff]
    %v2733 = vld [vmem:[#allocation5 + $0x9b0] sm:$0xff]
    %v2734 = vld [vmem:[#allocation5 + $0x9b8] sm:$0xff]
    %v2735 = vld [vmem:[#allocation5 + $0x9c0] sm:$0xff]
    %v2736 = vld [vmem:[#allocation5 + $0x9c8] sm:$0xff]
    %v2737 = vld [vmem:[#allocation5 + $0x9d0] sm:$0xff]
    %v2738 = vld [vmem:[#allocation5 + $0x9d8] sm:$0xff]
    %v2739 = vld [vmem:[#allocation5 + $0x9e0] sm:$0xff]
    %v2740 = vld [vmem:[#allocation5 + $0x9e8] sm:$0xff]
    %v2741 = vld [vmem:[#allocation5 + $0x9f0] sm:$0xff]
    %v2742 = vld [vmem:[#allocation5 + $0x9f8] sm:$0xff]
    %v2743 = vld [vmem:[#allocation5 + $0xa00] sm:$0xff]
    %v2744 = vld [vmem:[#allocation5 + $0xa08] sm:$0xff]
    %v2745 = vld [vmem:[#allocation5 + $0xa10] sm:$0xff]
    %v2746 = vld [vmem:[#allocation5 + $0xa18] sm:$0xff]
    %v2747 = vld [vmem:[#allocation5 + $0xa20] sm:$0xff]
    %v2748 = vld [vmem:[#allocation5 + $0xa28] sm:$0xff]
    %v2749 = vld [vmem:[#allocation5 + $0xa30] sm:$0xff]
    %v2750 = vld [vmem:[#allocation5 + $0xa38] sm:$0xff]
    %v2751 = vld [vmem:[#allocation5 + $0xa40] sm:$0xff]
    %v2752 = vld [vmem:[#allocation5 + $0xa48] sm:$0xff]
    %v2753 = vld [vmem:[#allocation5 + $0xa50] sm:$0xff]
    %v2754 = vld [vmem:[#allocation5 + $0xa58] sm:$0xff]
    %v2755 = vld [vmem:[#allocation5 + $0xa60] sm:$0xff]
    %v2756 = vld [vmem:[#allocation5 + $0xa68] sm:$0xff]
    %v2757 = vld [vmem:[#allocation5 + $0xa70] sm:$0xff]
    %v2758 = vld [vmem:[#allocation5 + $0xa78] sm:$0xff]
    %v2759 = vld [vmem:[#allocation5 + $0xa80] sm:$0xff]
    %v2760 = vld [vmem:[#allocation5 + $0xa88] sm:$0xff]
    %v2761 = vld [vmem:[#allocation5 + $0xa90] sm:$0xff]
    %v2762 = vld [vmem:[#allocation5 + $0xa98] sm:$0xff]
    %v2763 = vld [vmem:[#allocation5 + $0xaa0] sm:$0xff]
    %v2764 = vld [vmem:[#allocation5 + $0xaa8] sm:$0xff]
    %v2765 = vld [vmem:[#allocation5 + $0xab0] sm:$0xff]
    %v2766 = vld [vmem:[#allocation5 + $0xab8] sm:$0xff]
    %v2767 = vld [vmem:[#allocation5 + $0xac0] sm:$0xff]
    %v2768 = vld [vmem:[#allocation5 + $0xac8] sm:$0xff]
    %v2769 = vld [vmem:[#allocation5 + $0xad0] sm:$0xff]
    %v2770 = vld [vmem:[#allocation5 + $0xad8] sm:$0xff]
    %v2771 = vld [vmem:[#allocation5 + $0xae0] sm:$0xff]
    %v2772 = vld [vmem:[#allocation5 + $0xae8] sm:$0xff]
    %v2773 = vld [vmem:[#allocation5 + $0xaf0] sm:$0xff]
    %v2774 = vld [vmem:[#allocation5 + $0xaf8] sm:$0xff]
    %v2775 = vld [vmem:[#allocation5 + $0xb00] sm:$0xff]
    %v2776 = vld [vmem:[#allocation5 + $0xb08] sm:$0xff]
    %v2777 = vld [vmem:[#allocation5 + $0xb10] sm:$0xff]
    %v2778 = vld [vmem:[#allocation5 + $0xb18] sm:$0xff]
    %v2779 = vld [vmem:[#allocation5 + $0xb20] sm:$0xff]
    %v2780 = vld [vmem:[#allocation5 + $0xb28] sm:$0xff]
    %v2781 = vld [vmem:[#allocation5 + $0xb30] sm:$0xff]
    %v2782 = vld [vmem:[#allocation5 + $0xb38] sm:$0xff]
    %v2783 = vld [vmem:[#allocation5 + $0xb40] sm:$0xff]
    %v2784 = vld [vmem:[#allocation5 + $0xb48] sm:$0xff]
    %v2785 = vld [vmem:[#allocation5 + $0xb50] sm:$0xff]
    %v2786 = vld [vmem:[#allocation5 + $0xb58] sm:$0xff]
    %v2787 = vld [vmem:[#allocation5 + $0xb60] sm:$0xff]
    %v2788 = vld [vmem:[#allocation5 + $0xb68] sm:$0xff]
    %v2789 = vld [vmem:[#allocation5 + $0xb70] sm:$0xff]
    %v2790 = vld [vmem:[#allocation5 + $0xb78] sm:$0xff]
    %v2791 = vld [vmem:[#allocation5 + $0xb80] sm:$0xff]
    %v2792 = vld [vmem:[#allocation5 + $0xb88] sm:$0xff]
    %v2793 = vld [vmem:[#allocation5 + $0xb90] sm:$0xff]
    %v2794 = vld [vmem:[#allocation5 + $0xb98] sm:$0xff]
    %v2795 = vld [vmem:[#allocation5 + $0xba0] sm:$0xff]
    %v2796 = vld [vmem:[#allocation5 + $0xba8] sm:$0xff]
    %v2797 = vld [vmem:[#allocation5 + $0xbb0] sm:$0xff]
    %v2798 = vld [vmem:[#allocation5 + $0xbb8] sm:$0xff]
    %v2799 = vld [vmem:[#allocation5 + $0xbc0] sm:$0xff]
    %v2800 = vld [vmem:[#allocation5 + $0xbc8] sm:$0xff]
    %v2801 = vld [vmem:[#allocation5 + $0xbd0] sm:$0xff]
    %v2802 = vld [vmem:[#allocation5 + $0xbd8] sm:$0xff]
    %v2803 = vld [vmem:[#allocation5 + $0xbe0] sm:$0xff]
    %v2804 = vld [vmem:[#allocation5 + $0xbe8] sm:$0xff]
    %v2805 = vld [vmem:[#allocation5 + $0xbf0] sm:$0xff]
    %v2806 = vld [vmem:[#allocation5 + $0xbf8] sm:$0xff]
    %v2807 = vld [vmem:[#allocation5 + $0xc00] sm:$0xff]
    %v2808 = vld [vmem:[#allocation5 + $0xc08] sm:$0xff]
    %v2809 = vld [vmem:[#allocation5 + $0xc10] sm:$0xff]
    %v2810 = vld [vmem:[#allocation5 + $0xc18] sm:$0xff]
    %v2811 = vld [vmem:[#allocation5 + $0xc20] sm:$0xff]
    %v2812 = vld [vmem:[#allocation5 + $0xc28] sm:$0xff]
    %v2813 = vld [vmem:[#allocation5 + $0xc30] sm:$0xff]
    %v2814 = vld [vmem:[#allocation5 + $0xc38] sm:$0xff]
    %v2815 = vld [vmem:[#allocation5 + $0xc40] sm:$0xff]
    %v2816 = vld [vmem:[#allocation5 + $0xc48] sm:$0xff]
    %v2817 = vld [vmem:[#allocation5 + $0xc50] sm:$0xff]
    %v2818 = vld [vmem:[#allocation5 + $0xc58] sm:$0xff]
    %v2819 = vld [vmem:[#allocation5 + $0xc60] sm:$0xff]
    %v2820 = vld [vmem:[#allocation5 + $0xc68] sm:$0xff]
    %v2821 = vld [vmem:[#allocation5 + $0xc70] sm:$0xff]
    %v2822 = vld [vmem:[#allocation5 + $0xc78] sm:$0xff]
    %v2823 = vld [vmem:[#allocation5 + $0xc80] sm:$0xff]
    %v2824 = vld [vmem:[#allocation5 + $0xc88] sm:$0xff]
    %v2825 = vld [vmem:[#allocation5 + $0xc90] sm:$0xff]
    %v2826 = vld [vmem:[#allocation5 + $0xc98] sm:$0xff]
    %v2827 = vld [vmem:[#allocation5 + $0xca0] sm:$0xff]
    %v2828 = vld [vmem:[#allocation5 + $0xca8] sm:$0xff]
    %v2829 = vld [vmem:[#allocation5 + $0xcb0] sm:$0xff]
    %v2830 = vld [vmem:[#allocation5 + $0xcb8] sm:$0xff]
    %v2831 = vld [vmem:[#allocation5 + $0xcc0] sm:$0xff]
    %v2832 = vld [vmem:[#allocation5 + $0xcc8] sm:$0xff]
    %v2833 = vld [vmem:[#allocation5 + $0xcd0] sm:$0xff]
    %v2834 = vld [vmem:[#allocation5 + $0xcd8] sm:$0xff]
    %v2835 = vld [vmem:[#allocation5 + $0xce0] sm:$0xff]
    %v2836 = vld [vmem:[#allocation5 + $0xce8] sm:$0xff]
    %v2837 = vld [vmem:[#allocation5 + $0xcf0] sm:$0xff]
    %v2838 = vld [vmem:[#allocation5 + $0xcf8] sm:$0xff]
    %v2839 = vld [vmem:[#allocation5 + $0xd00] sm:$0xff]
    %v2840 = vld [vmem:[#allocation5 + $0xd08] sm:$0xff]
    %v2841 = vld [vmem:[#allocation5 + $0xd10] sm:$0xff]
    %v2842 = vld [vmem:[#allocation5 + $0xd18] sm:$0xff]
    %v2843 = vld [vmem:[#allocation5 + $0xd20] sm:$0xff]
    %v2844 = vld [vmem:[#allocation5 + $0xd28] sm:$0xff]
    %v2845 = vld [vmem:[#allocation5 + $0xd30] sm:$0xff]
    %v2846 = vld [vmem:[#allocation5 + $0xd38] sm:$0xff]
    %v2847 = vld [vmem:[#allocation5 + $0xd40] sm:$0xff]
    %v2848 = vld [vmem:[#allocation5 + $0xd48] sm:$0xff]
    %v2849 = vld [vmem:[#allocation5 + $0xd50] sm:$0xff]
    %v2850 = vld [vmem:[#allocation5 + $0xd58] sm:$0xff]
    %v2851 = vld [vmem:[#allocation5 + $0xd60] sm:$0xff]
    %v2852 = vld [vmem:[#allocation5 + $0xd68] sm:$0xff]
    %v2853 = vld [vmem:[#allocation5 + $0xd70] sm:$0xff]
    %v2854 = vld [vmem:[#allocation5 + $0xd78] sm:$0xff]
    %v2855 = vld [vmem:[#allocation5 + $0xd80] sm:$0xff]
    %v2856 = vld [vmem:[#allocation5 + $0xd88] sm:$0xff]
    %v2857 = vld [vmem:[#allocation5 + $0xd90] sm:$0xff]
    %v2858 = vld [vmem:[#allocation5 + $0xd98] sm:$0xff]
    %v2859 = vld [vmem:[#allocation5 + $0xda0] sm:$0xff]
    %v2860 = vld [vmem:[#allocation5 + $0xda8] sm:$0xff]
    %v2861 = vld [vmem:[#allocation5 + $0xdb0] sm:$0xff]
    %v2862 = vld [vmem:[#allocation5 + $0xdb8] sm:$0xff]
    %v2863 = vld [vmem:[#allocation5 + $0xdc0] sm:$0xff]
    %v2864 = vld [vmem:[#allocation5 + $0xdc8] sm:$0xff]
    %v2865 = vld [vmem:[#allocation5 + $0xdd0] sm:$0xff]
    %v2866 = vld [vmem:[#allocation5 + $0xdd8] sm:$0xff]
    %v2867 = vld [vmem:[#allocation5 + $0xde0] sm:$0xff]
    %v2868 = vld [vmem:[#allocation5 + $0xde8] sm:$0xff]
    %v2869 = vld [vmem:[#allocation5 + $0xdf0] sm:$0xff]
    %v2870 = vld [vmem:[#allocation5 + $0xdf8] sm:$0xff]
    %v2871 = vld [vmem:[#allocation5 + $0xe00] sm:$0xff]
    %v2872 = vld [vmem:[#allocation5 + $0xe08] sm:$0xff]
    %v2873 = vld [vmem:[#allocation5 + $0xe10] sm:$0xff]
    %v2874 = vld [vmem:[#allocation5 + $0xe18] sm:$0xff]
    %v2875 = vld [vmem:[#allocation5 + $0xe20] sm:$0xff]
    %v2876 = vld [vmem:[#allocation5 + $0xe28] sm:$0xff]
    %v2877 = vld [vmem:[#allocation5 + $0xe30] sm:$0xff]
    %v2878 = vld [vmem:[#allocation5 + $0xe38] sm:$0xff]
    %v2879 = vld [vmem:[#allocation5 + $0xe40] sm:$0xff]
    %v2880 = vld [vmem:[#allocation5 + $0xe48] sm:$0xff]
    %v2881 = vld [vmem:[#allocation5 + $0xe50] sm:$0xff]
    %v2882 = vld [vmem:[#allocation5 + $0xe58] sm:$0xff]
    %v2883 = vld [vmem:[#allocation5 + $0xe60] sm:$0xff]
    %v2884 = vld [vmem:[#allocation5 + $0xe68] sm:$0xff]
    %v2885 = vld [vmem:[#allocation5 + $0xe70] sm:$0xff]
    %v2886 = vld [vmem:[#allocation5 + $0xe78] sm:$0xff]
    %v2887 = vld [vmem:[#allocation5 + $0xe80] sm:$0xff]
    %v2888 = vld [vmem:[#allocation5 + $0xe88] sm:$0xff]
    %v2889 = vld [vmem:[#allocation5 + $0xe90] sm:$0xff]
    %v2890 = vld [vmem:[#allocation5 + $0xe98] sm:$0xff]
    %v2891 = vld [vmem:[#allocation5 + $0xea0] sm:$0xff]
    %v2892 = vld [vmem:[#allocation5 + $0xea8] sm:$0xff]
    %v2893 = vld [vmem:[#allocation5 + $0xeb0] sm:$0xff]
    %v2894 = vld [vmem:[#allocation5 + $0xeb8] sm:$0xff]
    %v2895 = vld [vmem:[#allocation5 + $0xec0] sm:$0xff]
    %v2896 = vld [vmem:[#allocation5 + $0xec8] sm:$0xff]
    %v2897 = vld [vmem:[#allocation5 + $0xed0] sm:$0xff]
    %v2898 = vld [vmem:[#allocation5 + $0xed8] sm:$0xff]
    %v2899 = vld [vmem:[#allocation5 + $0xee0] sm:$0xff]
    %v2900 = vld [vmem:[#allocation5 + $0xee8] sm:$0xff]
    %v2901 = vld [vmem:[#allocation5 + $0xef0] sm:$0xff]
    %v2902 = vld [vmem:[#allocation5 + $0xef8] sm:$0xff]
    %v2903 = vld [vmem:[#allocation5 + $0xf00] sm:$0xff]
    %v2904 = vld [vmem:[#allocation5 + $0xf08] sm:$0xff]
    %v2905 = vld [vmem:[#allocation5 + $0xf10] sm:$0xff]
    %v2906 = vld [vmem:[#allocation5 + $0xf18] sm:$0xff]
    %v2907 = vld [vmem:[#allocation5 + $0xf20] sm:$0xff]
    %v2908 = vld [vmem:[#allocation5 + $0xf28] sm:$0xff]
    %v2909 = vld [vmem:[#allocation5 + $0xf30] sm:$0xff]
    %v2910 = vld [vmem:[#allocation5 + $0xf38] sm:$0xff]
    %v2911 = vld [vmem:[#allocation5 + $0xf40] sm:$0xff]
    %v2912 = vld [vmem:[#allocation5 + $0xf48] sm:$0xff]
    %v2913 = vld [vmem:[#allocation5 + $0xf50] sm:$0xff]
    %v2914 = vld [vmem:[#allocation5 + $0xf58] sm:$0xff]
    %v2915 = vld [vmem:[#allocation5 + $0xf60] sm:$0xff]
    %v2916 = vld [vmem:[#allocation5 + $0xf68] sm:$0xff]
    %v2917 = vld [vmem:[#allocation5 + $0xf70] sm:$0xff]
    %v2918 = vld [vmem:[#allocation5 + $0xf78] sm:$0xff]
    %v2919 = vld [vmem:[#allocation5 + $0xf80] sm:$0xff]
    %v2920 = vld [vmem:[#allocation5 + $0xf88] sm:$0xff]
    %v2921 = vld [vmem:[#allocation5 + $0xf90] sm:$0xff]
    %v2922 = vld [vmem:[#allocation5 + $0xf98] sm:$0xff]
    %v2923 = vld [vmem:[#allocation5 + $0xfa0] sm:$0xff]
    %v2924 = vld [vmem:[#allocation5 + $0xfa8] sm:$0xff]
    %v2925 = vld [vmem:[#allocation5 + $0xfb0] sm:$0xff]
    %v2926 = vld [vmem:[#allocation5 + $0xfb8] sm:$0xff]
    %v2927 = vld [vmem:[#allocation5 + $0xfc0] sm:$0xff]
    %v2928 = vld [vmem:[#allocation5 + $0xfc8] sm:$0xff]
    %v2929 = vld [vmem:[#allocation5 + $0xfd0] sm:$0xff]
    %v2930 = vld [vmem:[#allocation5 + $0xfd8] sm:$0xff]
    %v2931 = vld [vmem:[#allocation5 + $0xfe0] sm:$0xff]
    %v2932 = vld [vmem:[#allocation5 + $0xfe8] sm:$0xff]
    %v2933 = vld [vmem:[#allocation5 + $0xff0] sm:$0xff]
    %v2934 = vld [vmem:[#allocation5 + $0xff8] sm:$0xff]
    %v2935 = vld [vmem:[#allocation5 + $0x1000] sm:$0xff]
    %v2936 = vld [vmem:[#allocation5 + $0x1008] sm:$0xff]
    %v2937 = vld [vmem:[#allocation5 + $0x1010] sm:$0xff]
    %v2938 = vld [vmem:[#allocation5 + $0x1018] sm:$0xff]
    %v2939 = vld [vmem:[#allocation5 + $0x1020] sm:$0xff]
    %v2940 = vld [vmem:[#allocation5 + $0x1028] sm:$0xff]
    %v2941 = vld [vmem:[#allocation5 + $0x1030] sm:$0xff]
    %v2942 = vld [vmem:[#allocation5 + $0x1038] sm:$0xff]
    %v2943 = vld [vmem:[#allocation5 + $0x1040] sm:$0xff]
    %v2944 = vld [vmem:[#allocation5 + $0x1048] sm:$0xff]
    %v2945 = vld [vmem:[#allocation5 + $0x1050] sm:$0xff]
    %v2946 = vld [vmem:[#allocation5 + $0x1058] sm:$0xff]
    %v2947 = vld [vmem:[#allocation5 + $0x1060] sm:$0xff]
    %v2948 = vld [vmem:[#allocation5 + $0x1068] sm:$0xff]
    %v2949 = vld [vmem:[#allocation5 + $0x1070] sm:$0xff]
    %v2950 = vld [vmem:[#allocation5 + $0x1078] sm:$0xff]
    %v2951 = vld [vmem:[#allocation5 + $0x1080] sm:$0xff]
    %v2952 = vld [vmem:[#allocation5 + $0x1088] sm:$0xff]
    %v2953 = vld [vmem:[#allocation5 + $0x1090] sm:$0xff]
    %v2954 = vld [vmem:[#allocation5 + $0x1098] sm:$0xff]
    %v2955 = vld [vmem:[#allocation5 + $0x10a0] sm:$0xff]
    %v2956 = vld [vmem:[#allocation5 + $0x10a8] sm:$0xff]
    %v2957 = vld [vmem:[#allocation5 + $0x10b0] sm:$0xff]
    %v2958 = vld [vmem:[#allocation5 + $0x10b8] sm:$0xff]
    %v2959 = vld [vmem:[#allocation5 + $0x10c0] sm:$0xff]
    %v2960 = vld [vmem:[#allocation5 + $0x10c8] sm:$0xff]
    %v2961 = vld [vmem:[#allocation5 + $0x10d0] sm:$0xff]
    %v2962 = vld [vmem:[#allocation5 + $0x10d8] sm:$0xff]
    %v2963 = vld [vmem:[#allocation5 + $0x10e0] sm:$0xff]
    %v2964 = vld [vmem:[#allocation5 + $0x10e8] sm:$0xff]
    %v2965 = vld [vmem:[#allocation5 + $0x10f0] sm:$0xff]
    %v2966 = vld [vmem:[#allocation5 + $0x10f8] sm:$0xff]
    %v2967 = vld [vmem:[#allocation5 + $0x1100] sm:$0xff]
    %v2968 = vld [vmem:[#allocation5 + $0x1108] sm:$0xff]
    %v2969 = vld [vmem:[#allocation5 + $0x1110] sm:$0xff]
    %v2970 = vld [vmem:[#allocation5 + $0x1118] sm:$0xff]
    %v2971 = vld [vmem:[#allocation5 + $0x1120] sm:$0xff]
    %v2972 = vld [vmem:[#allocation5 + $0x1128] sm:$0xff]
    %v2973 = vld [vmem:[#allocation5 + $0x1130] sm:$0xff]
    %v2974 = vld [vmem:[#allocation5 + $0x1138] sm:$0xff]
    %v2975 = vld [vmem:[#allocation5 + $0x1140] sm:$0xff]
    %v2976 = vld [vmem:[#allocation5 + $0x1148] sm:$0xff]
    %v2977 = vld [vmem:[#allocation5 + $0x1150] sm:$0xff]
    %v2978 = vld [vmem:[#allocation5 + $0x1158] sm:$0xff]
    %v2979 = vld [vmem:[#allocation5 + $0x1160] sm:$0xff]
    %v2980 = vld [vmem:[#allocation5 + $0x1168] sm:$0xff]
    %v2981 = vld [vmem:[#allocation5 + $0x1170] sm:$0xff]
    %v2982 = vld [vmem:[#allocation5 + $0x1178] sm:$0xff]
    %v2983 = vld [vmem:[#allocation5 + $0x1180] sm:$0xff]
    %v2984 = vld [vmem:[#allocation5 + $0x1188] sm:$0xff]
    %v2985 = vld [vmem:[#allocation5 + $0x1190] sm:$0xff]
    %v2986 = vld [vmem:[#allocation5 + $0x1198] sm:$0xff]
    %v2987 = vld [vmem:[#allocation5 + $0x11a0] sm:$0xff]
    %v2988 = vld [vmem:[#allocation5 + $0x11a8] sm:$0xff]
    %v2989 = vld [vmem:[#allocation5 + $0x11b0] sm:$0xff]
    %v2990 = vld [vmem:[#allocation5 + $0x11b8] sm:$0xff]
    %v2991 = vld [vmem:[#allocation5 + $0x11c0] sm:$0xff]
    %v2992 = vld [vmem:[#allocation5 + $0x11c8] sm:$0xff]
    %v2993 = vld [vmem:[#allocation5 + $0x11d0] sm:$0xff]
    %v2994 = vld [vmem:[#allocation5 + $0x11d8] sm:$0xff]
    %v2995 = vld [vmem:[#allocation5 + $0x11e0] sm:$0xff]
    %v2996 = vld [vmem:[#allocation5 + $0x11e8] sm:$0xff]
    %v2997 = vld [vmem:[#allocation5 + $0x11f0] sm:$0xff]
    %v2998 = vld [vmem:[#allocation5 + $0x11f8] sm:$0xff]
    %v2999 = vld [vmem:[#allocation5 + $0x1200] sm:$0xff]
    %v3000 = vld [vmem:[#allocation5 + $0x1208] sm:$0xff]
    %v3001 = vld [vmem:[#allocation5 + $0x1210] sm:$0xff]
    %v3002 = vld [vmem:[#allocation5 + $0x1218] sm:$0xff]
    %v3003 = vld [vmem:[#allocation5 + $0x1220] sm:$0xff]
    %v3004 = vld [vmem:[#allocation5 + $0x1228] sm:$0xff]
    %v3005 = vld [vmem:[#allocation5 + $0x1230] sm:$0xff]
    %v3006 = vld [vmem:[#allocation5 + $0x1238] sm:$0xff]
    %v3007 = vld [vmem:[#allocation5 + $0x1240] sm:$0xff]
    %v3008 = vld [vmem:[#allocation5 + $0x1248] sm:$0xff]
    %v3009 = vld [vmem:[#allocation5 + $0x1250] sm:$0xff]
    %v3010 = vld [vmem:[#allocation5 + $0x1258] sm:$0xff]
    %v3011 = vld [vmem:[#allocation5 + $0x1260] sm:$0xff]
    %v3012 = vld [vmem:[#allocation5 + $0x1268] sm:$0xff]
    %v3013 = vld [vmem:[#allocation5 + $0x1270] sm:$0xff]
    %v3014 = vld [vmem:[#allocation5 + $0x1278] sm:$0xff]
    %v3015 = vld [vmem:[#allocation5 + $0x1280] sm:$0xff]
    %v3016 = vld [vmem:[#allocation5 + $0x1288] sm:$0xff]
    %v3017 = vld [vmem:[#allocation5 + $0x1290] sm:$0xff]
    %v3018 = vld [vmem:[#allocation5 + $0x1298] sm:$0xff]
    %v3019 = vld [vmem:[#allocation5 + $0x12a0] sm:$0xff]
    %v3020 = vld [vmem:[#allocation5 + $0x12a8] sm:$0xff]
    %v3021 = vld [vmem:[#allocation5 + $0x12b0] sm:$0xff]
    %v3022 = vld [vmem:[#allocation5 + $0x12b8] sm:$0xff]
    %v3023 = vld [vmem:[#allocation5 + $0x12c0] sm:$0xff]
    %v3024 = vld [vmem:[#allocation5 + $0x12c8] sm:$0xff]
    %v3025 = vld [vmem:[#allocation5 + $0x12d0] sm:$0xff]
    %v3026 = vld [vmem:[#allocation5 + $0x12d8] sm:$0xff]
    %v3027 = vld [vmem:[#allocation5 + $0x12e0] sm:$0xff]
    %v3028 = vld [vmem:[#allocation5 + $0x12e8] sm:$0xff]
    %v3029 = vld [vmem:[#allocation5 + $0x12f0] sm:$0xff]
    %v3030 = vld [vmem:[#allocation5 + $0x12f8] sm:$0xff]
    %v3031 = vld [vmem:[#allocation5 + $0x1300] sm:$0xff]
    %v3032 = vld [vmem:[#allocation5 + $0x1308] sm:$0xff]
    %v3033 = vld [vmem:[#allocation5 + $0x1310] sm:$0xff]
    %v3034 = vld [vmem:[#allocation5 + $0x1318] sm:$0xff]
    %v3035 = vld [vmem:[#allocation5 + $0x1320] sm:$0xff]
    %v3036 = vld [vmem:[#allocation5 + $0x1328] sm:$0xff]
    %v3037 = vld [vmem:[#allocation5 + $0x1330] sm:$0xff]
    %v3038 = vld [vmem:[#allocation5 + $0x1338] sm:$0xff]
    %v3039 = vld [vmem:[#allocation5 + $0x1340] sm:$0xff]
    %v3040 = vld [vmem:[#allocation5 + $0x1348] sm:$0xff]
    %v3041 = vld [vmem:[#allocation5 + $0x1350] sm:$0xff]
    %v3042 = vld [vmem:[#allocation5 + $0x1358] sm:$0xff]
    %v3043 = vld [vmem:[#allocation5 + $0x1360] sm:$0xff]
    %v3044 = vld [vmem:[#allocation5 + $0x1368] sm:$0xff]
    %v3045 = vld [vmem:[#allocation5 + $0x1370] sm:$0xff]
    %v3046 = vld [vmem:[#allocation5 + $0x1378] sm:$0xff]
    %v3047 = vld [vmem:[#allocation5 + $0x1380] sm:$0xff]
    %v3048 = vld [vmem:[#allocation5 + $0x1388] sm:$0xff]
    %v3049 = vld [vmem:[#allocation5 + $0x1390] sm:$0xff]
    %v3050 = vld [vmem:[#allocation5 + $0x1398] sm:$0xff]
    %v3051 = vld [vmem:[#allocation5 + $0x13a0] sm:$0xff]
    %v3052 = vld [vmem:[#allocation5 + $0x13a8] sm:$0xff]
    %v3053 = vld [vmem:[#allocation5 + $0x13b0] sm:$0xff]
    %v3054 = vld [vmem:[#allocation5 + $0x13b8] sm:$0xff]
    %v3055 = vld [vmem:[#allocation5 + $0x13c0] sm:$0xff]
    %v3056 = vld [vmem:[#allocation5 + $0x13c8] sm:$0xff]
    %v3057 = vld [vmem:[#allocation5 + $0x13d0] sm:$0xff]
    %v3058 = vld [vmem:[#allocation5 + $0x13d8] sm:$0xff]
    %v3059 = vld [vmem:[#allocation5 + $0x13e0] sm:$0xff]
    %v3060 = vld [vmem:[#allocation5 + $0x13e8] sm:$0xff]
    %v3061 = vld [vmem:[#allocation5 + $0x13f0] sm:$0xff]
    %v3062 = vld [vmem:[#allocation5 + $0x13f8] sm:$0xff]
    %v3063 = vld [vmem:[#allocation5 + $0x1400] sm:$0xff]
    %v3064 = vld [vmem:[#allocation5 + $0x1408] sm:$0xff]
    %v3065 = vld [vmem:[#allocation5 + $0x1410] sm:$0xff]
    %v3066 = vld [vmem:[#allocation5 + $0x1418] sm:$0xff]
    %v3067 = vld [vmem:[#allocation5 + $0x1420] sm:$0xff]
    %v3068 = vld [vmem:[#allocation5 + $0x1428] sm:$0xff]
    %v3069 = vld [vmem:[#allocation5 + $0x1430] sm:$0xff]
    %v3070 = vld [vmem:[#allocation5 + $0x1438] sm:$0xff]
    %v3071 = vld [vmem:[#allocation5 + $0x1440] sm:$0xff]
    %v3072 = vld [vmem:[#allocation5 + $0x1448] sm:$0xff]
    %v3073 = vld [vmem:[#allocation5 + $0x1450] sm:$0xff]
    %v3074 = vld [vmem:[#allocation5 + $0x1458] sm:$0xff]
    %v3075 = vld [vmem:[#allocation5 + $0x1460] sm:$0xff]
    %v3076 = vld [vmem:[#allocation5 + $0x1468] sm:$0xff]
    %v3077 = vld [vmem:[#allocation5 + $0x1470] sm:$0xff]
    %v3078 = vld [vmem:[#allocation5 + $0x1478] sm:$0xff]
    %v3079 = vld [vmem:[#allocation5 + $0x1480] sm:$0xff]
    %v3080 = vld [vmem:[#allocation5 + $0x1488] sm:$0xff]
    %v3081 = vld [vmem:[#allocation5 + $0x1490] sm:$0xff]
    %v3082 = vld [vmem:[#allocation5 + $0x1498] sm:$0xff]
    %v3083 = vld [vmem:[#allocation5 + $0x14a0] sm:$0xff]
    %v3084 = vld [vmem:[#allocation5 + $0x14a8] sm:$0xff]
    %v3085 = vld [vmem:[#allocation5 + $0x14b0] sm:$0xff]
    %v3086 = vld [vmem:[#allocation5 + $0x14b8] sm:$0xff]
    %v3087 = vld [vmem:[#allocation5 + $0x14c0] sm:$0xff]
    %v3088 = vld [vmem:[#allocation5 + $0x14c8] sm:$0xff]
    %v3089 = vld [vmem:[#allocation5 + $0x14d0] sm:$0xff]
    %v3090 = vld [vmem:[#allocation5 + $0x14d8] sm:$0xff]
    %v3091 = vld [vmem:[#allocation5 + $0x14e0] sm:$0xff]
    %v3092 = vld [vmem:[#allocation5 + $0x14e8] sm:$0xff]
    %v3093 = vld [vmem:[#allocation5 + $0x14f0] sm:$0xff]
    %v3094 = vld [vmem:[#allocation5 + $0x14f8] sm:$0xff]
    %v3095 = vld [vmem:[#allocation5 + $0x1500] sm:$0xff]
    %v3096 = vld [vmem:[#allocation5 + $0x1508] sm:$0xff]
    %v3097 = vld [vmem:[#allocation5 + $0x1510] sm:$0xff]
    %v3098 = vld [vmem:[#allocation5 + $0x1518] sm:$0xff]
    %v3099 = vld [vmem:[#allocation5 + $0x1520] sm:$0xff]
    %v3100 = vld [vmem:[#allocation5 + $0x1528] sm:$0xff]
    %v3101 = vld [vmem:[#allocation5 + $0x1530] sm:$0xff]
    %v3102 = vld [vmem:[#allocation5 + $0x1538] sm:$0xff]
    %v3103 = vld [vmem:[#allocation5 + $0x1540] sm:$0xff]
    %v3104 = vld [vmem:[#allocation5 + $0x1548] sm:$0xff]
    %v3105 = vld [vmem:[#allocation5 + $0x1550] sm:$0xff]
    %v3106 = vld [vmem:[#allocation5 + $0x1558] sm:$0xff]
    %v3107 = vld [vmem:[#allocation5 + $0x1560] sm:$0xff]
    %v3108 = vld [vmem:[#allocation5 + $0x1568] sm:$0xff]
    %v3109 = vld [vmem:[#allocation5 + $0x1570] sm:$0xff]
    %v3110 = vld [vmem:[#allocation5 + $0x1578] sm:$0xff]
    %v3111 = vld [vmem:[#allocation5 + $0x1580] sm:$0xff]
    %v3112 = vld [vmem:[#allocation5 + $0x1588] sm:$0xff]
    %v3113 = vld [vmem:[#allocation5 + $0x1590] sm:$0xff]
    %v3114 = vld [vmem:[#allocation5 + $0x1598] sm:$0xff]
    %v3115 = vld [vmem:[#allocation5 + $0x15a0] sm:$0xff]
    %v3116 = vld [vmem:[#allocation5 + $0x15a8] sm:$0xff]
    %v3117 = vld [vmem:[#allocation5 + $0x15b0] sm:$0xff]
    %v3118 = vld [vmem:[#allocation5 + $0x15b8] sm:$0xff]
    %v3119 = vld [vmem:[#allocation5 + $0x15c0] sm:$0xff]
    %v3120 = vld [vmem:[#allocation5 + $0x15c8] sm:$0xff]
    %v3121 = vld [vmem:[#allocation5 + $0x15d0] sm:$0xff]
    %v3122 = vld [vmem:[#allocation5 + $0x15d8] sm:$0xff]
    %v3123 = vld [vmem:[#allocation5 + $0x15e0] sm:$0xff]
    %v3124 = vld [vmem:[#allocation5 + $0x15e8] sm:$0xff]
    %v3125 = vld [vmem:[#allocation5 + $0x15f0] sm:$0xff]
    %v3126 = vld [vmem:[#allocation5 + $0x15f8] sm:$0xff]
    %v3127 = vld [vmem:[#allocation5 + $0x1600] sm:$0xff]
    %v3128 = vld [vmem:[#allocation5 + $0x1608] sm:$0xff]
    %v3129 = vld [vmem:[#allocation5 + $0x1610] sm:$0xff]
    %v3130 = vld [vmem:[#allocation5 + $0x1618] sm:$0xff]
    %v3131 = vld [vmem:[#allocation5 + $0x1620] sm:$0xff]
    %v3132 = vld [vmem:[#allocation5 + $0x1628] sm:$0xff]
    %v3133 = vld [vmem:[#allocation5 + $0x1630] sm:$0xff]
    %v3134 = vld [vmem:[#allocation5 + $0x1638] sm:$0xff]
    %v3135 = vld [vmem:[#allocation5 + $0x1640] sm:$0xff]
    %v3136 = vld [vmem:[#allocation5 + $0x1648] sm:$0xff]
    %v3137 = vld [vmem:[#allocation5 + $0x1650] sm:$0xff]
    %v3138 = vld [vmem:[#allocation5 + $0x1658] sm:$0xff]
    %v3139 = vld [vmem:[#allocation5 + $0x1660] sm:$0xff]
    %v3140 = vld [vmem:[#allocation5 + $0x1668] sm:$0xff]
    %v3141 = vld [vmem:[#allocation5 + $0x1670] sm:$0xff]
    %v3142 = vld [vmem:[#allocation5 + $0x1678] sm:$0xff]
    %v3143 = vld [vmem:[#allocation5 + $0x1680] sm:$0xff]
    %v3144 = vld [vmem:[#allocation5 + $0x1688] sm:$0xff]
    %v3145 = vld [vmem:[#allocation5 + $0x1690] sm:$0xff]
    %v3146 = vld [vmem:[#allocation5 + $0x1698] sm:$0xff]
    %v3147 = vld [vmem:[#allocation5 + $0x16a0] sm:$0xff]
    %v3148 = vld [vmem:[#allocation5 + $0x16a8] sm:$0xff]
    %v3149 = vld [vmem:[#allocation5 + $0x16b0] sm:$0xff]
    %v3150 = vld [vmem:[#allocation5 + $0x16b8] sm:$0xff]
    %v3151 = vld [vmem:[#allocation5 + $0x16c0] sm:$0xff]
    %v3152 = vld [vmem:[#allocation5 + $0x16c8] sm:$0xff]
    %v3153 = vld [vmem:[#allocation5 + $0x16d0] sm:$0xff]
    %v3154 = vld [vmem:[#allocation5 + $0x16d8] sm:$0xff]
    %v3155 = vld [vmem:[#allocation5 + $0x16e0] sm:$0xff]
    %v3156 = vld [vmem:[#allocation5 + $0x16e8] sm:$0xff]
    %v3157 = vld [vmem:[#allocation5 + $0x16f0] sm:$0xff]
    %v3158 = vld [vmem:[#allocation5 + $0x16f8] sm:$0xff]
    %v3159 = vld [vmem:[#allocation5 + $0x1700] sm:$0xff]
    %v3160 = vld [vmem:[#allocation5 + $0x1708] sm:$0xff]
    %v3161 = vld [vmem:[#allocation5 + $0x1710] sm:$0xff]
    %v3162 = vld [vmem:[#allocation5 + $0x1718] sm:$0xff]
    %v3163 = vld [vmem:[#allocation5 + $0x1720] sm:$0xff]
    %v3164 = vld [vmem:[#allocation5 + $0x1728] sm:$0xff]
    %v3165 = vld [vmem:[#allocation5 + $0x1730] sm:$0xff]
    %v3166 = vld [vmem:[#allocation5 + $0x1738] sm:$0xff]
    %v3167 = vld [vmem:[#allocation5 + $0x1740] sm:$0xff]
    %v3168 = vld [vmem:[#allocation5 + $0x1748] sm:$0xff]
    %v3169 = vld [vmem:[#allocation5 + $0x1750] sm:$0xff]
    %v3170 = vld [vmem:[#allocation5 + $0x1758] sm:$0xff]
    %v3171 = vld [vmem:[#allocation5 + $0x1760] sm:$0xff]
    %v3172 = vld [vmem:[#allocation5 + $0x1768] sm:$0xff]
    %v3173 = vld [vmem:[#allocation5 + $0x1770] sm:$0xff]
    %v3174 = vld [vmem:[#allocation5 + $0x1778] sm:$0xff]
    %v3175 = vld [vmem:[#allocation5 + $0x1780] sm:$0xff]
    %v3176 = vld [vmem:[#allocation5 + $0x1788] sm:$0xff]
    %v3177 = vld [vmem:[#allocation5 + $0x1790] sm:$0xff]
    %v3178 = vld [vmem:[#allocation5 + $0x1798] sm:$0xff]
    %v3179 = vld [vmem:[#allocation5 + $0x17a0] sm:$0xff]
    %v3180 = vld [vmem:[#allocation5 + $0x17a8] sm:$0xff]
    %v3181 = vld [vmem:[#allocation5 + $0x17b0] sm:$0xff]
    %v3182 = vld [vmem:[#allocation5 + $0x17b8] sm:$0xff]
    %v3183 = vld [vmem:[#allocation5 + $0x17c0] sm:$0xff]
    %v3184 = vld [vmem:[#allocation5 + $0x17c8] sm:$0xff]
    %v3185 = vld [vmem:[#allocation5 + $0x17d0] sm:$0xff]
    %v3186 = vld [vmem:[#allocation5 + $0x17d8] sm:$0xff]
    %v3187 = vld [vmem:[#allocation5 + $0x17e0] sm:$0xff]
    %v3188 = vld [vmem:[#allocation5 + $0x17e8] sm:$0xff]
    %v3189 = vld [vmem:[#allocation5 + $0x17f0] sm:$0xff]
    %v3190 = vld [vmem:[#allocation5 + $0x17f8] sm:$0xff]
    %v3191 = vld [vmem:[#allocation5 + $0x1800] sm:$0xff]
    %v3192 = vld [vmem:[#allocation5 + $0x1808] sm:$0xff]
    %v3193 = vld [vmem:[#allocation5 + $0x1810] sm:$0xff]
    %v3194 = vld [vmem:[#allocation5 + $0x1818] sm:$0xff]
    %v3195 = vld [vmem:[#allocation5 + $0x1820] sm:$0xff]
    %v3196 = vld [vmem:[#allocation5 + $0x1828] sm:$0xff]
    %v3197 = vld [vmem:[#allocation5 + $0x1830] sm:$0xff]
    %v3198 = vld [vmem:[#allocation5 + $0x1838] sm:$0xff]
    %v3199 = vld [vmem:[#allocation5 + $0x1840] sm:$0xff]
    %v3200 = vld [vmem:[#allocation5 + $0x1848] sm:$0xff]
    %v3201 = vld [vmem:[#allocation5 + $0x1850] sm:$0xff]
    %v3202 = vld [vmem:[#allocation5 + $0x1858] sm:$0xff]
    %v3203 = vld [vmem:[#allocation5 + $0x1860] sm:$0xff]
    %v3204 = vld [vmem:[#allocation5 + $0x1868] sm:$0xff]
    %v3205 = vld [vmem:[#allocation5 + $0x1870] sm:$0xff]
    %v3206 = vld [vmem:[#allocation5 + $0x1878] sm:$0xff]
    %v3207 = vld [vmem:[#allocation5 + $0x1880] sm:$0xff]
    %v3208 = vld [vmem:[#allocation5 + $0x1888] sm:$0xff]
    %v3209 = vld [vmem:[#allocation5 + $0x1890] sm:$0xff]
    %v3210 = vld [vmem:[#allocation5 + $0x1898] sm:$0xff]
    %v3211 = vld [vmem:[#allocation5 + $0x18a0] sm:$0xff]
    %v3212 = vld [vmem:[#allocation5 + $0x18a8] sm:$0xff]
    %v3213 = vld [vmem:[#allocation5 + $0x18b0] sm:$0xff]
    %v3214 = vld [vmem:[#allocation5 + $0x18b8] sm:$0xff]
    %v3215 = vld [vmem:[#allocation5 + $0x18c0] sm:$0xff]
    %v3216 = vld [vmem:[#allocation5 + $0x18c8] sm:$0xff]
    %v3217 = vld [vmem:[#allocation5 + $0x18d0] sm:$0xff]
    %v3218 = vld [vmem:[#allocation5 + $0x18d8] sm:$0xff]
    %v3219 = vld [vmem:[#allocation5 + $0x18e0] sm:$0xff]
    %v3220 = vld [vmem:[#allocation5 + $0x18e8] sm:$0xff]
    %v3221 = vld [vmem:[#allocation5 + $0x18f0] sm:$0xff]
    %v3222 = vld [vmem:[#allocation5 + $0x18f8] sm:$0xff]
    %v3223 = vld [vmem:[#allocation5 + $0x1900] sm:$0xff]
    %v3224 = vld [vmem:[#allocation5 + $0x1908] sm:$0xff]
    %v3225 = vld [vmem:[#allocation5 + $0x1910] sm:$0xff]
    %v3226 = vld [vmem:[#allocation5 + $0x1918] sm:$0xff]
    %v3227 = vld [vmem:[#allocation5 + $0x1920] sm:$0xff]
    %v3228 = vld [vmem:[#allocation5 + $0x1928] sm:$0xff]
    %v3229 = vld [vmem:[#allocation5 + $0x1930] sm:$0xff]
    %v3230 = vld [vmem:[#allocation5 + $0x1938] sm:$0xff]
    %v3231 = vld [vmem:[#allocation5 + $0x1940] sm:$0xff]
    %v3232 = vld [vmem:[#allocation5 + $0x1948] sm:$0xff]
    %v3233 = vld [vmem:[#allocation5 + $0x1950] sm:$0xff]
    %v3234 = vld [vmem:[#allocation5 + $0x1958] sm:$0xff]
    %v3235 = vld [vmem:[#allocation5 + $0x1960] sm:$0xff]
    %v3236 = vld [vmem:[#allocation5 + $0x1968] sm:$0xff]
    %v3237 = vld [vmem:[#allocation5 + $0x1970] sm:$0xff]
    %v3238 = vld [vmem:[#allocation5 + $0x1978] sm:$0xff]
    %v3239 = vld [vmem:[#allocation5 + $0x1980] sm:$0xff]
    %v3240 = vld [vmem:[#allocation5 + $0x1988] sm:$0xff]
    %v3241 = vld [vmem:[#allocation5 + $0x1990] sm:$0xff]
    %v3242 = vld [vmem:[#allocation5 + $0x1998] sm:$0xff]
    %v3243 = vld [vmem:[#allocation5 + $0x19a0] sm:$0xff]
    %v3244 = vld [vmem:[#allocation5 + $0x19a8] sm:$0xff]
    %v3245 = vld [vmem:[#allocation5 + $0x19b0] sm:$0xff]
    %v3246 = vld [vmem:[#allocation5 + $0x19b8] sm:$0xff]
    %v3247 = vld [vmem:[#allocation5 + $0x19c0] sm:$0xff]
    %v3248 = vld [vmem:[#allocation5 + $0x19c8] sm:$0xff]
    %v3249 = vld [vmem:[#allocation5 + $0x19d0] sm:$0xff]
    %v3250 = vld [vmem:[#allocation5 + $0x19d8] sm:$0xff]
    %v3251 = vld [vmem:[#allocation5 + $0x19e0] sm:$0xff]
    %v3252 = vld [vmem:[#allocation5 + $0x19e8] sm:$0xff]
    %v3253 = vld [vmem:[#allocation5 + $0x19f0] sm:$0xff]
    %v3254 = vld [vmem:[#allocation5 + $0x19f8] sm:$0xff]
    %v3255 = vld [vmem:[#allocation5 + $0x1a00] sm:$0xff]
    %v3256 = vld [vmem:[#allocation5 + $0x1a08] sm:$0xff]
    %v3257 = vld [vmem:[#allocation5 + $0x1a10] sm:$0xff]
    %v3258 = vld [vmem:[#allocation5 + $0x1a18] sm:$0xff]
    %v3259 = vld [vmem:[#allocation5 + $0x1a20] sm:$0xff]
    %v3260 = vld [vmem:[#allocation5 + $0x1a28] sm:$0xff]
    %v3261 = vld [vmem:[#allocation5 + $0x1a30] sm:$0xff]
    %v3262 = vld [vmem:[#allocation5 + $0x1a38] sm:$0xff]
    %v3263 = vld [vmem:[#allocation5 + $0x1a40] sm:$0xff]
    %v3264 = vld [vmem:[#allocation5 + $0x1a48] sm:$0xff]
    %v3265 = vld [vmem:[#allocation5 + $0x1a50] sm:$0xff]
    %v3266 = vld [vmem:[#allocation5 + $0x1a58] sm:$0xff]
    %v3267 = vld [vmem:[#allocation5 + $0x1a60] sm:$0xff]
    %v3268 = vld [vmem:[#allocation5 + $0x1a68] sm:$0xff]
    %v3269 = vld [vmem:[#allocation5 + $0x1a70] sm:$0xff]
    %v3270 = vld [vmem:[#allocation5 + $0x1a78] sm:$0xff]
    %v3271 = vld [vmem:[#allocation5 + $0x1a80] sm:$0xff]
    %v3272 = vld [vmem:[#allocation5 + $0x1a88] sm:$0xff]
    %v3273 = vld [vmem:[#allocation5 + $0x1a90] sm:$0xff]
    %v3274 = vld [vmem:[#allocation5 + $0x1a98] sm:$0xff]
    %v3275 = vld [vmem:[#allocation5 + $0x1aa0] sm:$0xff]
    %v3276 = vld [vmem:[#allocation5 + $0x1aa8] sm:$0xff]
    %v3277 = vld [vmem:[#allocation5 + $0x1ab0] sm:$0xff]
    %v3278 = vld [vmem:[#allocation5 + $0x1ab8] sm:$0xff]
    %v3279 = vld [vmem:[#allocation5 + $0x1ac0] sm:$0xff]
    %v3280 = vld [vmem:[#allocation5 + $0x1ac8] sm:$0xff]
    %v3281 = vld [vmem:[#allocation5 + $0x1ad0] sm:$0xff]
    %v3282 = vld [vmem:[#allocation5 + $0x1ad8] sm:$0xff]
    %v3283 = vld [vmem:[#allocation5 + $0x1ae0] sm:$0xff]
    %v3284 = vld [vmem:[#allocation5 + $0x1ae8] sm:$0xff]
    %v3285 = vld [vmem:[#allocation5 + $0x1af0] sm:$0xff]
    %v3286 = vld [vmem:[#allocation5 + $0x1af8] sm:$0xff]
    %v3287 = vld [vmem:[#allocation5 + $0x1b00] sm:$0xff]
    %v3288 = vld [vmem:[#allocation5 + $0x1b08] sm:$0xff]
    %v3289 = vld [vmem:[#allocation5 + $0x1b10] sm:$0xff]
    %v3290 = vld [vmem:[#allocation5 + $0x1b18] sm:$0xff]
    %v3291 = vld [vmem:[#allocation5 + $0x1b20] sm:$0xff]
    %v3292 = vld [vmem:[#allocation5 + $0x1b28] sm:$0xff]
    %v3293 = vld [vmem:[#allocation5 + $0x1b30] sm:$0xff]
    %v3294 = vld [vmem:[#allocation5 + $0x1b38] sm:$0xff]
    %v3295 = vld [vmem:[#allocation5 + $0x1b40] sm:$0xff]
    %v3296 = vld [vmem:[#allocation5 + $0x1b48] sm:$0xff]
    %v3297 = vld [vmem:[#allocation5 + $0x1b50] sm:$0xff]
    %v3298 = vld [vmem:[#allocation5 + $0x1b58] sm:$0xff]
    %v3299 = vld [vmem:[#allocation5 + $0x1b60] sm:$0xff]
    %v3300 = vld [vmem:[#allocation5 + $0x1b68] sm:$0xff]
    %v3301 = vld [vmem:[#allocation5 + $0x1b70] sm:$0xff]
    %v3302 = vld [vmem:[#allocation5 + $0x1b78] sm:$0xff]
    %v3303 = vld [vmem:[#allocation5 + $0x1b80] sm:$0xff]
    %v3304 = vld [vmem:[#allocation5 + $0x1b88] sm:$0xff]
    %v3305 = vld [vmem:[#allocation5 + $0x1b90] sm:$0xff]
    %v3306 = vld [vmem:[#allocation5 + $0x1b98] sm:$0xff]
    %v3307 = vld [vmem:[#allocation5 + $0x1ba0] sm:$0xff]
    %v3308 = vld [vmem:[#allocation5 + $0x1ba8] sm:$0xff]
    %v3309 = vld [vmem:[#allocation5 + $0x1bb0] sm:$0xff]
    %v3310 = vld [vmem:[#allocation5 + $0x1bb8] sm:$0xff]
    %v3311 = vld [vmem:[#allocation5 + $0x1bc0] sm:$0xff]
    %v3312 = vld [vmem:[#allocation5 + $0x1bc8] sm:$0xff]
    %v3313 = vld [vmem:[#allocation5 + $0x1bd0] sm:$0xff]
    %v3314 = vld [vmem:[#allocation5 + $0x1bd8] sm:$0xff]
    %v3315 = vld [vmem:[#allocation5 + $0x1be0] sm:$0xff]
    %v3316 = vld [vmem:[#allocation5 + $0x1be8] sm:$0xff]
    %v3317 = vld [vmem:[#allocation5 + $0x1bf0] sm:$0xff]
    %v3318 = vld [vmem:[#allocation5 + $0x1bf8] sm:$0xff]
    %v3319 = vld [vmem:[#allocation5 + $0x1c00] sm:$0xff]
    %v3320 = vld [vmem:[#allocation5 + $0x1c08] sm:$0xff]
    %v3321 = vld [vmem:[#allocation5 + $0x1c10] sm:$0xff]
    %v3322 = vld [vmem:[#allocation5 + $0x1c18] sm:$0xff]
    %v3323 = vld [vmem:[#allocation5 + $0x1c20] sm:$0xff]
    %v3324 = vld [vmem:[#allocation5 + $0x1c28] sm:$0xff]
    %v3325 = vld [vmem:[#allocation5 + $0x1c30] sm:$0xff]
    %v3326 = vld [vmem:[#allocation5 + $0x1c38] sm:$0xff]
    %v3327 = vld [vmem:[#allocation5 + $0x1c40] sm:$0xff]
    %v3328 = vld [vmem:[#allocation5 + $0x1c48] sm:$0xff]
    %v3329 = vld [vmem:[#allocation5 + $0x1c50] sm:$0xff]
    %v3330 = vld [vmem:[#allocation5 + $0x1c58] sm:$0xff]
    %v3331 = vld [vmem:[#allocation5 + $0x1c60] sm:$0xff]
    %v3332 = vld [vmem:[#allocation5 + $0x1c68] sm:$0xff]
    %v3333 = vld [vmem:[#allocation5 + $0x1c70] sm:$0xff]
    %v3334 = vld [vmem:[#allocation5 + $0x1c78] sm:$0xff]
    %v3335 = vld [vmem:[#allocation5 + $0x1c80] sm:$0xff]
    %v3336 = vld [vmem:[#allocation5 + $0x1c88] sm:$0xff]
    %v3337 = vld [vmem:[#allocation5 + $0x1c90] sm:$0xff]
    %v3338 = vld [vmem:[#allocation5 + $0x1c98] sm:$0xff]
    %v3339 = vld [vmem:[#allocation5 + $0x1ca0] sm:$0xff]
    %v3340 = vld [vmem:[#allocation5 + $0x1ca8] sm:$0xff]
    %v3341 = vld [vmem:[#allocation5 + $0x1cb0] sm:$0xff]
    %v3342 = vld [vmem:[#allocation5 + $0x1cb8] sm:$0xff]
    %v3343 = vld [vmem:[#allocation5 + $0x1cc0] sm:$0xff]
    %v3344 = vld [vmem:[#allocation5 + $0x1cc8] sm:$0xff]
    %v3345 = vld [vmem:[#allocation5 + $0x1cd0] sm:$0xff]
    %v3346 = vld [vmem:[#allocation5 + $0x1cd8] sm:$0xff]
    %v3347 = vld [vmem:[#allocation5 + $0x1ce0] sm:$0xff]
    %v3348 = vld [vmem:[#allocation5 + $0x1ce8] sm:$0xff]
    %v3349 = vld [vmem:[#allocation5 + $0x1cf0] sm:$0xff]
    %v3350 = vld [vmem:[#allocation5 + $0x1cf8] sm:$0xff]
    %v3351 = vld [vmem:[#allocation5 + $0x1d00] sm:$0xff]
    %v3352 = vld [vmem:[#allocation5 + $0x1d08] sm:$0xff]
    %v3353 = vld [vmem:[#allocation5 + $0x1d10] sm:$0xff]
    %v3354 = vld [vmem:[#allocation5 + $0x1d18] sm:$0xff]
    %v3355 = vld [vmem:[#allocation5 + $0x1d20] sm:$0xff]
    %v3356 = vld [vmem:[#allocation5 + $0x1d28] sm:$0xff]
    %v3357 = vld [vmem:[#allocation5 + $0x1d30] sm:$0xff]
    %v3358 = vld [vmem:[#allocation5 + $0x1d38] sm:$0xff]
    %v3359 = vld [vmem:[#allocation5 + $0x1d40] sm:$0xff]
    %v3360 = vld [vmem:[#allocation5 + $0x1d48] sm:$0xff]
    %v3361 = vld [vmem:[#allocation5 + $0x1d50] sm:$0xff]
    %v3362 = vld [vmem:[#allocation5 + $0x1d58] sm:$0xff]
    %v3363 = vld [vmem:[#allocation5 + $0x1d60] sm:$0xff]
    %v3364 = vld [vmem:[#allocation5 + $0x1d68] sm:$0xff]
    %v3365 = vld [vmem:[#allocation5 + $0x1d70] sm:$0xff]
    %v3366 = vld [vmem:[#allocation5 + $0x1d78] sm:$0xff]
    %v3367 = vld [vmem:[#allocation5 + $0x1d80] sm:$0xff]
    %v3368 = vld [vmem:[#allocation5 + $0x1d88] sm:$0xff]
    %v3369 = vld [vmem:[#allocation5 + $0x1d90] sm:$0xff]
    %v3370 = vld [vmem:[#allocation5 + $0x1d98] sm:$0xff]
    %v3371 = vld [vmem:[#allocation5 + $0x1da0] sm:$0xff]
    %v3372 = vld [vmem:[#allocation5 + $0x1da8] sm:$0xff]
    %v3373 = vld [vmem:[#allocation5 + $0x1db0] sm:$0xff]
    %v3374 = vld [vmem:[#allocation5 + $0x1db8] sm:$0xff]
    %v3375 = vld [vmem:[#allocation5 + $0x1dc0] sm:$0xff]
    %v3376 = vld [vmem:[#allocation5 + $0x1dc8] sm:$0xff]
    %v3377 = vld [vmem:[#allocation5 + $0x1dd0] sm:$0xff]
    %v3378 = vld [vmem:[#allocation5 + $0x1dd8] sm:$0xff]
    %v3379 = vld [vmem:[#allocation5 + $0x1de0] sm:$0xff]
    %v3380 = vld [vmem:[#allocation5 + $0x1de8] sm:$0xff]
    %v3381 = vld [vmem:[#allocation5 + $0x1df0] sm:$0xff]
    %v3382 = vld [vmem:[#allocation5 + $0x1df8] sm:$0xff]
    %v3383 = vld [vmem:[#allocation5 + $0x1e00] sm:$0xff]
    %v3384 = vld [vmem:[#allocation5 + $0x1e08] sm:$0xff]
    %v3385 = vld [vmem:[#allocation5 + $0x1e10] sm:$0xff]
    %v3386 = vld [vmem:[#allocation5 + $0x1e18] sm:$0xff]
    %v3387 = vld [vmem:[#allocation5 + $0x1e20] sm:$0xff]
    %v3388 = vld [vmem:[#allocation5 + $0x1e28] sm:$0xff]
    %v3389 = vld [vmem:[#allocation5 + $0x1e30] sm:$0xff]
    %v3390 = vld [vmem:[#allocation5 + $0x1e38] sm:$0xff]
    %v3391 = vld [vmem:[#allocation5 + $0x1e40] sm:$0xff]
    %v3392 = vld [vmem:[#allocation5 + $0x1e48] sm:$0xff]
    %v3393 = vld [vmem:[#allocation5 + $0x1e50] sm:$0xff]
    %v3394 = vld [vmem:[#allocation5 + $0x1e58] sm:$0xff]
    %v3395 = vld [vmem:[#allocation5 + $0x1e60] sm:$0xff]
    %v3396 = vld [vmem:[#allocation5 + $0x1e68] sm:$0xff]
    %v3397 = vld [vmem:[#allocation5 + $0x1e70] sm:$0xff]
    %v3398 = vld [vmem:[#allocation5 + $0x1e78] sm:$0xff]
    %v3399 = vld [vmem:[#allocation5 + $0x1e80] sm:$0xff]
    %v3400 = vld [vmem:[#allocation5 + $0x1e88] sm:$0xff]
    %v3401 = vld [vmem:[#allocation5 + $0x1e90] sm:$0xff]
    %v3402 = vld [vmem:[#allocation5 + $0x1e98] sm:$0xff]
    %v3403 = vld [vmem:[#allocation5 + $0x1ea0] sm:$0xff]
    %v3404 = vld [vmem:[#allocation5 + $0x1ea8] sm:$0xff]
    %v3405 = vld [vmem:[#allocation5 + $0x1eb0] sm:$0xff]
    %v3406 = vld [vmem:[#allocation5 + $0x1eb8] sm:$0xff]
    %v3407 = vld [vmem:[#allocation5 + $0x1ec0] sm:$0xff]
    %v3408 = vld [vmem:[#allocation5 + $0x1ec8] sm:$0xff]
    %v3409 = vld [vmem:[#allocation5 + $0x1ed0] sm:$0xff]
    %v3410 = vld [vmem:[#allocation5 + $0x1ed8] sm:$0xff]
    %v3411 = vld [vmem:[#allocation5 + $0x1ee0] sm:$0xff]
    %v3412 = vld [vmem:[#allocation5 + $0x1ee8] sm:$0xff]
    %v3413 = vld [vmem:[#allocation5 + $0x1ef0] sm:$0xff]
    %v3414 = vld [vmem:[#allocation5 + $0x1ef8] sm:$0xff]
    %v3415 = vld [vmem:[#allocation5 + $0x1f00] sm:$0xff]
    %v3416 = vld [vmem:[#allocation5 + $0x1f08] sm:$0xff]
    %v3417 = vld [vmem:[#allocation5 + $0x1f10] sm:$0xff]
    %v3418 = vld [vmem:[#allocation5 + $0x1f18] sm:$0xff]
    %v3419 = vld [vmem:[#allocation5 + $0x1f20] sm:$0xff]
    %v3420 = vld [vmem:[#allocation5 + $0x1f28] sm:$0xff]
    %v3421 = vld [vmem:[#allocation5 + $0x1f30] sm:$0xff]
    %v3422 = vld [vmem:[#allocation5 + $0x1f38] sm:$0xff]
    %v3423 = vld [vmem:[#allocation5 + $0x1f40] sm:$0xff]
    %v3424 = vld [vmem:[#allocation5 + $0x1f48] sm:$0xff]
    %v3425 = vld [vmem:[#allocation5 + $0x1f50] sm:$0xff]
    %v3426 = vld [vmem:[#allocation5 + $0x1f58] sm:$0xff]
    %v3427 = vld [vmem:[#allocation5 + $0x1f60] sm:$0xff]
    %v3428 = vld [vmem:[#allocation5 + $0x1f68] sm:$0xff]
    %v3429 = vld [vmem:[#allocation5 + $0x1f70] sm:$0xff]
    %v3430 = vld [vmem:[#allocation5 + $0x1f78] sm:$0xff]
    %v3431 = vld [vmem:[#allocation5 + $0x1f80] sm:$0xff]
    %v3432 = vld [vmem:[#allocation5 + $0x1f88] sm:$0xff]
    %v3433 = vld [vmem:[#allocation5 + $0x1f90] sm:$0xff]
    %v3434 = vld [vmem:[#allocation5 + $0x1f98] sm:$0xff]
    %v3435 = vld [vmem:[#allocation5 + $0x1fa0] sm:$0xff]
    %v3436 = vld [vmem:[#allocation5 + $0x1fa8] sm:$0xff]
    %v3437 = vld [vmem:[#allocation5 + $0x1fb0] sm:$0xff]
    %v3438 = vld [vmem:[#allocation5 + $0x1fb8] sm:$0xff]
    %v3439 = vld [vmem:[#allocation5 + $0x1fc0] sm:$0xff]
    %v3440 = vld [vmem:[#allocation5 + $0x1fc8] sm:$0xff]
    %v3441 = vld [vmem:[#allocation5 + $0x1fd0] sm:$0xff]
    %v3442 = vld [vmem:[#allocation5 + $0x1fd8] sm:$0xff]
    %v3443 = vld [vmem:[#allocation5 + $0x1fe0] sm:$0xff]
    %v3444 = vld [vmem:[#allocation5 + $0x1fe8] sm:$0xff]
    %v3445 = vld [vmem:[#allocation5 + $0x1ff0] sm:$0xff]
    %v3446 = vld [vmem:[#allocation5 + $0x1ff8] sm:$0xff]
    %3447 = vst [vmem:[#allocation1] ss:$2 sm:$0xff] %v88
    %s3448 = scalar_lea.vmem [#allocation1], 16
    %3449 = vst [vmem:[%s3448] ss:$2 sm:$0xff] %v89
    %s3450 = scalar_lea.vmem [#allocation1], 32
    %3451 = vst [vmem:[%s3450] ss:$2 sm:$0xff] %v90
    %s3452 = scalar_lea.vmem [#allocation1], 48
    %3453 = vst [vmem:[%s3452] ss:$2 sm:$0xff] %v91
    %v3454 = vld.sshfl [vmem:[#allocation1] sm:$0xff pattern:$0x75316420]
    %v3455 = vld.sshfl [vmem:[#allocation1 + $0x8] sm:$0xff pattern:$0x75316420]
    %v3456 = vld.sshfl [vmem:[#allocation1 + $0x10] sm:$0xff pattern:$0x75316420]
    %v3457 = vld.sshfl [vmem:[#allocation1 + $0x18] sm:$0xff pattern:$0x75316420]
    %v3458 = vld.sshfl [vmem:[#allocation1 + $0x20] sm:$0xff pattern:$0x75316420]
    %v3459 = vld.sshfl [vmem:[#allocation1 + $0x28] sm:$0xff pattern:$0x75316420]
    %v3460 = vld.sshfl [vmem:[#allocation1 + $0x30] sm:$0xff pattern:$0x75316420]
    %v3461 = vld.sshfl [vmem:[#allocation1 + $0x38] sm:$0xff pattern:$0x75316420]
    %3470 = vmatpush.msra.mxu0 %v2543
    %3471 = vmatpush.msra.mxu0 %v2535
    %3472 = vmatpush.msra.mxu0 %v2527
    %3473 = vmatpush.msra.mxu0 %v2519
    %3474 = vmatpush.msra.mxu0 %v2511
    %3475 = vmatpush.msra.mxu0 %v2503
    %3476 = vmatpush.msra.mxu0 %v2495
    %3477 = vmatpush.msra.mxu0 %v2487
    %3478 = vmatpush.msra.mxu0 %v2479
    %3479 = vmatpush.msra.mxu0 %v2471
    %3480 = vmatpush.msra.mxu0 %v2463
    %3481 = vmatpush.msra.mxu0 %v2455
    %3482 = vmatpush.msra.mxu0 %v2447
    %3483 = vmatpush.msra.mxu0 %v2439
    %3484 = vmatpush.msra.mxu0 %v2431
    %3485 = vmatpush.msra.mxu0 %v2423
    %3486 = vmatmul.f32.gmra.mxu0 %v3454
    %v3487 = vpop.f32.mrf.mxu0
    %v3488 = vadd.f32 0.0, %v3487
    %3489 = vdwg.mxu0
    %3490 = vmatpush.msra.mxu0 %v2671
    %3491 = vmatpush.msra.mxu0 %v2663
    %3492 = vmatpush.msra.mxu0 %v2655
    %3493 = vmatpush.msra.mxu0 %v2647
    %3494 = vmatpush.msra.mxu0 %v2639
    %3495 = vmatpush.msra.mxu0 %v2631
    %3496 = vmatpush.msra.mxu0 %v2623
    %3497 = vmatpush.msra.mxu0 %v2615
    %3498 = vmatpush.msra.mxu0 %v2607
    %3499 = vmatpush.msra.mxu0 %v2599
    %3500 = vmatpush.msra.mxu0 %v2591
    %3501 = vmatpush.msra.mxu0 %v2583
    %3502 = vmatpush.msra.mxu0 %v2575
    %3503 = vmatpush.msra.mxu0 %v2567
    %3504 = vmatpush.msra.mxu0 %v2559
    %3505 = vmatpush.msra.mxu0 %v2551
    %3506 = vmatmul.f32.gmra.mxu0 %v3455
    %v3507 = vpop.f32.mrf.mxu0
    %v3508 = vadd.f32 %v3488, %v3507
    %3509 = vdwg.mxu0
    %3510 = vmatpush.msra.mxu0 %v2799
    %3511 = vmatpush.msra.mxu0 %v2791
    %3512 = vmatpush.msra.mxu0 %v2783
    %3513 = vmatpush.msra.mxu0 %v2775
    %3514 = vmatpush.msra.mxu0 %v2767
    %3515 = vmatpush.msra.mxu0 %v2759
    %3516 = vmatpush.msra.mxu0 %v2751
    %3517 = vmatpush.msra.mxu0 %v2743
    %3518 = vmatpush.msra.mxu0 %v2735
    %3519 = vmatpush.msra.mxu0 %v2727
    %3520 = vmatpush.msra.mxu0 %v2719
    %3521 = vmatpush.msra.mxu0 %v2711
    %3522 = vmatpush.msra.mxu0 %v2703
    %3523 = vmatpush.msra.mxu0 %v2695
    %3524 = vmatpush.msra.mxu0 %v2687
    %3525 = vmatpush.msra.mxu0 %v2679
    %3526 = vmatmul.f32.gmra.mxu0 %v3456
    %v3527 = vpop.f32.mrf.mxu0
    %v3528 = vadd.f32 %v3508, %v3527
    %3529 = vdwg.mxu0
    %3530 = vmatpush.msra.mxu0 %v2927
    %3531 = vmatpush.msra.mxu0 %v2919
    %3532 = vmatpush.msra.mxu0 %v2911
    %3533 = vmatpush.msra.mxu0 %v2903
    %3534 = vmatpush.msra.mxu0 %v2895
    %3535 = vmatpush.msra.mxu0 %v2887
    %3536 = vmatpush.msra.mxu0 %v2879
    %3537 = vmatpush.msra.mxu0 %v2871
    %3538 = vmatpush.msra.mxu0 %v2863
    %3539 = vmatpush.msra.mxu0 %v2855
    %3540 = vmatpush.msra.mxu0 %v2847
    %3541 = vmatpush.msra.mxu0 %v2839
    %3542 = vmatpush.msra.mxu0 %v2831
    %3543 = vmatpush.msra.mxu0 %v2823
    %3544 = vmatpush.msra.mxu0 %v2815
    %3545 = vmatpush.msra.mxu0 %v2807
    %3546 = vmatmul.f32.gmra.mxu0 %v3457
    %v3547 = vpop.f32.mrf.mxu0
    %v3548 = vadd.f32 %v3528, %v3547
    %3549 = vdwg.mxu0
    %3550 = vmatpush.msra.mxu0 %v3055
    %3551 = vmatpush.msra.mxu0 %v3047
    %3552 = vmatpush.msra.mxu0 %v3039
    %3553 = vmatpush.msra.mxu0 %v3031
    %3554 = vmatpush.msra.mxu0 %v3023
    %3555 = vmatpush.msra.mxu0 %v3015
    %3556 = vmatpush.msra.mxu0 %v3007
    %3557 = vmatpush.msra.mxu0 %v2999
    %3558 = vmatpush.msra.mxu0 %v2991
    %3559 = vmatpush.msra.mxu0 %v2983
    %3560 = vmatpush.msra.mxu0 %v2975
    %3561 = vmatpush.msra.mxu0 %v2967
    %3562 = vmatpush.msra.mxu0 %v2959
    %3563 = vmatpush.msra.mxu0 %v2951
    %3564 = vmatpush.msra.mxu0 %v2943
    %3565 = vmatpush.msra.mxu0 %v2935
    %3566 = vmatmul.f32.gmra.mxu0 %v3458
    %v3567 = vpop.f32.mrf.mxu0
    %v3568 = vadd.f32 %v3548, %v3567
    %3569 = vdwg.mxu0
    %3570 = vmatpush.msra.mxu0 %v3183
    %3571 = vmatpush.msra.mxu0 %v3175
    %3572 = vmatpush.msra.mxu0 %v3167
    %3573 = vmatpush.msra.mxu0 %v3159
    %3574 = vmatpush.msra.mxu0 %v3151
    %3575 = vmatpush.msra.mxu0 %v3143
    %3576 = vmatpush.msra.mxu0 %v3135
    %3577 = vmatpush.msra.mxu0 %v3127
    %3578 = vmatpush.msra.mxu0 %v3119
    %3579 = vmatpush.msra.mxu0 %v3111
    %3580 = vmatpush.msra.mxu0 %v3103
    %3581 = vmatpush.msra.mxu0 %v3095
    %3582 = vmatpush.msra.mxu0 %v3087
    %3583 = vmatpush.msra.mxu0 %v3079
    %3584 = vmatpush.msra.mxu0 %v3071
    %3585 = vmatpush.msra.mxu0 %v3063
    %3586 = vmatmul.f32.gmra.mxu0 %v3459
    %v3587 = vpop.f32.mrf.mxu0
    %v3588 = vadd.f32 %v3568, %v3587
    %3589 = vdwg.mxu0
    %3590 = vmatpush.msra.mxu0 %v3311
    %3591 = vmatpush.msra.mxu0 %v3303
    %3592 = vmatpush.msra.mxu0 %v3295
    %3593 = vmatpush.msra.mxu0 %v3287
    %3594 = vmatpush.msra.mxu0 %v3279
    %3595 = vmatpush.msra.mxu0 %v3271
    %3596 = vmatpush.msra.mxu0 %v3263
    %3597 = vmatpush.msra.mxu0 %v3255
    %3598 = vmatpush.msra.mxu0 %v3247
    %3599 = vmatpush.msra.mxu0 %v3239
    %3600 = vmatpush.msra.mxu0 %v3231
    %3601 = vmatpush.msra.mxu0 %v3223
    %3602 = vmatpush.msra.mxu0 %v3215
    %3603 = vmatpush.msra.mxu0 %v3207
    %3604 = vmatpush.msra.mxu0 %v3199
    %3605 = vmatpush.msra.mxu0 %v3191
    %3606 = vmatmul.f32.gmra.mxu0 %v3460
    %v3607 = vpop.f32.mrf.mxu0
    %v3608 = vadd.f32 %v3588, %v3607
    %3609 = vdwg.mxu0
    %3610 = vmatpush.msra.mxu0 %v3439
    %3611 = vmatpush.msra.mxu0 %v3431
    %3612 = vmatpush.msra.mxu0 %v3423
    %3613 = vmatpush.msra.mxu0 %v3415
    %3614 = vmatpush.msra.mxu0 %v3407
    %3615 = vmatpush.msra.mxu0 %v3399
    %3616 = vmatpush.msra.mxu0 %v3391
    %3617 = vmatpush.msra.mxu0 %v3383
    %3618 = vmatpush.msra.mxu0 %v3375
    %3619 = vmatpush.msra.mxu0 %v3367
    %3620 = vmatpush.msra.mxu0 %v3359
    %3621 = vmatpush.msra.mxu0 %v3351
    %3622 = vmatpush.msra.mxu0 %v3343
    %3623 = vmatpush.msra.mxu0 %v3335
    %3624 = vmatpush.msra.mxu0 %v3327
    %3625 = vmatpush.msra.mxu0 %v3319
    %3626 = vmatmul.f32.gmra.mxu0 %v3461
    %v3627 = vpop.f32.mrf.mxu0
    %v3628 = vadd.f32 %v3608, %v3627
    %3629 = vdwg.mxu0
    %3630 = vmatpush.msra.mxu0 %v2544
    %3631 = vmatpush.msra.mxu0 %v2536
    %3632 = vmatpush.msra.mxu0 %v2528
    %3633 = vmatpush.msra.mxu0 %v2520
    %3634 = vmatpush.msra.mxu0 %v2512
    %3635 = vmatpush.msra.mxu0 %v2504
    %3636 = vmatpush.msra.mxu0 %v2496
    %3637 = vmatpush.msra.mxu0 %v2488
    %3638 = vmatpush.msra.mxu0 %v2480
    %3639 = vmatpush.msra.mxu0 %v2472
    %3640 = vmatpush.msra.mxu0 %v2464
    %3641 = vmatpush.msra.mxu0 %v2456
    %3642 = vmatpush.msra.mxu0 %v2448
    %3643 = vmatpush.msra.mxu0 %v2440
    %3644 = vmatpush.msra.mxu0 %v2432
    %3645 = vmatpush.msra.mxu0 %v2424
    %3646 = vmatmul.f32.gmra.mxu0 %v3454
    %v3647 = vpop.f32.mrf.mxu0
    %v3648 = vadd.f32 0.0, %v3647
    %3649 = vdwg.mxu0
    %3650 = vmatpush.msra.mxu0 %v2672
    %3651 = vmatpush.msra.mxu0 %v2664
    %3652 = vmatpush.msra.mxu0 %v2656
    %3653 = vmatpush.msra.mxu0 %v2648
    %3654 = vmatpush.msra.mxu0 %v2640
    %3655 = vmatpush.msra.mxu0 %v2632
    %3656 = vmatpush.msra.mxu0 %v2624
    %3657 = vmatpush.msra.mxu0 %v2616
    %3658 = vmatpush.msra.mxu0 %v2608
    %3659 = vmatpush.msra.mxu0 %v2600
    %3660 = vmatpush.msra.mxu0 %v2592
    %3661 = vmatpush.msra.mxu0 %v2584
    %3662 = vmatpush.msra.mxu0 %v2576
    %3663 = vmatpush.msra.mxu0 %v2568
    %3664 = vmatpush.msra.mxu0 %v2560
    %3665 = vmatpush.msra.mxu0 %v2552
    %3666 = vmatmul.f32.gmra.mxu0 %v3455
    %v3667 = vpop.f32.mrf.mxu0
    %v3668 = vadd.f32 %v3648, %v3667
    %3669 = vdwg.mxu0
    %3670 = vmatpush.msra.mxu0 %v2800
    %3671 = vmatpush.msra.mxu0 %v2792
    %3672 = vmatpush.msra.mxu0 %v2784
    %3673 = vmatpush.msra.mxu0 %v2776
    %3674 = vmatpush.msra.mxu0 %v2768
    %3675 = vmatpush.msra.mxu0 %v2760
    %3676 = vmatpush.msra.mxu0 %v2752
    %3677 = vmatpush.msra.mxu0 %v2744
    %3678 = vmatpush.msra.mxu0 %v2736
    %3679 = vmatpush.msra.mxu0 %v2728
    %3680 = vmatpush.msra.mxu0 %v2720
    %3681 = vmatpush.msra.mxu0 %v2712
    %3682 = vmatpush.msra.mxu0 %v2704
    %3683 = vmatpush.msra.mxu0 %v2696
    %3684 = vmatpush.msra.mxu0 %v2688
    %3685 = vmatpush.msra.mxu0 %v2680
    %3686 = vmatmul.f32.gmra.mxu0 %v3456
    %v3687 = vpop.f32.mrf.mxu0
    %v3688 = vadd.f32 %v3668, %v3687
    %3689 = vdwg.mxu0
    %3690 = vmatpush.msra.mxu0 %v2928
    %3691 = vmatpush.msra.mxu0 %v2920
    %3692 = vmatpush.msra.mxu0 %v2912
    %3693 = vmatpush.msra.mxu0 %v2904
    %3694 = vmatpush.msra.mxu0 %v2896
    %3695 = vmatpush.msra.mxu0 %v2888
    %3696 = vmatpush.msra.mxu0 %v2880
    %3697 = vmatpush.msra.mxu0 %v2872
    %3698 = vmatpush.msra.mxu0 %v2864
    %3699 = vmatpush.msra.mxu0 %v2856
    %3700 = vmatpush.msra.mxu0 %v2848
    %3701 = vmatpush.msra.mxu0 %v2840
    %3702 = vmatpush.msra.mxu0 %v2832
    %3703 = vmatpush.msra.mxu0 %v2824
    %3704 = vmatpush.msra.mxu0 %v2816
    %3705 = vmatpush.msra.mxu0 %v2808
    %3706 = vmatmul.f32.gmra.mxu0 %v3457
    %v3707 = vpop.f32.mrf.mxu0
    %v3708 = vadd.f32 %v3688, %v3707
    %3709 = vdwg.mxu0
    %3710 = vmatpush.msra.mxu0 %v3056
    %3711 = vmatpush.msra.mxu0 %v3048
    %3712 = vmatpush.msra.mxu0 %v3040
    %3713 = vmatpush.msra.mxu0 %v3032
    %3714 = vmatpush.msra.mxu0 %v3024
    %3715 = vmatpush.msra.mxu0 %v3016
    %3716 = vmatpush.msra.mxu0 %v3008
    %3717 = vmatpush.msra.mxu0 %v3000
    %3718 = vmatpush.msra.mxu0 %v2992
    %3719 = vmatpush.msra.mxu0 %v2984
    %3720 = vmatpush.msra.mxu0 %v2976
    %3721 = vmatpush.msra.mxu0 %v2968
    %3722 = vmatpush.msra.mxu0 %v2960
    %3723 = vmatpush.msra.mxu0 %v2952
    %3724 = vmatpush.msra.mxu0 %v2944
    %3725 = vmatpush.msra.mxu0 %v2936
    %3726 = vmatmul.f32.gmra.mxu0 %v3458
    %v3727 = vpop.f32.mrf.mxu0
    %v3728 = vadd.f32 %v3708, %v3727
    %3729 = vdwg.mxu0
    %3730 = vmatpush.msra.mxu0 %v3184
    %3731 = vmatpush.msra.mxu0 %v3176
    %3732 = vmatpush.msra.mxu0 %v3168
    %3733 = vmatpush.msra.mxu0 %v3160
    %3734 = vmatpush.msra.mxu0 %v3152
    %3735 = vmatpush.msra.mxu0 %v3144
    %3736 = vmatpush.msra.mxu0 %v3136
    %3737 = vmatpush.msra.mxu0 %v3128
    %3738 = vmatpush.msra.mxu0 %v3120
    %3739 = vmatpush.msra.mxu0 %v3112
    %3740 = vmatpush.msra.mxu0 %v3104
    %3741 = vmatpush.msra.mxu0 %v3096
    %3742 = vmatpush.msra.mxu0 %v3088
    %3743 = vmatpush.msra.mxu0 %v3080
    %3744 = vmatpush.msra.mxu0 %v3072
    %3745 = vmatpush.msra.mxu0 %v3064
    %3746 = vmatmul.f32.gmra.mxu0 %v3459
    %v3747 = vpop.f32.mrf.mxu0
    %v3748 = vadd.f32 %v3728, %v3747
    %3749 = vdwg.mxu0
    %3750 = vmatpush.msra.mxu0 %v3312
    %3751 = vmatpush.msra.mxu0 %v3304
    %3752 = vmatpush.msra.mxu0 %v3296
    %3753 = vmatpush.msra.mxu0 %v3288
    %3754 = vmatpush.msra.mxu0 %v3280
    %3755 = vmatpush.msra.mxu0 %v3272
    %3756 = vmatpush.msra.mxu0 %v3264
    %3757 = vmatpush.msra.mxu0 %v3256
    %3758 = vmatpush.msra.mxu0 %v3248
    %3759 = vmatpush.msra.mxu0 %v3240
    %3760 = vmatpush.msra.mxu0 %v3232
    %3761 = vmatpush.msra.mxu0 %v3224
    %3762 = vmatpush.msra.mxu0 %v3216
    %3763 = vmatpush.msra.mxu0 %v3208
    %3764 = vmatpush.msra.mxu0 %v3200
    %3765 = vmatpush.msra.mxu0 %v3192
    %3766 = vmatmul.f32.gmra.mxu0 %v3460
    %v3767 = vpop.f32.mrf.mxu0
    %v3768 = vadd.f32 %v3748, %v3767
    %3769 = vdwg.mxu0
    %3770 = vmatpush.msra.mxu0 %v3440
    %3771 = vmatpush.msra.mxu0 %v3432
    %3772 = vmatpush.msra.mxu0 %v3424
    %3773 = vmatpush.msra.mxu0 %v3416
    %3774 = vmatpush.msra.mxu0 %v3408
    %3775 = vmatpush.msra.mxu0 %v3400
    %3776 = vmatpush.msra.mxu0 %v3392
    %3777 = vmatpush.msra.mxu0 %v3384
    %3778 = vmatpush.msra.mxu0 %v3376
    %3779 = vmatpush.msra.mxu0 %v3368
    %3780 = vmatpush.msra.mxu0 %v3360
    %3781 = vmatpush.msra.mxu0 %v3352
    %3782 = vmatpush.msra.mxu0 %v3344
    %3783 = vmatpush.msra.mxu0 %v3336
    %3784 = vmatpush.msra.mxu0 %v3328
    %3785 = vmatpush.msra.mxu0 %v3320
    %3786 = vmatmul.f32.gmra.mxu0 %v3461
    %v3787 = vpop.f32.mrf.mxu0
    %v3788 = vadd.f32 %v3768, %v3787
    %3789 = vdwg.mxu0
    %3790 = vmatpush.msra.mxu0 %v2545
    %3791 = vmatpush.msra.mxu0 %v2537
    %3792 = vmatpush.msra.mxu0 %v2529
    %3793 = vmatpush.msra.mxu0 %v2521
    %3794 = vmatpush.msra.mxu0 %v2513
    %3795 = vmatpush.msra.mxu0 %v2505
    %3796 = vmatpush.msra.mxu0 %v2497
    %3797 = vmatpush.msra.mxu0 %v2489
    %3798 = vmatpush.msra.mxu0 %v2481
    %3799 = vmatpush.msra.mxu0 %v2473
    %3800 = vmatpush.msra.mxu0 %v2465
    %3801 = vmatpush.msra.mxu0 %v2457
    %3802 = vmatpush.msra.mxu0 %v2449
    %3803 = vmatpush.msra.mxu0 %v2441
    %3804 = vmatpush.msra.mxu0 %v2433
    %3805 = vmatpush.msra.mxu0 %v2425
    %3806 = vmatmul.f32.gmra.mxu0 %v3454
    %v3807 = vpop.f32.mrf.mxu0
    %v3808 = vadd.f32 0.0, %v3807
    %3809 = vdwg.mxu0
    %3810 = vmatpush.msra.mxu0 %v2673
    %3811 = vmatpush.msra.mxu0 %v2665
    %3812 = vmatpush.msra.mxu0 %v2657
    %3813 = vmatpush.msra.mxu0 %v2649
    %3814 = vmatpush.msra.mxu0 %v2641
    %3815 = vmatpush.msra.mxu0 %v2633
    %3816 = vmatpush.msra.mxu0 %v2625
    %3817 = vmatpush.msra.mxu0 %v2617
    %3818 = vmatpush.msra.mxu0 %v2609
    %3819 = vmatpush.msra.mxu0 %v2601
    %3820 = vmatpush.msra.mxu0 %v2593
    %3821 = vmatpush.msra.mxu0 %v2585
    %3822 = vmatpush.msra.mxu0 %v2577
    %3823 = vmatpush.msra.mxu0 %v2569
    %3824 = vmatpush.msra.mxu0 %v2561
    %3825 = vmatpush.msra.mxu0 %v2553
    %3826 = vmatmul.f32.gmra.mxu0 %v3455
    %v3827 = vpop.f32.mrf.mxu0
    %v3828 = vadd.f32 %v3808, %v3827
    %3829 = vdwg.mxu0
    %3830 = vmatpush.msra.mxu0 %v2801
    %3831 = vmatpush.msra.mxu0 %v2793
    %3832 = vmatpush.msra.mxu0 %v2785
    %3833 = vmatpush.msra.mxu0 %v2777
    %3834 = vmatpush.msra.mxu0 %v2769
    %3835 = vmatpush.msra.mxu0 %v2761
    %3836 = vmatpush.msra.mxu0 %v2753
    %3837 = vmatpush.msra.mxu0 %v2745
    %3838 = vmatpush.msra.mxu0 %v2737
    %3839 = vmatpush.msra.mxu0 %v2729
    %3840 = vmatpush.msra.mxu0 %v2721
    %3841 = vmatpush.msra.mxu0 %v2713
    %3842 = vmatpush.msra.mxu0 %v2705
    %3843 = vmatpush.msra.mxu0 %v2697
    %3844 = vmatpush.msra.mxu0 %v2689
    %3845 = vmatpush.msra.mxu0 %v2681
    %3846 = vmatmul.f32.gmra.mxu0 %v3456
    %v3847 = vpop.f32.mrf.mxu0
    %v3848 = vadd.f32 %v3828, %v3847
    %3849 = vdwg.mxu0
    %3850 = vmatpush.msra.mxu0 %v2929
    %3851 = vmatpush.msra.mxu0 %v2921
    %3852 = vmatpush.msra.mxu0 %v2913
    %3853 = vmatpush.msra.mxu0 %v2905
    %3854 = vmatpush.msra.mxu0 %v2897
    %3855 = vmatpush.msra.mxu0 %v2889
    %3856 = vmatpush.msra.mxu0 %v2881
    %3857 = vmatpush.msra.mxu0 %v2873
    %3858 = vmatpush.msra.mxu0 %v2865
    %3859 = vmatpush.msra.mxu0 %v2857
    %3860 = vmatpush.msra.mxu0 %v2849
    %3861 = vmatpush.msra.mxu0 %v2841
    %3862 = vmatpush.msra.mxu0 %v2833
    %3863 = vmatpush.msra.mxu0 %v2825
    %3864 = vmatpush.msra.mxu0 %v2817
    %3865 = vmatpush.msra.mxu0 %v2809
    %3866 = vmatmul.f32.gmra.mxu0 %v3457
    %v3867 = vpop.f32.mrf.mxu0
    %v3868 = vadd.f32 %v3848, %v3867
    %3869 = vdwg.mxu0
    %3870 = vmatpush.msra.mxu0 %v3057
    %3871 = vmatpush.msra.mxu0 %v3049
    %3872 = vmatpush.msra.mxu0 %v3041
    %3873 = vmatpush.msra.mxu0 %v3033
    %3874 = vmatpush.msra.mxu0 %v3025
    %3875 = vmatpush.msra.mxu0 %v3017
    %3876 = vmatpush.msra.mxu0 %v3009
    %3877 = vmatpush.msra.mxu0 %v3001
    %3878 = vmatpush.msra.mxu0 %v2993
    %3879 = vmatpush.msra.mxu0 %v2985
    %3880 = vmatpush.msra.mxu0 %v2977
    %3881 = vmatpush.msra.mxu0 %v2969
    %3882 = vmatpush.msra.mxu0 %v2961
    %3883 = vmatpush.msra.mxu0 %v2953
    %3884 = vmatpush.msra.mxu0 %v2945
    %3885 = vmatpush.msra.mxu0 %v2937
    %3886 = vmatmul.f32.gmra.mxu0 %v3458
    %v3887 = vpop.f32.mrf.mxu0
    %v3888 = vadd.f32 %v3868, %v3887
    %3889 = vdwg.mxu0
    %3890 = vmatpush.msra.mxu0 %v3185
    %3891 = vmatpush.msra.mxu0 %v3177
    %3892 = vmatpush.msra.mxu0 %v3169
    %3893 = vmatpush.msra.mxu0 %v3161
    %3894 = vmatpush.msra.mxu0 %v3153
    %3895 = vmatpush.msra.mxu0 %v3145
    %3896 = vmatpush.msra.mxu0 %v3137
    %3897 = vmatpush.msra.mxu0 %v3129
    %3898 = vmatpush.msra.mxu0 %v3121
    %3899 = vmatpush.msra.mxu0 %v3113
    %3900 = vmatpush.msra.mxu0 %v3105
    %3901 = vmatpush.msra.mxu0 %v3097
    %3902 = vmatpush.msra.mxu0 %v3089
    %3903 = vmatpush.msra.mxu0 %v3081
    %3904 = vmatpush.msra.mxu0 %v3073
    %3905 = vmatpush.msra.mxu0 %v3065
    %3906 = vmatmul.f32.gmra.mxu0 %v3459
    %v3907 = vpop.f32.mrf.mxu0
    %v3908 = vadd.f32 %v3888, %v3907
    %3909 = vdwg.mxu0
    %3910 = vmatpush.msra.mxu0 %v3313
    %3911 = vmatpush.msra.mxu0 %v3305
    %3912 = vmatpush.msra.mxu0 %v3297
    %3913 = vmatpush.msra.mxu0 %v3289
    %3914 = vmatpush.msra.mxu0 %v3281
    %3915 = vmatpush.msra.mxu0 %v3273
    %3916 = vmatpush.msra.mxu0 %v3265
    %3917 = vmatpush.msra.mxu0 %v3257
    %3918 = vmatpush.msra.mxu0 %v3249
    %3919 = vmatpush.msra.mxu0 %v3241
    %3920 = vmatpush.msra.mxu0 %v3233
    %3921 = vmatpush.msra.mxu0 %v3225
    %3922 = vmatpush.msra.mxu0 %v3217
    %3923 = vmatpush.msra.mxu0 %v3209
    %3924 = vmatpush.msra.mxu0 %v3201
    %3925 = vmatpush.msra.mxu0 %v3193
    %3926 = vmatmul.f32.gmra.mxu0 %v3460
    %v3927 = vpop.f32.mrf.mxu0
    %v3928 = vadd.f32 %v3908, %v3927
    %3929 = vdwg.mxu0
    %3930 = vmatpush.msra.mxu0 %v3441
    %3931 = vmatpush.msra.mxu0 %v3433
    %3932 = vmatpush.msra.mxu0 %v3425
    %3933 = vmatpush.msra.mxu0 %v3417
    %3934 = vmatpush.msra.mxu0 %v3409
    %3935 = vmatpush.msra.mxu0 %v3401
    %3936 = vmatpush.msra.mxu0 %v3393
    %3937 = vmatpush.msra.mxu0 %v3385
    %3938 = vmatpush.msra.mxu0 %v3377
    %3939 = vmatpush.msra.mxu0 %v3369
    %3940 = vmatpush.msra.mxu0 %v3361
    %3941 = vmatpush.msra.mxu0 %v3353
    %3942 = vmatpush.msra.mxu0 %v3345
    %3943 = vmatpush.msra.mxu0 %v3337
    %3944 = vmatpush.msra.mxu0 %v3329
    %3945 = vmatpush.msra.mxu0 %v3321
    %3946 = vmatmul.f32.gmra.mxu0 %v3461
    %v3947 = vpop.f32.mrf.mxu0
    %v3948 = vadd.f32 %v3928, %v3947
    %3949 = vdwg.mxu0
    %3950 = vmatpush.msra.mxu0 %v2546
    %3951 = vmatpush.msra.mxu0 %v2538
    %3952 = vmatpush.msra.mxu0 %v2530
    %3953 = vmatpush.msra.mxu0 %v2522
    %3954 = vmatpush.msra.mxu0 %v2514
    %3955 = vmatpush.msra.mxu0 %v2506
    %3956 = vmatpush.msra.mxu0 %v2498
    %3957 = vmatpush.msra.mxu0 %v2490
    %3958 = vmatpush.msra.mxu0 %v2482
    %3959 = vmatpush.msra.mxu0 %v2474
    %3960 = vmatpush.msra.mxu0 %v2466
    %3961 = vmatpush.msra.mxu0 %v2458
    %3962 = vmatpush.msra.mxu0 %v2450
    %3963 = vmatpush.msra.mxu0 %v2442
    %3964 = vmatpush.msra.mxu0 %v2434
    %3965 = vmatpush.msra.mxu0 %v2426
    %3966 = vmatmul.f32.gmra.mxu0 %v3454
    %v3967 = vpop.f32.mrf.mxu0
    %v3968 = vadd.f32 0.0, %v3967
    %3969 = vdwg.mxu0
    %3970 = vmatpush.msra.mxu0 %v2674
    %3971 = vmatpush.msra.mxu0 %v2666
    %3972 = vmatpush.msra.mxu0 %v2658
    %3973 = vmatpush.msra.mxu0 %v2650
    %3974 = vmatpush.msra.mxu0 %v2642
    %3975 = vmatpush.msra.mxu0 %v2634
    %3976 = vmatpush.msra.mxu0 %v2626
    %3977 = vmatpush.msra.mxu0 %v2618
    %3978 = vmatpush.msra.mxu0 %v2610
    %3979 = vmatpush.msra.mxu0 %v2602
    %3980 = vmatpush.msra.mxu0 %v2594
    %3981 = vmatpush.msra.mxu0 %v2586
    %3982 = vmatpush.msra.mxu0 %v2578
    %3983 = vmatpush.msra.mxu0 %v2570
    %3984 = vmatpush.msra.mxu0 %v2562
    %3985 = vmatpush.msra.mxu0 %v2554
    %3986 = vmatmul.f32.gmra.mxu0 %v3455
    %v3987 = vpop.f32.mrf.mxu0
    %v3988 = vadd.f32 %v3968, %v3987
    %3989 = vdwg.mxu0
    %3990 = vmatpush.msra.mxu0 %v2802
    %3991 = vmatpush.msra.mxu0 %v2794
    %3992 = vmatpush.msra.mxu0 %v2786
    %3993 = vmatpush.msra.mxu0 %v2778
    %3994 = vmatpush.msra.mxu0 %v2770
    %3995 = vmatpush.msra.mxu0 %v2762
    %3996 = vmatpush.msra.mxu0 %v2754
    %3997 = vmatpush.msra.mxu0 %v2746
    %3998 = vmatpush.msra.mxu0 %v2738
    %3999 = vmatpush.msra.mxu0 %v2730
    %4000 = vmatpush.msra.mxu0 %v2722
    %4001 = vmatpush.msra.mxu0 %v2714
    %4002 = vmatpush.msra.mxu0 %v2706
    %4003 = vmatpush.msra.mxu0 %v2698
    %4004 = vmatpush.msra.mxu0 %v2690
    %4005 = vmatpush.msra.mxu0 %v2682
    %4006 = vmatmul.f32.gmra.mxu0 %v3456
    %v4007 = vpop.f32.mrf.mxu0
    %v4008 = vadd.f32 %v3988, %v4007
    %4009 = vdwg.mxu0
    %4010 = vmatpush.msra.mxu0 %v2930
    %4011 = vmatpush.msra.mxu0 %v2922
    %4012 = vmatpush.msra.mxu0 %v2914
    %4013 = vmatpush.msra.mxu0 %v2906
    %4014 = vmatpush.msra.mxu0 %v2898
    %4015 = vmatpush.msra.mxu0 %v2890
    %4016 = vmatpush.msra.mxu0 %v2882
    %4017 = vmatpush.msra.mxu0 %v2874
    %4018 = vmatpush.msra.mxu0 %v2866
    %4019 = vmatpush.msra.mxu0 %v2858
    %4020 = vmatpush.msra.mxu0 %v2850
    %4021 = vmatpush.msra.mxu0 %v2842
    %4022 = vmatpush.msra.mxu0 %v2834
    %4023 = vmatpush.msra.mxu0 %v2826
    %4024 = vmatpush.msra.mxu0 %v2818
    %4025 = vmatpush.msra.mxu0 %v2810
    %4026 = vmatmul.f32.gmra.mxu0 %v3457
    %v4027 = vpop.f32.mrf.mxu0
    %v4028 = vadd.f32 %v4008, %v4027
    %4029 = vdwg.mxu0
    %4030 = vmatpush.msra.mxu0 %v3058
    %4031 = vmatpush.msra.mxu0 %v3050
    %4032 = vmatpush.msra.mxu0 %v3042
    %4033 = vmatpush.msra.mxu0 %v3034
    %4034 = vmatpush.msra.mxu0 %v3026
    %4035 = vmatpush.msra.mxu0 %v3018
    %4036 = vmatpush.msra.mxu0 %v3010
    %4037 = vmatpush.msra.mxu0 %v3002
    %4038 = vmatpush.msra.mxu0 %v2994
    %4039 = vmatpush.msra.mxu0 %v2986
    %4040 = vmatpush.msra.mxu0 %v2978
    %4041 = vmatpush.msra.mxu0 %v2970
    %4042 = vmatpush.msra.mxu0 %v2962
    %4043 = vmatpush.msra.mxu0 %v2954
    %4044 = vmatpush.msra.mxu0 %v2946
    %4045 = vmatpush.msra.mxu0 %v2938
    %4046 = vmatmul.f32.gmra.mxu0 %v3458
    %v4047 = vpop.f32.mrf.mxu0
    %v4048 = vadd.f32 %v4028, %v4047
    %4049 = vdwg.mxu0
    %4050 = vmatpush.msra.mxu0 %v3186
    %4051 = vmatpush.msra.mxu0 %v3178
    %4052 = vmatpush.msra.mxu0 %v3170
    %4053 = vmatpush.msra.mxu0 %v3162
    %4054 = vmatpush.msra.mxu0 %v3154
    %4055 = vmatpush.msra.mxu0 %v3146
    %4056 = vmatpush.msra.mxu0 %v3138
    %4057 = vmatpush.msra.mxu0 %v3130
    %4058 = vmatpush.msra.mxu0 %v3122
    %4059 = vmatpush.msra.mxu0 %v3114
    %4060 = vmatpush.msra.mxu0 %v3106
    %4061 = vmatpush.msra.mxu0 %v3098
    %4062 = vmatpush.msra.mxu0 %v3090
    %4063 = vmatpush.msra.mxu0 %v3082
    %4064 = vmatpush.msra.mxu0 %v3074
    %4065 = vmatpush.msra.mxu0 %v3066
    %4066 = vmatmul.f32.gmra.mxu0 %v3459
    %v4067 = vpop.f32.mrf.mxu0
    %v4068 = vadd.f32 %v4048, %v4067
    %4069 = vdwg.mxu0
    %4070 = vmatpush.msra.mxu0 %v3314
    %4071 = vmatpush.msra.mxu0 %v3306
    %4072 = vmatpush.msra.mxu0 %v3298
    %4073 = vmatpush.msra.mxu0 %v3290
    %4074 = vmatpush.msra.mxu0 %v3282
    %4075 = vmatpush.msra.mxu0 %v3274
    %4076 = vmatpush.msra.mxu0 %v3266
    %4077 = vmatpush.msra.mxu0 %v3258
    %4078 = vmatpush.msra.mxu0 %v3250
    %4079 = vmatpush.msra.mxu0 %v3242
    %4080 = vmatpush.msra.mxu0 %v3234
    %4081 = vmatpush.msra.mxu0 %v3226
    %4082 = vmatpush.msra.mxu0 %v3218
    %4083 = vmatpush.msra.mxu0 %v3210
    %4084 = vmatpush.msra.mxu0 %v3202
    %4085 = vmatpush.msra.mxu0 %v3194
    %4086 = vmatmul.f32.gmra.mxu0 %v3460
    %v4087 = vpop.f32.mrf.mxu0
    %v4088 = vadd.f32 %v4068, %v4087
    %4089 = vdwg.mxu0
    %4090 = vmatpush.msra.mxu0 %v3442
    %4091 = vmatpush.msra.mxu0 %v3434
    %4092 = vmatpush.msra.mxu0 %v3426
    %4093 = vmatpush.msra.mxu0 %v3418
    %4094 = vmatpush.msra.mxu0 %v3410
    %4095 = vmatpush.msra.mxu0 %v3402
    %4096 = vmatpush.msra.mxu0 %v3394
    %4097 = vmatpush.msra.mxu0 %v3386
    %4098 = vmatpush.msra.mxu0 %v3378
    %4099 = vmatpush.msra.mxu0 %v3370
    %4100 = vmatpush.msra.mxu0 %v3362
    %4101 = vmatpush.msra.mxu0 %v3354
    %4102 = vmatpush.msra.mxu0 %v3346
    %4103 = vmatpush.msra.mxu0 %v3338
    %4104 = vmatpush.msra.mxu0 %v3330
    %4105 = vmatpush.msra.mxu0 %v3322
    %4106 = vmatmul.f32.gmra.mxu0 %v3461
    %v4107 = vpop.f32.mrf.mxu0
    %v4108 = vadd.f32 %v4088, %v4107
    %4109 = vdwg.mxu0
    %4110 = vmatpush.msra.mxu0 %v2547
    %4111 = vmatpush.msra.mxu0 %v2539
    %4112 = vmatpush.msra.mxu0 %v2531
    %4113 = vmatpush.msra.mxu0 %v2523
    %4114 = vmatpush.msra.mxu0 %v2515
    %4115 = vmatpush.msra.mxu0 %v2507
    %4116 = vmatpush.msra.mxu0 %v2499
    %4117 = vmatpush.msra.mxu0 %v2491
    %4118 = vmatpush.msra.mxu0 %v2483
    %4119 = vmatpush.msra.mxu0 %v2475
    %4120 = vmatpush.msra.mxu0 %v2467
    %4121 = vmatpush.msra.mxu0 %v2459
    %4122 = vmatpush.msra.mxu0 %v2451
    %4123 = vmatpush.msra.mxu0 %v2443
    %4124 = vmatpush.msra.mxu0 %v2435
    %4125 = vmatpush.msra.mxu0 %v2427
    %4126 = vmatmul.f32.gmra.mxu0 %v3454
    %v4127 = vpop.f32.mrf.mxu0
    %v4128 = vadd.f32 0.0, %v4127
    %4129 = vdwg.mxu0
    %4130 = vmatpush.msra.mxu0 %v2675
    %4131 = vmatpush.msra.mxu0 %v2667
    %4132 = vmatpush.msra.mxu0 %v2659
    %4133 = vmatpush.msra.mxu0 %v2651
    %4134 = vmatpush.msra.mxu0 %v2643
    %4135 = vmatpush.msra.mxu0 %v2635
    %4136 = vmatpush.msra.mxu0 %v2627
    %4137 = vmatpush.msra.mxu0 %v2619
    %4138 = vmatpush.msra.mxu0 %v2611
    %4139 = vmatpush.msra.mxu0 %v2603
    %4140 = vmatpush.msra.mxu0 %v2595
    %4141 = vmatpush.msra.mxu0 %v2587
    %4142 = vmatpush.msra.mxu0 %v2579
    %4143 = vmatpush.msra.mxu0 %v2571
    %4144 = vmatpush.msra.mxu0 %v2563
    %4145 = vmatpush.msra.mxu0 %v2555
    %4146 = vmatmul.f32.gmra.mxu0 %v3455
    %v4147 = vpop.f32.mrf.mxu0
    %v4148 = vadd.f32 %v4128, %v4147
    %4149 = vdwg.mxu0
    %4150 = vmatpush.msra.mxu0 %v2803
    %4151 = vmatpush.msra.mxu0 %v2795
    %4152 = vmatpush.msra.mxu0 %v2787
    %4153 = vmatpush.msra.mxu0 %v2779
    %4154 = vmatpush.msra.mxu0 %v2771
    %4155 = vmatpush.msra.mxu0 %v2763
    %4156 = vmatpush.msra.mxu0 %v2755
    %4157 = vmatpush.msra.mxu0 %v2747
    %4158 = vmatpush.msra.mxu0 %v2739
    %4159 = vmatpush.msra.mxu0 %v2731
    %4160 = vmatpush.msra.mxu0 %v2723
    %4161 = vmatpush.msra.mxu0 %v2715
    %4162 = vmatpush.msra.mxu0 %v2707
    %4163 = vmatpush.msra.mxu0 %v2699
    %4164 = vmatpush.msra.mxu0 %v2691
    %4165 = vmatpush.msra.mxu0 %v2683
    %4166 = vmatmul.f32.gmra.mxu0 %v3456
    %v4167 = vpop.f32.mrf.mxu0
    %v4168 = vadd.f32 %v4148, %v4167
    %4169 = vdwg.mxu0
    %4170 = vmatpush.msra.mxu0 %v2931
    %4171 = vmatpush.msra.mxu0 %v2923
    %4172 = vmatpush.msra.mxu0 %v2915
    %4173 = vmatpush.msra.mxu0 %v2907
    %4174 = vmatpush.msra.mxu0 %v2899
    %4175 = vmatpush.msra.mxu0 %v2891
    %4176 = vmatpush.msra.mxu0 %v2883
    %4177 = vmatpush.msra.mxu0 %v2875
    %4178 = vmatpush.msra.mxu0 %v2867
    %4179 = vmatpush.msra.mxu0 %v2859
    %4180 = vmatpush.msra.mxu0 %v2851
    %4181 = vmatpush.msra.mxu0 %v2843
    %4182 = vmatpush.msra.mxu0 %v2835
    %4183 = vmatpush.msra.mxu0 %v2827
    %4184 = vmatpush.msra.mxu0 %v2819
    %4185 = vmatpush.msra.mxu0 %v2811
    %4186 = vmatmul.f32.gmra.mxu0 %v3457
    %v4187 = vpop.f32.mrf.mxu0
    %v4188 = vadd.f32 %v4168, %v4187
    %4189 = vdwg.mxu0
    %4190 = vmatpush.msra.mxu0 %v3059
    %4191 = vmatpush.msra.mxu0 %v3051
    %4192 = vmatpush.msra.mxu0 %v3043
    %4193 = vmatpush.msra.mxu0 %v3035
    %4194 = vmatpush.msra.mxu0 %v3027
    %4195 = vmatpush.msra.mxu0 %v3019
    %4196 = vmatpush.msra.mxu0 %v3011
    %4197 = vmatpush.msra.mxu0 %v3003
    %4198 = vmatpush.msra.mxu0 %v2995
    %4199 = vmatpush.msra.mxu0 %v2987
    %4200 = vmatpush.msra.mxu0 %v2979
    %4201 = vmatpush.msra.mxu0 %v2971
    %4202 = vmatpush.msra.mxu0 %v2963
    %4203 = vmatpush.msra.mxu0 %v2955
    %4204 = vmatpush.msra.mxu0 %v2947
    %4205 = vmatpush.msra.mxu0 %v2939
    %4206 = vmatmul.f32.gmra.mxu0 %v3458
    %v4207 = vpop.f32.mrf.mxu0
    %v4208 = vadd.f32 %v4188, %v4207
    %4209 = vdwg.mxu0
    %4210 = vmatpush.msra.mxu0 %v3187
    %4211 = vmatpush.msra.mxu0 %v3179
    %4212 = vmatpush.msra.mxu0 %v3171
    %4213 = vmatpush.msra.mxu0 %v3163
    %4214 = vmatpush.msra.mxu0 %v3155
    %4215 = vmatpush.msra.mxu0 %v3147
    %4216 = vmatpush.msra.mxu0 %v3139
    %4217 = vmatpush.msra.mxu0 %v3131
    %4218 = vmatpush.msra.mxu0 %v3123
    %4219 = vmatpush.msra.mxu0 %v3115
    %4220 = vmatpush.msra.mxu0 %v3107
    %4221 = vmatpush.msra.mxu0 %v3099
    %4222 = vmatpush.msra.mxu0 %v3091
    %4223 = vmatpush.msra.mxu0 %v3083
    %4224 = vmatpush.msra.mxu0 %v3075
    %4225 = vmatpush.msra.mxu0 %v3067
    %4226 = vmatmul.f32.gmra.mxu0 %v3459
    %v4227 = vpop.f32.mrf.mxu0
    %v4228 = vadd.f32 %v4208, %v4227
    %4229 = vdwg.mxu0
    %4230 = vmatpush.msra.mxu0 %v3315
    %4231 = vmatpush.msra.mxu0 %v3307
    %4232 = vmatpush.msra.mxu0 %v3299
    %4233 = vmatpush.msra.mxu0 %v3291
    %4234 = vmatpush.msra.mxu0 %v3283
    %4235 = vmatpush.msra.mxu0 %v3275
    %4236 = vmatpush.msra.mxu0 %v3267
    %4237 = vmatpush.msra.mxu0 %v3259
    %4238 = vmatpush.msra.mxu0 %v3251
    %4239 = vmatpush.msra.mxu0 %v3243
    %4240 = vmatpush.msra.mxu0 %v3235
    %4241 = vmatpush.msra.mxu0 %v3227
    %4242 = vmatpush.msra.mxu0 %v3219
    %4243 = vmatpush.msra.mxu0 %v3211
    %4244 = vmatpush.msra.mxu0 %v3203
    %4245 = vmatpush.msra.mxu0 %v3195
    %4246 = vmatmul.f32.gmra.mxu0 %v3460
    %v4247 = vpop.f32.mrf.mxu0
    %v4248 = vadd.f32 %v4228, %v4247
    %4249 = vdwg.mxu0
    %4250 = vmatpush.msra.mxu0 %v3443
    %4251 = vmatpush.msra.mxu0 %v3435
    %4252 = vmatpush.msra.mxu0 %v3427
    %4253 = vmatpush.msra.mxu0 %v3419
    %4254 = vmatpush.msra.mxu0 %v3411
    %4255 = vmatpush.msra.mxu0 %v3403
    %4256 = vmatpush.msra.mxu0 %v3395
    %4257 = vmatpush.msra.mxu0 %v3387
    %4258 = vmatpush.msra.mxu0 %v3379
    %4259 = vmatpush.msra.mxu0 %v3371
    %4260 = vmatpush.msra.mxu0 %v3363
    %4261 = vmatpush.msra.mxu0 %v3355
    %4262 = vmatpush.msra.mxu0 %v3347
    %4263 = vmatpush.msra.mxu0 %v3339
    %4264 = vmatpush.msra.mxu0 %v3331
    %4265 = vmatpush.msra.mxu0 %v3323
    %4266 = vmatmul.f32.gmra.mxu0 %v3461
    %v4267 = vpop.f32.mrf.mxu0
    %v4268 = vadd.f32 %v4248, %v4267
    %4269 = vdwg.mxu0
    %4270 = vmatpush.msra.mxu0 %v2548
    %4271 = vmatpush.msra.mxu0 %v2540
    %4272 = vmatpush.msra.mxu0 %v2532
    %4273 = vmatpush.msra.mxu0 %v2524
    %4274 = vmatpush.msra.mxu0 %v2516
    %4275 = vmatpush.msra.mxu0 %v2508
    %4276 = vmatpush.msra.mxu0 %v2500
    %4277 = vmatpush.msra.mxu0 %v2492
    %4278 = vmatpush.msra.mxu0 %v2484
    %4279 = vmatpush.msra.mxu0 %v2476
    %4280 = vmatpush.msra.mxu0 %v2468
    %4281 = vmatpush.msra.mxu0 %v2460
    %4282 = vmatpush.msra.mxu0 %v2452
    %4283 = vmatpush.msra.mxu0 %v2444
    %4284 = vmatpush.msra.mxu0 %v2436
    %4285 = vmatpush.msra.mxu0 %v2428
    %4286 = vmatmul.f32.gmra.mxu0 %v3454
    %v4287 = vpop.f32.mrf.mxu0
    %v4288 = vadd.f32 0.0, %v4287
    %4289 = vdwg.mxu0
    %4290 = vmatpush.msra.mxu0 %v2676
    %4291 = vmatpush.msra.mxu0 %v2668
    %4292 = vmatpush.msra.mxu0 %v2660
    %4293 = vmatpush.msra.mxu0 %v2652
    %4294 = vmatpush.msra.mxu0 %v2644
    %4295 = vmatpush.msra.mxu0 %v2636
    %4296 = vmatpush.msra.mxu0 %v2628
    %4297 = vmatpush.msra.mxu0 %v2620
    %4298 = vmatpush.msra.mxu0 %v2612
    %4299 = vmatpush.msra.mxu0 %v2604
    %4300 = vmatpush.msra.mxu0 %v2596
    %4301 = vmatpush.msra.mxu0 %v2588
    %4302 = vmatpush.msra.mxu0 %v2580
    %4303 = vmatpush.msra.mxu0 %v2572
    %4304 = vmatpush.msra.mxu0 %v2564
    %4305 = vmatpush.msra.mxu0 %v2556
    %4306 = vmatmul.f32.gmra.mxu0 %v3455
    %v4307 = vpop.f32.mrf.mxu0
    %v4308 = vadd.f32 %v4288, %v4307
    %4309 = vdwg.mxu0
    %4310 = vmatpush.msra.mxu0 %v2804
    %4311 = vmatpush.msra.mxu0 %v2796
    %4312 = vmatpush.msra.mxu0 %v2788
    %4313 = vmatpush.msra.mxu0 %v2780
    %4314 = vmatpush.msra.mxu0 %v2772
    %4315 = vmatpush.msra.mxu0 %v2764
    %4316 = vmatpush.msra.mxu0 %v2756
    %4317 = vmatpush.msra.mxu0 %v2748
    %4318 = vmatpush.msra.mxu0 %v2740
    %4319 = vmatpush.msra.mxu0 %v2732
    %4320 = vmatpush.msra.mxu0 %v2724
    %4321 = vmatpush.msra.mxu0 %v2716
    %4322 = vmatpush.msra.mxu0 %v2708
    %4323 = vmatpush.msra.mxu0 %v2700
    %4324 = vmatpush.msra.mxu0 %v2692
    %4325 = vmatpush.msra.mxu0 %v2684
    %4326 = vmatmul.f32.gmra.mxu0 %v3456
    %v4327 = vpop.f32.mrf.mxu0
    %v4328 = vadd.f32 %v4308, %v4327
    %4329 = vdwg.mxu0
    %4330 = vmatpush.msra.mxu0 %v2932
    %4331 = vmatpush.msra.mxu0 %v2924
    %4332 = vmatpush.msra.mxu0 %v2916
    %4333 = vmatpush.msra.mxu0 %v2908
    %4334 = vmatpush.msra.mxu0 %v2900
    %4335 = vmatpush.msra.mxu0 %v2892
    %4336 = vmatpush.msra.mxu0 %v2884
    %4337 = vmatpush.msra.mxu0 %v2876
    %4338 = vmatpush.msra.mxu0 %v2868
    %4339 = vmatpush.msra.mxu0 %v2860
    %4340 = vmatpush.msra.mxu0 %v2852
    %4341 = vmatpush.msra.mxu0 %v2844
    %4342 = vmatpush.msra.mxu0 %v2836
    %4343 = vmatpush.msra.mxu0 %v2828
    %4344 = vmatpush.msra.mxu0 %v2820
    %4345 = vmatpush.msra.mxu0 %v2812
    %4346 = vmatmul.f32.gmra.mxu0 %v3457
    %v4347 = vpop.f32.mrf.mxu0
    %v4348 = vadd.f32 %v4328, %v4347
    %4349 = vdwg.mxu0
    %4350 = vmatpush.msra.mxu0 %v3060
    %4351 = vmatpush.msra.mxu0 %v3052
    %4352 = vmatpush.msra.mxu0 %v3044
    %4353 = vmatpush.msra.mxu0 %v3036
    %4354 = vmatpush.msra.mxu0 %v3028
    %4355 = vmatpush.msra.mxu0 %v3020
    %4356 = vmatpush.msra.mxu0 %v3012
    %4357 = vmatpush.msra.mxu0 %v3004
    %4358 = vmatpush.msra.mxu0 %v2996
    %4359 = vmatpush.msra.mxu0 %v2988
    %4360 = vmatpush.msra.mxu0 %v2980
    %4361 = vmatpush.msra.mxu0 %v2972
    %4362 = vmatpush.msra.mxu0 %v2964
    %4363 = vmatpush.msra.mxu0 %v2956
    %4364 = vmatpush.msra.mxu0 %v2948
    %4365 = vmatpush.msra.mxu0 %v2940
    %4366 = vmatmul.f32.gmra.mxu0 %v3458
    %v4367 = vpop.f32.mrf.mxu0
    %v4368 = vadd.f32 %v4348, %v4367
    %4369 = vdwg.mxu0
    %4370 = vmatpush.msra.mxu0 %v3188
    %4371 = vmatpush.msra.mxu0 %v3180
    %4372 = vmatpush.msra.mxu0 %v3172
    %4373 = vmatpush.msra.mxu0 %v3164
    %4374 = vmatpush.msra.mxu0 %v3156
    %4375 = vmatpush.msra.mxu0 %v3148
    %4376 = vmatpush.msra.mxu0 %v3140
    %4377 = vmatpush.msra.mxu0 %v3132
    %4378 = vmatpush.msra.mxu0 %v3124
    %4379 = vmatpush.msra.mxu0 %v3116
    %4380 = vmatpush.msra.mxu0 %v3108
    %4381 = vmatpush.msra.mxu0 %v3100
    %4382 = vmatpush.msra.mxu0 %v3092
    %4383 = vmatpush.msra.mxu0 %v3084
    %4384 = vmatpush.msra.mxu0 %v3076
    %4385 = vmatpush.msra.mxu0 %v3068
    %4386 = vmatmul.f32.gmra.mxu0 %v3459
    %v4387 = vpop.f32.mrf.mxu0
    %v4388 = vadd.f32 %v4368, %v4387
    %4389 = vdwg.mxu0
    %4390 = vmatpush.msra.mxu0 %v3316
    %4391 = vmatpush.msra.mxu0 %v3308
    %4392 = vmatpush.msra.mxu0 %v3300
    %4393 = vmatpush.msra.mxu0 %v3292
    %4394 = vmatpush.msra.mxu0 %v3284
    %4395 = vmatpush.msra.mxu0 %v3276
    %4396 = vmatpush.msra.mxu0 %v3268
    %4397 = vmatpush.msra.mxu0 %v3260
    %4398 = vmatpush.msra.mxu0 %v3252
    %4399 = vmatpush.msra.mxu0 %v3244
    %4400 = vmatpush.msra.mxu0 %v3236
    %4401 = vmatpush.msra.mxu0 %v3228
    %4402 = vmatpush.msra.mxu0 %v3220
    %4403 = vmatpush.msra.mxu0 %v3212
    %4404 = vmatpush.msra.mxu0 %v3204
    %4405 = vmatpush.msra.mxu0 %v3196
    %4406 = vmatmul.f32.gmra.mxu0 %v3460
    %v4407 = vpop.f32.mrf.mxu0
    %v4408 = vadd.f32 %v4388, %v4407
    %4409 = vdwg.mxu0
    %4410 = vmatpush.msra.mxu0 %v3444
    %4411 = vmatpush.msra.mxu0 %v3436
    %4412 = vmatpush.msra.mxu0 %v3428
    %4413 = vmatpush.msra.mxu0 %v3420
    %4414 = vmatpush.msra.mxu0 %v3412
    %4415 = vmatpush.msra.mxu0 %v3404
    %4416 = vmatpush.msra.mxu0 %v3396
    %4417 = vmatpush.msra.mxu0 %v3388
    %4418 = vmatpush.msra.mxu0 %v3380
    %4419 = vmatpush.msra.mxu0 %v3372
    %4420 = vmatpush.msra.mxu0 %v3364
    %4421 = vmatpush.msra.mxu0 %v3356
    %4422 = vmatpush.msra.mxu0 %v3348
    %4423 = vmatpush.msra.mxu0 %v3340
    %4424 = vmatpush.msra.mxu0 %v3332
    %4425 = vmatpush.msra.mxu0 %v3324
    %4426 = vmatmul.f32.gmra.mxu0 %v3461
    %v4427 = vpop.f32.mrf.mxu0
    %v4428 = vadd.f32 %v4408, %v4427
    %4429 = vdwg.mxu0
    %4430 = vmatpush.msra.mxu0 %v2549
    %4431 = vmatpush.msra.mxu0 %v2541
    %4432 = vmatpush.msra.mxu0 %v2533
    %4433 = vmatpush.msra.mxu0 %v2525
    %4434 = vmatpush.msra.mxu0 %v2517
    %4435 = vmatpush.msra.mxu0 %v2509
    %4436 = vmatpush.msra.mxu0 %v2501
    %4437 = vmatpush.msra.mxu0 %v2493
    %4438 = vmatpush.msra.mxu0 %v2485
    %4439 = vmatpush.msra.mxu0 %v2477
    %4440 = vmatpush.msra.mxu0 %v2469
    %4441 = vmatpush.msra.mxu0 %v2461
    %4442 = vmatpush.msra.mxu0 %v2453
    %4443 = vmatpush.msra.mxu0 %v2445
    %4444 = vmatpush.msra.mxu0 %v2437
    %4445 = vmatpush.msra.mxu0 %v2429
    %4446 = vmatmul.f32.gmra.mxu0 %v3454
    %v4447 = vpop.f32.mrf.mxu0
    %v4448 = vadd.f32 0.0, %v4447
    %4449 = vdwg.mxu0
    %4450 = vmatpush.msra.mxu0 %v2677
    %4451 = vmatpush.msra.mxu0 %v2669
    %4452 = vmatpush.msra.mxu0 %v2661
    %4453 = vmatpush.msra.mxu0 %v2653
    %4454 = vmatpush.msra.mxu0 %v2645
    %4455 = vmatpush.msra.mxu0 %v2637
    %4456 = vmatpush.msra.mxu0 %v2629
    %4457 = vmatpush.msra.mxu0 %v2621
    %4458 = vmatpush.msra.mxu0 %v2613
    %4459 = vmatpush.msra.mxu0 %v2605
    %4460 = vmatpush.msra.mxu0 %v2597
    %4461 = vmatpush.msra.mxu0 %v2589
    %4462 = vmatpush.msra.mxu0 %v2581
    %4463 = vmatpush.msra.mxu0 %v2573
    %4464 = vmatpush.msra.mxu0 %v2565
    %4465 = vmatpush.msra.mxu0 %v2557
    %4466 = vmatmul.f32.gmra.mxu0 %v3455
    %v4467 = vpop.f32.mrf.mxu0
    %v4468 = vadd.f32 %v4448, %v4467
    %4469 = vdwg.mxu0
    %4470 = vmatpush.msra.mxu0 %v2805
    %4471 = vmatpush.msra.mxu0 %v2797
    %4472 = vmatpush.msra.mxu0 %v2789
    %4473 = vmatpush.msra.mxu0 %v2781
    %4474 = vmatpush.msra.mxu0 %v2773
    %4475 = vmatpush.msra.mxu0 %v2765
    %4476 = vmatpush.msra.mxu0 %v2757
    %4477 = vmatpush.msra.mxu0 %v2749
    %4478 = vmatpush.msra.mxu0 %v2741
    %4479 = vmatpush.msra.mxu0 %v2733
    %4480 = vmatpush.msra.mxu0 %v2725
    %4481 = vmatpush.msra.mxu0 %v2717
    %4482 = vmatpush.msra.mxu0 %v2709
    %4483 = vmatpush.msra.mxu0 %v2701
    %4484 = vmatpush.msra.mxu0 %v2693
    %4485 = vmatpush.msra.mxu0 %v2685
    %4486 = vmatmul.f32.gmra.mxu0 %v3456
    %v4487 = vpop.f32.mrf.mxu0
    %v4488 = vadd.f32 %v4468, %v4487
    %4489 = vdwg.mxu0
    %4490 = vmatpush.msra.mxu0 %v2933
    %4491 = vmatpush.msra.mxu0 %v2925
    %4492 = vmatpush.msra.mxu0 %v2917
    %4493 = vmatpush.msra.mxu0 %v2909
    %4494 = vmatpush.msra.mxu0 %v2901
    %4495 = vmatpush.msra.mxu0 %v2893
    %4496 = vmatpush.msra.mxu0 %v2885
    %4497 = vmatpush.msra.mxu0 %v2877
    %4498 = vmatpush.msra.mxu0 %v2869
    %4499 = vmatpush.msra.mxu0 %v2861
    %4500 = vmatpush.msra.mxu0 %v2853
    %4501 = vmatpush.msra.mxu0 %v2845
    %4502 = vmatpush.msra.mxu0 %v2837
    %4503 = vmatpush.msra.mxu0 %v2829
    %4504 = vmatpush.msra.mxu0 %v2821
    %4505 = vmatpush.msra.mxu0 %v2813
    %4506 = vmatmul.f32.gmra.mxu0 %v3457
    %v4507 = vpop.f32.mrf.mxu0
    %v4508 = vadd.f32 %v4488, %v4507
    %4509 = vdwg.mxu0
    %4510 = vmatpush.msra.mxu0 %v3061
    %4511 = vmatpush.msra.mxu0 %v3053
    %4512 = vmatpush.msra.mxu0 %v3045
    %4513 = vmatpush.msra.mxu0 %v3037
    %4514 = vmatpush.msra.mxu0 %v3029
    %4515 = vmatpush.msra.mxu0 %v3021
    %4516 = vmatpush.msra.mxu0 %v3013
    %4517 = vmatpush.msra.mxu0 %v3005
    %4518 = vmatpush.msra.mxu0 %v2997
    %4519 = vmatpush.msra.mxu0 %v2989
    %4520 = vmatpush.msra.mxu0 %v2981
    %4521 = vmatpush.msra.mxu0 %v2973
    %4522 = vmatpush.msra.mxu0 %v2965
    %4523 = vmatpush.msra.mxu0 %v2957
    %4524 = vmatpush.msra.mxu0 %v2949
    %4525 = vmatpush.msra.mxu0 %v2941
    %4526 = vmatmul.f32.gmra.mxu0 %v3458
    %v4527 = vpop.f32.mrf.mxu0
    %v4528 = vadd.f32 %v4508, %v4527
    %4529 = vdwg.mxu0
    %4530 = vmatpush.msra.mxu0 %v3189
    %4531 = vmatpush.msra.mxu0 %v3181
    %4532 = vmatpush.msra.mxu0 %v3173
    %4533 = vmatpush.msra.mxu0 %v3165
    %4534 = vmatpush.msra.mxu0 %v3157
    %4535 = vmatpush.msra.mxu0 %v3149
    %4536 = vmatpush.msra.mxu0 %v3141
    %4537 = vmatpush.msra.mxu0 %v3133
    %4538 = vmatpush.msra.mxu0 %v3125
    %4539 = vmatpush.msra.mxu0 %v3117
    %4540 = vmatpush.msra.mxu0 %v3109
    %4541 = vmatpush.msra.mxu0 %v3101
    %4542 = vmatpush.msra.mxu0 %v3093
    %4543 = vmatpush.msra.mxu0 %v3085
    %4544 = vmatpush.msra.mxu0 %v3077
    %4545 = vmatpush.msra.mxu0 %v3069
    %4546 = vmatmul.f32.gmra.mxu0 %v3459
    %v4547 = vpop.f32.mrf.mxu0
    %v4548 = vadd.f32 %v4528, %v4547
    %4549 = vdwg.mxu0
    %4550 = vmatpush.msra.mxu0 %v3317
    %4551 = vmatpush.msra.mxu0 %v3309
    %4552 = vmatpush.msra.mxu0 %v3301
    %4553 = vmatpush.msra.mxu0 %v3293
    %4554 = vmatpush.msra.mxu0 %v3285
    %4555 = vmatpush.msra.mxu0 %v3277
    %4556 = vmatpush.msra.mxu0 %v3269
    %4557 = vmatpush.msra.mxu0 %v3261
    %4558 = vmatpush.msra.mxu0 %v3253
    %4559 = vmatpush.msra.mxu0 %v3245
    %4560 = vmatpush.msra.mxu0 %v3237
    %4561 = vmatpush.msra.mxu0 %v3229
    %4562 = vmatpush.msra.mxu0 %v3221
    %4563 = vmatpush.msra.mxu0 %v3213
    %4564 = vmatpush.msra.mxu0 %v3205
    %4565 = vmatpush.msra.mxu0 %v3197
    %4566 = vmatmul.f32.gmra.mxu0 %v3460
    %v4567 = vpop.f32.mrf.mxu0
    %v4568 = vadd.f32 %v4548, %v4567
    %4569 = vdwg.mxu0
    %4570 = vmatpush.msra.mxu0 %v3445
    %4571 = vmatpush.msra.mxu0 %v3437
    %4572 = vmatpush.msra.mxu0 %v3429
    %4573 = vmatpush.msra.mxu0 %v3421
    %4574 = vmatpush.msra.mxu0 %v3413
    %4575 = vmatpush.msra.mxu0 %v3405
    %4576 = vmatpush.msra.mxu0 %v3397
    %4577 = vmatpush.msra.mxu0 %v3389
    %4578 = vmatpush.msra.mxu0 %v3381
    %4579 = vmatpush.msra.mxu0 %v3373
    %4580 = vmatpush.msra.mxu0 %v3365
    %4581 = vmatpush.msra.mxu0 %v3357
    %4582 = vmatpush.msra.mxu0 %v3349
    %4583 = vmatpush.msra.mxu0 %v3341
    %4584 = vmatpush.msra.mxu0 %v3333
    %4585 = vmatpush.msra.mxu0 %v3325
    %4586 = vmatmul.f32.gmra.mxu0 %v3461
    %v4587 = vpop.f32.mrf.mxu0
    %v4588 = vadd.f32 %v4568, %v4587
    %4589 = vdwg.mxu0
    %4590 = vmatpush.msra.mxu0 %v2550
    %4591 = vmatpush.msra.mxu0 %v2542
    %4592 = vmatpush.msra.mxu0 %v2534
    %4593 = vmatpush.msra.mxu0 %v2526
    %4594 = vmatpush.msra.mxu0 %v2518
    %4595 = vmatpush.msra.mxu0 %v2510
    %4596 = vmatpush.msra.mxu0 %v2502
    %4597 = vmatpush.msra.mxu0 %v2494
    %4598 = vmatpush.msra.mxu0 %v2486
    %4599 = vmatpush.msra.mxu0 %v2478
    %4600 = vmatpush.msra.mxu0 %v2470
    %4601 = vmatpush.msra.mxu0 %v2462
    %4602 = vmatpush.msra.mxu0 %v2454
    %4603 = vmatpush.msra.mxu0 %v2446
    %4604 = vmatpush.msra.mxu0 %v2438
    %4605 = vmatpush.msra.mxu0 %v2430
    %4606 = vmatmul.f32.gmra.mxu0 %v3454
    %v4607 = vpop.f32.mrf.mxu0
    %v4608 = vadd.f32 0.0, %v4607
    %4609 = vdwg.mxu0
    %4610 = vmatpush.msra.mxu0 %v2678
    %4611 = vmatpush.msra.mxu0 %v2670
    %4612 = vmatpush.msra.mxu0 %v2662
    %4613 = vmatpush.msra.mxu0 %v2654
    %4614 = vmatpush.msra.mxu0 %v2646
    %4615 = vmatpush.msra.mxu0 %v2638
    %4616 = vmatpush.msra.mxu0 %v2630
    %4617 = vmatpush.msra.mxu0 %v2622
    %4618 = vmatpush.msra.mxu0 %v2614
    %4619 = vmatpush.msra.mxu0 %v2606
    %4620 = vmatpush.msra.mxu0 %v2598
    %4621 = vmatpush.msra.mxu0 %v2590
    %4622 = vmatpush.msra.mxu0 %v2582
    %4623 = vmatpush.msra.mxu0 %v2574
    %4624 = vmatpush.msra.mxu0 %v2566
    %4625 = vmatpush.msra.mxu0 %v2558
    %4626 = vmatmul.f32.gmra.mxu0 %v3455
    %v4627 = vpop.f32.mrf.mxu0
    %v4628 = vadd.f32 %v4608, %v4627
    %4629 = vdwg.mxu0
    %4630 = vmatpush.msra.mxu0 %v2806
    %4631 = vmatpush.msra.mxu0 %v2798
    %4632 = vmatpush.msra.mxu0 %v2790
    %4633 = vmatpush.msra.mxu0 %v2782
    %4634 = vmatpush.msra.mxu0 %v2774
    %4635 = vmatpush.msra.mxu0 %v2766
    %4636 = vmatpush.msra.mxu0 %v2758
    %4637 = vmatpush.msra.mxu0 %v2750
    %4638 = vmatpush.msra.mxu0 %v2742
    %4639 = vmatpush.msra.mxu0 %v2734
    %4640 = vmatpush.msra.mxu0 %v2726
    %4641 = vmatpush.msra.mxu0 %v2718
    %4642 = vmatpush.msra.mxu0 %v2710
    %4643 = vmatpush.msra.mxu0 %v2702
    %4644 = vmatpush.msra.mxu0 %v2694
    %4645 = vmatpush.msra.mxu0 %v2686
    %4646 = vmatmul.f32.gmra.mxu0 %v3456
    %v4647 = vpop.f32.mrf.mxu0
    %v4648 = vadd.f32 %v4628, %v4647
    %4649 = vdwg.mxu0
    %4650 = vmatpush.msra.mxu0 %v2934
    %4651 = vmatpush.msra.mxu0 %v2926
    %4652 = vmatpush.msra.mxu0 %v2918
    %4653 = vmatpush.msra.mxu0 %v2910
    %4654 = vmatpush.msra.mxu0 %v2902
    %4655 = vmatpush.msra.mxu0 %v2894
    %4656 = vmatpush.msra.mxu0 %v2886
    %4657 = vmatpush.msra.mxu0 %v2878
    %4658 = vmatpush.msra.mxu0 %v2870
    %4659 = vmatpush.msra.mxu0 %v2862
    %4660 = vmatpush.msra.mxu0 %v2854
    %4661 = vmatpush.msra.mxu0 %v2846
    %4662 = vmatpush.msra.mxu0 %v2838
    %4663 = vmatpush.msra.mxu0 %v2830
    %4664 = vmatpush.msra.mxu0 %v2822
    %4665 = vmatpush.msra.mxu0 %v2814
    %4666 = vmatmul.f32.gmra.mxu0 %v3457
    %v4667 = vpop.f32.mrf.mxu0
    %v4668 = vadd.f32 %v4648, %v4667
    %4669 = vdwg.mxu0
    %4670 = vmatpush.msra.mxu0 %v3062
    %4671 = vmatpush.msra.mxu0 %v3054
    %4672 = vmatpush.msra.mxu0 %v3046
    %4673 = vmatpush.msra.mxu0 %v3038
    %4674 = vmatpush.msra.mxu0 %v3030
    %4675 = vmatpush.msra.mxu0 %v3022
    %4676 = vmatpush.msra.mxu0 %v3014
    %4677 = vmatpush.msra.mxu0 %v3006
    %4678 = vmatpush.msra.mxu0 %v2998
    %4679 = vmatpush.msra.mxu0 %v2990
    %4680 = vmatpush.msra.mxu0 %v2982
    %4681 = vmatpush.msra.mxu0 %v2974
    %4682 = vmatpush.msra.mxu0 %v2966
    %4683 = vmatpush.msra.mxu0 %v2958
    %4684 = vmatpush.msra.mxu0 %v2950
    %4685 = vmatpush.msra.mxu0 %v2942
    %4686 = vmatmul.f32.gmra.mxu0 %v3458
    %v4687 = vpop.f32.mrf.mxu0
    %v4688 = vadd.f32 %v4668, %v4687
    %4689 = vdwg.mxu0
    %4690 = vmatpush.msra.mxu0 %v3190
    %4691 = vmatpush.msra.mxu0 %v3182
    %4692 = vmatpush.msra.mxu0 %v3174
    %4693 = vmatpush.msra.mxu0 %v3166
    %4694 = vmatpush.msra.mxu0 %v3158
    %4695 = vmatpush.msra.mxu0 %v3150
    %4696 = vmatpush.msra.mxu0 %v3142
    %4697 = vmatpush.msra.mxu0 %v3134
    %4698 = vmatpush.msra.mxu0 %v3126
    %4699 = vmatpush.msra.mxu0 %v3118
    %4700 = vmatpush.msra.mxu0 %v3110
    %4701 = vmatpush.msra.mxu0 %v3102
    %4702 = vmatpush.msra.mxu0 %v3094
    %4703 = vmatpush.msra.mxu0 %v3086
    %4704 = vmatpush.msra.mxu0 %v3078
    %4705 = vmatpush.msra.mxu0 %v3070
    %4706 = vmatmul.f32.gmra.mxu0 %v3459
    %v4707 = vpop.f32.mrf.mxu0
    %v4708 = vadd.f32 %v4688, %v4707
    %4709 = vdwg.mxu0
    %4710 = vmatpush.msra.mxu0 %v3318
    %4711 = vmatpush.msra.mxu0 %v3310
    %4712 = vmatpush.msra.mxu0 %v3302
    %4713 = vmatpush.msra.mxu0 %v3294
    %4714 = vmatpush.msra.mxu0 %v3286
    %4715 = vmatpush.msra.mxu0 %v3278
    %4716 = vmatpush.msra.mxu0 %v3270
    %4717 = vmatpush.msra.mxu0 %v3262
    %4718 = vmatpush.msra.mxu0 %v3254
    %4719 = vmatpush.msra.mxu0 %v3246
    %4720 = vmatpush.msra.mxu0 %v3238
    %4721 = vmatpush.msra.mxu0 %v3230
    %4722 = vmatpush.msra.mxu0 %v3222
    %4723 = vmatpush.msra.mxu0 %v3214
    %4724 = vmatpush.msra.mxu0 %v3206
    %4725 = vmatpush.msra.mxu0 %v3198
    %4726 = vmatmul.f32.gmra.mxu0 %v3460
    %v4727 = vpop.f32.mrf.mxu0
    %v4728 = vadd.f32 %v4708, %v4727
    %4729 = vdwg.mxu0
    %4730 = vmatpush.msra.mxu0 %v3446
    %4731 = vmatpush.msra.mxu0 %v3438
    %4732 = vmatpush.msra.mxu0 %v3430
    %4733 = vmatpush.msra.mxu0 %v3422
    %4734 = vmatpush.msra.mxu0 %v3414
    %4735 = vmatpush.msra.mxu0 %v3406
    %4736 = vmatpush.msra.mxu0 %v3398
    %4737 = vmatpush.msra.mxu0 %v3390
    %4738 = vmatpush.msra.mxu0 %v3382
    %4739 = vmatpush.msra.mxu0 %v3374
    %4740 = vmatpush.msra.mxu0 %v3366
    %4741 = vmatpush.msra.mxu0 %v3358
    %4742 = vmatpush.msra.mxu0 %v3350
    %4743 = vmatpush.msra.mxu0 %v3342
    %4744 = vmatpush.msra.mxu0 %v3334
    %4745 = vmatpush.msra.mxu0 %v3326
    %4746 = vmatmul.f32.gmra.mxu0 %v3461
    %v4747 = vpop.f32.mrf.mxu0
    %v4748 = vadd.f32 %v4728, %v4747
    %4749 = vdwg.mxu0
    %v4750 = vmul.f32 %v1301, %v1301
    %v4751 = vmul.f32 %v1461, %v1461
    %v4752 = vmul.f32 %v1621, %v1621
    %v4753 = vmul.f32 %v1781, %v1781
    %v4754 = vmul.f32 %v1941, %v1941
    %v4755 = vmul.f32 %v2101, %v2101
    %v4756 = vmul.f32 %v2261, %v2261
    %v4757 = vmul.f32 %v2421, %v2421
    %v4758 = vmul.f32 %v3628, %v3628
    %v4759 = vmul.f32 %v3788, %v3788
    %v4760 = vmul.f32 %v3948, %v3948
    %v4761 = vmul.f32 %v4108, %v4108
    %v4762 = vmul.f32 %v4268, %v4268
    %v4763 = vmul.f32 %v4428, %v4428
    %v4764 = vmul.f32 %v4588, %v4588
    %v4765 = vmul.f32 %v4748, %v4748
    %v4766 = vadd.f32 %v4750, %v4758
    %v4767 = vadd.f32 %v4751, %v4759
    %v4768 = vadd.f32 %v4752, %v4760
    %v4769 = vadd.f32 %v4753, %v4761
    %v4770 = vadd.f32 %v4754, %v4762
    %v4771 = vadd.f32 %v4755, %v4763
    %v4772 = vadd.f32 %v4756, %v4764
    %v4773 = vadd.f32 %v4757, %v4765
    %v4774 = vadd.f32 %v4766, 1.0
    %v4775 = vadd.f32 %v4767, 1.0
    %v4776 = vadd.f32 %v4768, 1.0
    %v4777 = vadd.f32 %v4769, 1.0
    %v4778 = vadd.f32 %v4770, 1.0
    %v4779 = vadd.f32 %v4771, 1.0
    %v4780 = vadd.f32 %v4772, 1.0
    %v4781 = vadd.f32 %v4773, 1.0
    %v4782 = vlog2.pop %v4774
    %v4783 = vmul.f32 %v4782, 0.6931472
    %v4784 = vlog2.pop %v4775
    %v4785 = vmul.f32 %v4784, 0.6931472
    %v4786 = vlog2.pop %v4776
    %v4787 = vmul.f32 %v4786, 0.6931472
    %v4788 = vlog2.pop %v4777
    %v4789 = vmul.f32 %v4788, 0.6931472
    %v4790 = vlog2.pop %v4778
    %v4791 = vmul.f32 %v4790, 0.6931472
    %v4792 = vlog2.pop %v4779
    %v4793 = vmul.f32 %v4792, 0.6931472
    %v4794 = vlog2.pop %v4780
    %v4795 = vmul.f32 %v4794, 0.6931472
    %v4796 = vlog2.pop %v4781
    %v4797 = vmul.f32 %v4796, 0.6931472
    %v4806 = vrot.slane %v4783, 2
    %v4807 = vrot.slane %v4785, 2
    %v4808 = vrot.slane %v4787, 2
    %v4809 = vrot.slane %v4789, 2
    %v4810 = vrot.slane %v4791, 2
    %v4811 = vrot.slane %v4793, 2
    %v4812 = vrot.slane %v4795, 2
    %v4813 = vrot.slane %v4797, 2
    %v4822 = vsub.f32 %v4783, %v4806
    %v4823 = vsub.f32 %v4785, %v4807
    %v4824 = vsub.f32 %v4787, %v4808
    %v4825 = vsub.f32 %v4789, %v4809
    %v4826 = vsub.f32 %v4791, %v4810
    %v4827 = vsub.f32 %v4793, %v4811
    %v4828 = vsub.f32 %v4795, %v4812
    %v4829 = vsub.f32 %v4797, %v4813
    %v4830 = vmul.f32 %v4822, %v4822
    %v4831 = vmul.f32 %v4823, %v4823
    %v4832 = vmul.f32 %v4824, %v4824
    %v4833 = vmul.f32 %v4825, %v4825
    %v4834 = vmul.f32 %v4826, %v4826
    %v4835 = vmul.f32 %v4827, %v4827
    %v4836 = vmul.f32 %v4828, %v4828
    %v4837 = vmul.f32 %v4829, %v4829
    %vm4838 = vcmask 1041408
    %v4839 = vsel %vm4838, %v4830, 0.0
    %v4840 = vsel %vm4838, %v4831, 0.0
    %v4841 = vadd.f32 %v4839, %v4840
    %v4842 = vsel %vm4838, %v4832, 0.0
    %v4843 = vadd.f32 %v4841, %v4842
    %v4844 = vsel %vm4838, %v4833, 0.0
    %v4845 = vadd.f32 %v4843, %v4844
    %v4846 = vsel %vm4838, %v4834, 0.0
    %v4847 = vadd.f32 %v4845, %v4846
    %v4848 = vsel %vm4838, %v4835, 0.0
    %v4849 = vadd.f32 %v4847, %v4848
    %v4850 = vsel %vm4838, %v4836, 0.0
    %v4851 = vadd.f32 %v4849, %v4850
    %v4852 = vsel %vm4838, %v4837, 0.0
    %v4853 = vadd.f32 %v4851, %v4852
    %4854 = vadd.xlane.f32.xlu0 %v4853
    %v4855 = vpop.xlane.xlu0 %4854
    %v4856 = vrot.slane %v4855, 4
    %v4857 = vadd.f32 %v4855, %v4856
    %v4858 = vrot.slane %v4857, 2
    %v4859 = vadd.f32 %v4857, %v4858
    %v4860 = vrot.slane %v4859, 1
    %v4861 = vadd.f32 %v4859, %v4860
    %s4862 = vtos %v4861
    %v4863 = vstv %s4862
    %4864 = vst [vmem:[%s4] sm:$0xff] %v4863
    // Predicated region
    $region26: #{three_dfl.1} parent=1 // pred_check
      _
    $region27: #{three_dfl.1} parent=1 // pred_check_branch
      %4866 = sbr.rel (0) target = $region29
    $region28: #{three_dfl.1} parent=1 // pred_region
      _
    $region29: #{three_dfl.1} parent=1 // pred_fallthru
      _
    // Predicated region
    $region30: #{three_dfl.1} parent=1 // pred_check
      _
    $region31: #{three_dfl.1} parent=1 // pred_check_branch
      %4868 = sbr.rel (0) target = $region33
    $region32: #{three_dfl.1} parent=1 // pred_region
      _
    $region33: #{three_dfl.1} parent=1 // pred_fallthru
      _
    %4869 = vsyncpa [#allocation4], 1
    %4870 = vsyncpa [#allocation6], 1

</llo_original>
